<compile_context>
chip_gen: v6e
topology: v6e:2x2x1
jax: 0.10.0
libtpu: 0.0.40
codegen_flags: <defaults>
</compile_context>

<pallas_src>
import functools

import jax
import jax.numpy as jnp
from jax.experimental import pallas as pl
from jax.experimental.pallas import tpu as pltpu

# ---------------- model configuration (small, vit-style) ----------------
IN_CHANS = 3
IMG = 32          # image side (PyTorch module uses 224; scaled down)
PATCH = 16        # patch size (same as vit_large_patch16_224)
EMBED = 32        # embed dim (1024 in vit_large; scaled down)
DEPTH = 2         # number of transformer blocks (24 in vit_large)
HEADS = 4         # attention heads (16 in vit_large)
HEAD_DIM = EMBED // HEADS
MLP_HIDDEN = 4 * EMBED
NUM_CLASSES = 2
HEAD_PAD = 128    # lane-dense padded width of the classifier output
LN_EPS = 1e-6     # timm ViT uses LayerNorm(eps=1e-6)


# ---------------- fully fused ViT forward kernel ----------------
def _vit_kernel(
    patches_ref, patch_w_ref, patch_b_ref, cls_ref, pos_ref,
    ln1_g_ref, ln1_b_ref, qkv_w_ref, qkv_b_ref, proj_w_ref, proj_b_ref,
    ln2_g_ref, ln2_b_ref, fc1_w_ref, fc1_b_ref, fc2_w_ref, fc2_b_ref,
    norm_g_ref, norm_b_ref, head_w_ref, head_b_ref,
    out_ref,
    x_scr, attn_scr,
    *, batch, seq, n_patch,
):
    scale = HEAD_DIM ** -0.5

    def ln(x, g, b):
        # f32 layernorm on the VPU.
        mean = jnp.mean(x, axis=-1, keepdims=True)
        xc = x - mean
        var = jnp.mean(xc * xc, axis=-1, keepdims=True)
        return xc * jax.lax.rsqrt(var + LN_EPS) * g + b

    def mm(x_f32, w_bf16):
        # bf16 MXU matmul with f32 accumulation.
        return jnp.dot(x_f32.astype(jnp.bfloat16), w_bf16,
                       preferred_element_type=jnp.float32)

    def gelu_exact(x):
        # Exact (erf) GELU as used by timm ViT.  erf is evaluated with the
        # Abramowitz&Stegun 7.1.26 polynomial (|err| < 1.5e-7) so only ops with
        # guaranteed Mosaic lowerings (exp / mul / add / abs / select) appear.
        z = x * 0.7071067811865476
        az = jnp.abs(z)
        t = 1.0 / (1.0 + 0.3275911 * az)
        poly = ((((1.061405429 * t - 1.453152027) * t + 1.421413741) * t
                 - 0.284496736) * t + 0.254829592) * t
        erf_abs = 1.0 - poly * jnp.exp(-az * az)
        erf_z = jnp.where(z >= 0.0, erf_abs, -erf_abs)
        return 0.5 * x * (1.0 + erf_z)

    # ---- patch embedding + cls token + positional embedding (fused) ----
    tok = mm(patches_ref[...], patch_w_ref[...]) + patch_b_ref[...]   # (B*N, D)
    for b in range(batch):
        r = b * seq
        x_scr[r:r + 1, :] = cls_ref[...] + pos_ref[0:1, :]
        x_scr[r + 1:r + seq, :] = (tok[b * n_patch:(b + 1) * n_patch, :]
                                   + pos_ref[1:seq, :])
    x = x_scr[...]                                                    # (B*S, D) f32

    # ---- transformer blocks (fully fused, statically unrolled) ----
    for d in range(DEPTH):
        # --- attention branch: x = x + proj(attn(norm1(x))) ---
        h = ln(x, ln1_g_ref[d], ln1_b_ref[d])
        qkv = mm(h, qkv_w_ref[d]) + qkv_b_ref[d]                      # (B*S, 3D)
        for b in range(batch):
            r = b * seq
            for hd in range(HEADS):
                c = hd * HEAD_DIM
                q = qkv[r:r + seq, c:c + HEAD_DIM]
                k = qkv[r:r + seq, EMBED + c:EMBED + c + HEAD_DIM]
                v = qkv[r:r + seq, 2 * EMBED + c:2 * EMBED + c + HEAD_DIM]
                s = jax.lax.dot_general(
                    q.astype(jnp.bfloat16), k.astype(jnp.bfloat16),
                    (((1,), (1,)), ((), ())),
                    preferred_element_type=jnp.float32) * scale       # (S, S)
                # f32 softmax; normalization via the (otherwise idle) EUP.
                s = s - jnp.max(s, axis=-1, keepdims=True)
                p = jnp.exp(s)
                p = p * pl.reciprocal(jnp.sum(p, axis=-1, keepdims=True),
                                      approx=True)
                o = jnp.dot(p.astype(jnp.bfloat16), v.astype(jnp.bfloat16),
                            preferred_element_type=jnp.float32)       # (S, Dh)
                attn_scr[hd, r:r + seq, :] = o
        # proj of the head-concatenated output == sum over heads of
        # (per-head output) @ (per-head row-slice of proj_w); avoids any
        # lane-offset scatter / concatenate inside the kernel.
        proj_out = proj_b_ref[d]                                      # (1, D)
        for hd in range(HEADS):
            c = hd * HEAD_DIM
            proj_out = proj_out + mm(attn_scr[hd],
                                     proj_w_ref[d, c:c + HEAD_DIM, :])
        x = x + proj_out                                              # fused residual

        # --- MLP branch: x = x + fc2(gelu(fc1(norm2(x)))) ---
        h = ln(x, ln2_g_ref[d], ln2_b_ref[d])
        h = gelu_exact(mm(h, fc1_w_ref[d]) + fc1_b_ref[d])
        x = x + mm(h, fc2_w_ref[d]) + fc2_b_ref[d]                    # fused residual

    # ---- final norm + classification head ('token' pool, lane-padded) ----
    xn = ln(x, norm_g_ref[...], norm_b_ref[...])
    for b in range(batch):
        cls_tok = xn[b * seq:b * seq + 1, :]                          # (1, D)
        out_ref[b:b + 1, :] = (mm(cls_tok, head_w_ref[...])
                               + head_b_ref[...]).astype(out_ref.dtype)


# ---------------- parameter init (deterministic, synthetic) ----------------
def init_params(key):
    state = {"key": key}

    def take():
        state["key"], sub = jax.random.split(state["key"])
        return sub

    def nrm(shape, scale=0.02):
        return scale * jax.random.normal(take(), shape, dtype=jnp.float32)

    def bnrm(shape, scale=0.02):
        # weights feeding the MXU are stored bf16 (f32 accumulation in-kernel)
        return nrm(shape, scale).astype(jnp.bfloat16)

    def zeros(shape):
        return jnp.zeros(shape, jnp.float32)

    def ones(shape):
        return jnp.ones(shape, jnp.float32)

    n_patches = (IMG // PATCH) ** 2
    seq = n_patches + 1  # +1 for cls token

    # classifier zero-padded out to 128 lanes -> lane-dense kernel output;
    # the wrapper slices the logits back to NUM_CLASSES.
    head_w = zeros((EMBED, HEAD_PAD)).at[:, :NUM_CLASSES].set(
        nrm((EMBED, NUM_CLASSES)))

    params = {
        # conv weight (D, C, p, p) flattened/transposed to (C*p*p, D)
        "patch_w": bnrm((IN_CHANS * PATCH * PATCH, EMBED)),
        "patch_b": zeros((1, EMBED)),
        "cls": nrm((1, EMBED)),
        "pos": nrm((seq, EMBED)),
        "blocks": {     # per-block weights stacked along a leading DEPTH axis
            "ln1_g": ones((DEPTH, 1, EMBED)), "ln1_b": zeros((DEPTH, 1, EMBED)),
            "qkv_w": bnrm((DEPTH, EMBED, 3 * EMBED)),
            "qkv_b": zeros((DEPTH, 1, 3 * EMBED)),
            "proj_w": bnrm((DEPTH, EMBED, EMBED)),
            "proj_b": zeros((DEPTH, 1, EMBED)),
            "ln2_g": ones((DEPTH, 1, EMBED)), "ln2_b": zeros((DEPTH, 1, EMBED)),
            "fc1_w": bnrm((DEPTH, EMBED, MLP_HIDDEN)),
            "fc1_b": zeros((DEPTH, 1, MLP_HIDDEN)),
            "fc2_w": bnrm((DEPTH, MLP_HIDDEN, EMBED)),
            "fc2_b": zeros((DEPTH, 1, EMBED)),
        },
        "norm_g": ones((1, EMBED)),
        "norm_b": zeros((1, EMBED)),
        "head_w": head_w.astype(jnp.bfloat16),
        "head_b": zeros((1, HEAD_PAD)),
    }
    return params


# ---------------- forward pass (single pallas_call) ----------------
def _full_spec(shape):
    nd = len(shape)
    return pl.BlockSpec(shape, lambda: (0,) * nd)


@jax.jit
def vit_forward(params, x):
    # layout: x is NCHW (B, C, H, W), same as the PyTorch module's conv input.
    B, C, H, W = x.shape
    p = PATCH
    nH, nW = H // p, W // p
    n_patch = nH * nW
    seq = n_patch + 1

    # stride-p patch conv == im2col (pure layout, no compute) + in-kernel matmul
    patches = x.reshape(B, C, nH, p, nW, p).transpose(0, 2, 4, 1, 3, 5)
    patches = patches.reshape(B * n_patch, C * p * p)

    blk = params["blocks"]
    inputs = (
        patches,
        params["patch_w"], params["patch_b"], params["cls"], params["pos"],
        blk["ln1_g"], blk["ln1_b"], blk["qkv_w"], blk["qkv_b"],
        blk["proj_w"], blk["proj_b"], blk["ln2_g"], blk["ln2_b"],
        blk["fc1_w"], blk["fc1_b"], blk["fc2_w"], blk["fc2_b"],
        params["norm_g"], params["norm_b"], params["head_w"], params["head_b"],
    )

    logits_pad = pl.pallas_call(
        functools.partial(_vit_kernel, batch=B, seq=seq, n_patch=n_patch),
        out_shape=jax.ShapeDtypeStruct((B, HEAD_PAD), jnp.float32),
        in_specs=[_full_spec(a.shape) for a in inputs],
        out_specs=_full_spec((B, HEAD_PAD)),
        scratch_shapes=[
            pltpu.VMEM((B * seq, EMBED), jnp.float32),             # token buffer
            pltpu.VMEM((HEADS, B * seq, HEAD_DIM), jnp.float32),   # per-head attn out
        ],
    )(*inputs)
    return logits_pad[:, :NUM_CLASSES]


if __name__ == "__main__":
    key = jax.random.PRNGKey(0)
    pkey, xkey = jax.random.split(key)
    params = init_params(pkey)
    x = jax.random.normal(xkey, (2, IN_CHANS, IMG, IMG), dtype=jnp.float32)
    out = vit_forward(params, x)
    jax.block_until_ready(out)
    assert out.shape == (2, NUM_CLASSES), out.shape
    print("KERNEL_OK")
</pallas_src>

<mosaic_0001>
module attributes {stable_mosaic.version = 11 : i64} {
  func.func @_vit_kernel(%arg0: memref<8x768xf32, #tpu.memory_space<vmem>>, %arg1: memref<768x32xbf16, #tpu.memory_space<vmem>>, %arg2: memref<1x32xf32, #tpu.memory_space<vmem>>, %arg3: memref<1x32xf32, #tpu.memory_space<vmem>>, %arg4: memref<5x32xf32, #tpu.memory_space<vmem>>, %arg5: memref<2x1x32xf32, #tpu.memory_space<vmem>>, %arg6: memref<2x1x32xf32, #tpu.memory_space<vmem>>, %arg7: memref<2x32x96xbf16, #tpu.memory_space<vmem>>, %arg8: memref<2x1x96xf32, #tpu.memory_space<vmem>>, %arg9: memref<2x32x32xbf16, #tpu.memory_space<vmem>>, %arg10: memref<2x1x32xf32, #tpu.memory_space<vmem>>, %arg11: memref<2x1x32xf32, #tpu.memory_space<vmem>>, %arg12: memref<2x1x32xf32, #tpu.memory_space<vmem>>, %arg13: memref<2x32x128xbf16, #tpu.memory_space<vmem>>, %arg14: memref<2x1x128xf32, #tpu.memory_space<vmem>>, %arg15: memref<2x128x32xbf16, #tpu.memory_space<vmem>>, %arg16: memref<2x1x32xf32, #tpu.memory_space<vmem>>, %arg17: memref<1x32xf32, #tpu.memory_space<vmem>>, %arg18: memref<1x32xf32, #tpu.memory_space<vmem>>, %arg19: memref<32x128xbf16, #tpu.memory_space<vmem>>, %arg20: memref<1x128xf32, #tpu.memory_space<vmem>>, %arg21: memref<2x128xf32, #tpu.memory_space<vmem>>, %arg22: memref<10x32xf32, #tpu.memory_space<vmem>>, %arg23: memref<4x10x8xf32, #tpu.memory_space<vmem>>) attributes {dimension_semantics = [], scalar_prefetch = 0 : i64, scratch_operands = 2 : i64, tpu.core_type = #tpu.core_type<tc>} {
    %c0 = arith.constant 0 : index
    %c0_0 = arith.constant 0 : index
    %0 = vector.load %arg0[%c0, %c0_0] : memref<8x768xf32, #tpu.memory_space<vmem>>, vector<8x768xf32>
    %c0_1 = arith.constant 0 : index
    %c0_2 = arith.constant 0 : index
    %1 = vector.load %arg1[%c0_1, %c0_2] : memref<768x32xbf16, #tpu.memory_space<vmem>>, vector<768x32xbf16>
    %2 = arith.truncf %0 : vector<8x768xf32> to vector<8x768xbf16>
    %cst = arith.constant dense<0.000000e+00> : vector<8x32xf32>
    %3 = tpu.matmul %2, %1, %cst {dimension_numbers = #tpu.dot_dimension_numbers<[1], [0], [0], [1], [0, 0, 1, 1], [], []>} : vector<8x768xbf16>, vector<768x32xbf16>, vector<8x32xf32> -> vector<8x32xf32>
    %c0_3 = arith.constant 0 : index
    %c0_4 = arith.constant 0 : index
    %4 = vector.load %arg2[%c0_3, %c0_4] : memref<1x32xf32, #tpu.memory_space<vmem>>, vector<1x32xf32>
    %5 = vector.broadcast %4 : vector<1x32xf32> to vector<8x32xf32>
    %6 = arith.addf %3, %5 : vector<8x32xf32>
    %c0_5 = arith.constant 0 : index
    %c0_6 = arith.constant 0 : index
    %7 = vector.load %arg3[%c0_5, %c0_6] : memref<1x32xf32, #tpu.memory_space<vmem>>, vector<1x32xf32>
    %c0_7 = arith.constant 0 : index
    %c0_8 = arith.constant 0 : index
    %8 = vector.load %arg4[%c0_7, %c0_8] : memref<5x32xf32, #tpu.memory_space<vmem>>, vector<1x32xf32>
    %9 = arith.addf %7, %8 : vector<1x32xf32>
    %c0_9 = arith.constant 0 : index
    %c0_10 = arith.constant 0 : index
    %10 = vector.load %arg22[%c0_9, %c0_10] : memref<10x32xf32, #tpu.memory_space<vmem>>, vector<1x32xf32>
    tpu.vector_store %arg22[%c0_9, %c0_10], %9 {strides = array<i32>} : memref<10x32xf32, #tpu.memory_space<vmem>>, vector<1x32xf32>,
    %11 = vector.extract_strided_slice %6 {offsets = [0, 0], sizes = [4, 32], strides = [1, 1]} : vector<8x32xf32> to vector<4x32xf32>
    %c1 = arith.constant 1 : index
    %c0_11 = arith.constant 0 : index
    %12 = vector.load %arg4[%c1, %c0_11] : memref<5x32xf32, #tpu.memory_space<vmem>>, vector<4x32xf32>
    %13 = arith.addf %11, %12 : vector<4x32xf32>
    %c1_12 = arith.constant 1 : index
    %c0_13 = arith.constant 0 : index
    %14 = vector.load %arg22[%c1_12, %c0_13] : memref<10x32xf32, #tpu.memory_space<vmem>>, vector<4x32xf32>
    tpu.vector_store %arg22[%c1_12, %c0_13], %13 {strides = array<i32>} : memref<10x32xf32, #tpu.memory_space<vmem>>, vector<4x32xf32>,
    %c0_14 = arith.constant 0 : index
    %c0_15 = arith.constant 0 : index
    %15 = vector.load %arg3[%c0_14, %c0_15] : memref<1x32xf32, #tpu.memory_space<vmem>>, vector<1x32xf32>
    %c0_16 = arith.constant 0 : index
    %c0_17 = arith.constant 0 : index
    %16 = vector.load %arg4[%c0_16, %c0_17] : memref<5x32xf32, #tpu.memory_space<vmem>>, vector<1x32xf32>
    %17 = arith.addf %15, %16 : vector<1x32xf32>
    %c5 = arith.constant 5 : index
    %c0_18 = arith.constant 0 : index
    %18 = vector.load %arg22[%c5, %c0_18] : memref<10x32xf32, #tpu.memory_space<vmem>>, vector<1x32xf32>
    tpu.vector_store %arg22[%c5, %c0_18], %17 {strides = array<i32>} : memref<10x32xf32, #tpu.memory_space<vmem>>, vector<1x32xf32>,
    %19 = vector.extract_strided_slice %6 {offsets = [4, 0], sizes = [4, 32], strides = [1, 1]} : vector<8x32xf32> to vector<4x32xf32>
    %c1_19 = arith.constant 1 : index
    %c0_20 = arith.constant 0 : index
    %20 = vector.load %arg4[%c1_19, %c0_20] : memref<5x32xf32, #tpu.memory_space<vmem>>, vector<4x32xf32>
    %21 = arith.addf %19, %20 : vector<4x32xf32>
    %c6 = arith.constant 6 : index
    %c0_21 = arith.constant 0 : index
    %22 = vector.load %arg22[%c6, %c0_21] : memref<10x32xf32, #tpu.memory_space<vmem>>, vector<4x32xf32>
    tpu.vector_store %arg22[%c6, %c0_21], %21 {strides = array<i32>} : memref<10x32xf32, #tpu.memory_space<vmem>>, vector<4x32xf32>,
    %c0_22 = arith.constant 0 : index
    %c0_23 = arith.constant 0 : index
    %23 = vector.load %arg22[%c0_22, %c0_23] : memref<10x32xf32, #tpu.memory_space<vmem>>, vector<10x32xf32>
    %c0_24 = arith.constant 0 : index
    %c0_25 = arith.constant 0 : index
    %c0_26 = arith.constant 0 : index
    %24 = vector.load %arg5[%c0_24, %c0_25, %c0_26] : memref<2x1x32xf32, #tpu.memory_space<vmem>>, vector<1x1x32xf32>
    %25 = vector.shape_cast %24 : vector<1x1x32xf32> to vector<1x32xf32>
    %c0_27 = arith.constant 0 : index
    %c0_28 = arith.constant 0 : index
    %c0_29 = arith.constant 0 : index
    %26 = vector.load %arg6[%c0_27, %c0_28, %c0_29] : memref<2x1x32xf32, #tpu.memory_space<vmem>>, vector<1x1x32xf32>
    %27 = vector.shape_cast %26 : vector<1x1x32xf32> to vector<1x32xf32>
    %cst_30 = arith.constant dense<0.000000e+00> : vector<10xf32>
    %28 = vector.multi_reduction <add>, %23, %cst_30 [1] : vector<10x32xf32> to vector<10xf32>
    %29 = vector.shape_cast %28 : vector<10xf32> to vector<10x1xf32>
    %cst_31 = arith.constant 3.200000e+01 : f32
    %30 = vector.broadcast %cst_31 : f32 to vector<10x1xf32>
    %31 = arith.divf %29, %30 : vector<10x1xf32>
    %32 = vector.broadcast %31 : vector<10x1xf32> to vector<10x32xf32>
    %33 = arith.subf %23, %32 : vector<10x32xf32>
    %34 = arith.mulf %33, %33 : vector<10x32xf32>
    %cst_32 = arith.constant dense<0.000000e+00> : vector<10xf32>
    %35 = vector.multi_reduction <add>, %34, %cst_32 [1] : vector<10x32xf32> to vector<10xf32>
    %36 = vector.shape_cast %35 : vector<10xf32> to vector<10x1xf32>
    %cst_33 = arith.constant 3.200000e+01 : f32
    %37 = vector.broadcast %cst_33 : f32 to vector<10x1xf32>
    %38 = arith.divf %36, %37 : vector<10x1xf32>
    %cst_34 = arith.constant 9.99999997E-7 : f32
    %39 = vector.broadcast %cst_34 : f32 to vector<10x1xf32>
    %40 = arith.addf %38, %39 : vector<10x1xf32>
    %41 = math.rsqrt %40 : vector<10x1xf32>
    %42 = vector.broadcast %41 : vector<10x1xf32> to vector<10x32xf32>
    %43 = arith.mulf %33, %42 : vector<10x32xf32>
    %44 = vector.broadcast %25 : vector<1x32xf32> to vector<10x32xf32>
    %45 = arith.mulf %43, %44 : vector<10x32xf32>
    %46 = vector.broadcast %27 : vector<1x32xf32> to vector<10x32xf32>
    %47 = arith.addf %45, %46 : vector<10x32xf32>
    %c0_35 = arith.constant 0 : index
    %c0_36 = arith.constant 0 : index
    %c0_37 = arith.constant 0 : index
    %48 = vector.load %arg7[%c0_35, %c0_36, %c0_37] : memref<2x32x96xbf16, #tpu.memory_space<vmem>>, vector<1x32x96xbf16>
    %49 = vector.shape_cast %48 : vector<1x32x96xbf16> to vector<32x96xbf16>
    %50 = arith.truncf %47 : vector<10x32xf32> to vector<10x32xbf16>
    %cst_38 = arith.constant dense<0.000000e+00> : vector<10x96xf32>
    %51 = tpu.matmul %50, %49, %cst_38 {dimension_numbers = #tpu.dot_dimension_numbers<[1], [0], [0], [1], [0, 0, 1, 1], [], []>} : vector<10x32xbf16>, vector<32x96xbf16>, vector<10x96xf32> -> vector<10x96xf32>
    %c0_39 = arith.constant 0 : index
    %c0_40 = arith.constant 0 : index
    %c0_41 = arith.constant 0 : index
    %52 = vector.load %arg8[%c0_39, %c0_40, %c0_41] : memref<2x1x96xf32, #tpu.memory_space<vmem>>, vector<1x1x96xf32>
    %53 = vector.shape_cast %52 : vector<1x1x96xf32> to vector<1x96xf32>
    %54 = vector.broadcast %53 : vector<1x96xf32> to vector<10x96xf32>
    %55 = arith.addf %51, %54 : vector<10x96xf32>
    %56 = vector.extract_strided_slice %55 {offsets = [0, 0], sizes = [5, 8], strides = [1, 1]} : vector<10x96xf32> to vector<5x8xf32>
    %57 = vector.extract_strided_slice %55 {offsets = [0, 32], sizes = [5, 8], strides = [1, 1]} : vector<10x96xf32> to vector<5x8xf32>
    %58 = vector.extract_strided_slice %55 {offsets = [0, 64], sizes = [5, 8], strides = [1, 1]} : vector<10x96xf32> to vector<5x8xf32>
    %59 = arith.truncf %56 : vector<5x8xf32> to vector<5x8xbf16>
    %60 = arith.truncf %57 : vector<5x8xf32> to vector<5x8xbf16>
    %cst_42 = arith.constant dense<0.000000e+00> : vector<5x5xf32>
    %61 = tpu.matmul %59, %60, %cst_42 {dimension_numbers = #tpu.dot_dimension_numbers<[1], [1], [0], [0], [0, 0, 1, 0], [], []>} : vector<5x8xbf16>, vector<5x8xbf16>, vector<5x5xf32> -> vector<5x5xf32>
    %cst_43 = arith.constant 0.353553385 : f32
    %62 = vector.broadcast %cst_43 : f32 to vector<5x5xf32>
    %63 = arith.mulf %61, %62 : vector<5x5xf32>
    %cst_44 = arith.constant dense<0xFF800000> : vector<5xf32>
    %64 = vector.multi_reduction <maximumf>, %63, %cst_44 [1] : vector<5x5xf32> to vector<5xf32>
    %65 = vector.shape_cast %64 : vector<5xf32> to vector<5x1xf32>
    %66 = vector.broadcast %65 : vector<5x1xf32> to vector<5x5xf32>
    %67 = arith.subf %63, %66 : vector<5x5xf32>
    %68 = math.exp %67 : vector<5x5xf32>
    %cst_45 = arith.constant dense<0.000000e+00> : vector<5xf32>
    %69 = vector.multi_reduction <add>, %68, %cst_45 [1] : vector<5x5xf32> to vector<5xf32>
    %70 = vector.shape_cast %69 : vector<5xf32> to vector<5x1xf32>
    %71 = tpu.reciprocal %70 {approx = true} : vector<5x1xf32> -> vector<5x1xf32>
    %72 = vector.broadcast %71 : vector<5x1xf32> to vector<5x5xf32>
    %73 = arith.mulf %68, %72 : vector<5x5xf32>
    %74 = arith.truncf %73 : vector<5x5xf32> to vector<5x5xbf16>
    %75 = arith.truncf %58 : vector<5x8xf32> to vector<5x8xbf16>
    %cst_46 = arith.constant dense<0.000000e+00> : vector<5x8xf32>
    %76 = tpu.matmul %74, %75, %cst_46 {dimension_numbers = #tpu.dot_dimension_numbers<[1], [0], [0], [1], [0, 0, 1, 1], [], []>} : vector<5x5xbf16>, vector<5x8xbf16>, vector<5x8xf32> -> vector<5x8xf32>
    %c0_47 = arith.constant 0 : index
    %c0_48 = arith.constant 0 : index
    %c0_49 = arith.constant 0 : index
    %77 = vector.load %arg23[%c0_47, %c0_48, %c0_49] : memref<4x10x8xf32, #tpu.memory_space<vmem>>, vector<1x5x8xf32>
    %78 = vector.shape_cast %77 : vector<1x5x8xf32> to vector<5x8xf32>
    %79 = vector.shape_cast %76 : vector<5x8xf32> to vector<1x5x8xf32>
    tpu.vector_store %arg23[%c0_47, %c0_48, %c0_49], %79 {strides = array<i32>} : memref<4x10x8xf32, #tpu.memory_space<vmem>>, vector<1x5x8xf32>,
    %80 = vector.extract_strided_slice %55 {offsets = [0, 8], sizes = [5, 8], strides = [1, 1]} : vector<10x96xf32> to vector<5x8xf32>
    %81 = vector.extract_strided_slice %55 {offsets = [0, 40], sizes = [5, 8], strides = [1, 1]} : vector<10x96xf32> to vector<5x8xf32>
    %82 = vector.extract_strided_slice %55 {offsets = [0, 72], sizes = [5, 8], strides = [1, 1]} : vector<10x96xf32> to vector<5x8xf32>
    %83 = arith.truncf %80 : vector<5x8xf32> to vector<5x8xbf16>
    %84 = arith.truncf %81 : vector<5x8xf32> to vector<5x8xbf16>
    %cst_50 = arith.constant dense<0.000000e+00> : vector<5x5xf32>
    %85 = tpu.matmul %83, %84, %cst_50 {dimension_numbers = #tpu.dot_dimension_numbers<[1], [1], [0], [0], [0, 0, 1, 0], [], []>} : vector<5x8xbf16>, vector<5x8xbf16>, vector<5x5xf32> -> vector<5x5xf32>
    %cst_51 = arith.constant 0.353553385 : f32
    %86 = vector.broadcast %cst_51 : f32 to vector<5x5xf32>
    %87 = arith.mulf %85, %86 : vector<5x5xf32>
    %cst_52 = arith.constant dense<0xFF800000> : vector<5xf32>
    %88 = vector.multi_reduction <maximumf>, %87, %cst_52 [1] : vector<5x5xf32> to vector<5xf32>
    %89 = vector.shape_cast %88 : vector<5xf32> to vector<5x1xf32>
    %90 = vector.broadcast %89 : vector<5x1xf32> to vector<5x5xf32>
    %91 = arith.subf %87, %90 : vector<5x5xf32>
    %92 = math.exp %91 : vector<5x5xf32>
    %cst_53 = arith.constant dense<0.000000e+00> : vector<5xf32>
    %93 = vector.multi_reduction <add>, %92, %cst_53 [1] : vector<5x5xf32> to vector<5xf32>
    %94 = vector.shape_cast %93 : vector<5xf32> to vector<5x1xf32>
    %95 = tpu.reciprocal %94 {approx = true} : vector<5x1xf32> -> vector<5x1xf32>
    %96 = vector.broadcast %95 : vector<5x1xf32> to vector<5x5xf32>
    %97 = arith.mulf %92, %96 : vector<5x5xf32>
    %98 = arith.truncf %97 : vector<5x5xf32> to vector<5x5xbf16>
    %99 = arith.truncf %82 : vector<5x8xf32> to vector<5x8xbf16>
    %cst_54 = arith.constant dense<0.000000e+00> : vector<5x8xf32>
    %100 = tpu.matmul %98, %99, %cst_54 {dimension_numbers = #tpu.dot_dimension_numbers<[1], [0], [0], [1], [0, 0, 1, 1], [], []>} : vector<5x5xbf16>, vector<5x8xbf16>, vector<5x8xf32> -> vector<5x8xf32>
    %c1_55 = arith.constant 1 : index
    %c0_56 = arith.constant 0 : index
    %c0_57 = arith.constant 0 : index
    %101 = vector.load %arg23[%c1_55, %c0_56, %c0_57] : memref<4x10x8xf32, #tpu.memory_space<vmem>>, vector<1x5x8xf32>
    %102 = vector.shape_cast %101 : vector<1x5x8xf32> to vector<5x8xf32>
    %103 = vector.shape_cast %100 : vector<5x8xf32> to vector<1x5x8xf32>
    tpu.vector_store %arg23[%c1_55, %c0_56, %c0_57], %103 {strides = array<i32>} : memref<4x10x8xf32, #tpu.memory_space<vmem>>, vector<1x5x8xf32>,
    %104 = vector.extract_strided_slice %55 {offsets = [0, 16], sizes = [5, 8], strides = [1, 1]} : vector<10x96xf32> to vector<5x8xf32>
    %105 = vector.extract_strided_slice %55 {offsets = [0, 48], sizes = [5, 8], strides = [1, 1]} : vector<10x96xf32> to vector<5x8xf32>
    %106 = vector.extract_strided_slice %55 {offsets = [0, 80], sizes = [5, 8], strides = [1, 1]} : vector<10x96xf32> to vector<5x8xf32>
    %107 = arith.truncf %104 : vector<5x8xf32> to vector<5x8xbf16>
    %108 = arith.truncf %105 : vector<5x8xf32> to vector<5x8xbf16>
    %cst_58 = arith.constant dense<0.000000e+00> : vector<5x5xf32>
    %109 = tpu.matmul %107, %108, %cst_58 {dimension_numbers = #tpu.dot_dimension_numbers<[1], [1], [0], [0], [0, 0, 1, 0], [], []>} : vector<5x8xbf16>, vector<5x8xbf16>, vector<5x5xf32> -> vector<5x5xf32>
    %cst_59 = arith.constant 0.353553385 : f32
    %110 = vector.broadcast %cst_59 : f32 to vector<5x5xf32>
    %111 = arith.mulf %109, %110 : vector<5x5xf32>
    %cst_60 = arith.constant dense<0xFF800000> : vector<5xf32>
    %112 = vector.multi_reduction <maximumf>, %111, %cst_60 [1] : vector<5x5xf32> to vector<5xf32>
    %113 = vector.shape_cast %112 : vector<5xf32> to vector<5x1xf32>
    %114 = vector.broadcast %113 : vector<5x1xf32> to vector<5x5xf32>
    %115 = arith.subf %111, %114 : vector<5x5xf32>
    %116 = math.exp %115 : vector<5x5xf32>
    %cst_61 = arith.constant dense<0.000000e+00> : vector<5xf32>
    %117 = vector.multi_reduction <add>, %116, %cst_61 [1] : vector<5x5xf32> to vector<5xf32>
    %118 = vector.shape_cast %117 : vector<5xf32> to vector<5x1xf32>
    %119 = tpu.reciprocal %118 {approx = true} : vector<5x1xf32> -> vector<5x1xf32>
    %120 = vector.broadcast %119 : vector<5x1xf32> to vector<5x5xf32>
    %121 = arith.mulf %116, %120 : vector<5x5xf32>
    %122 = arith.truncf %121 : vector<5x5xf32> to vector<5x5xbf16>
    %123 = arith.truncf %106 : vector<5x8xf32> to vector<5x8xbf16>
    %cst_62 = arith.constant dense<0.000000e+00> : vector<5x8xf32>
    %124 = tpu.matmul %122, %123, %cst_62 {dimension_numbers = #tpu.dot_dimension_numbers<[1], [0], [0], [1], [0, 0, 1, 1], [], []>} : vector<5x5xbf16>, vector<5x8xbf16>, vector<5x8xf32> -> vector<5x8xf32>
    %c2 = arith.constant 2 : index
    %c0_63 = arith.constant 0 : index
    %c0_64 = arith.constant 0 : index
    %125 = vector.load %arg23[%c2, %c0_63, %c0_64] : memref<4x10x8xf32, #tpu.memory_space<vmem>>, vector<1x5x8xf32>
    %126 = vector.shape_cast %125 : vector<1x5x8xf32> to vector<5x8xf32>
    %127 = vector.shape_cast %124 : vector<5x8xf32> to vector<1x5x8xf32>
    tpu.vector_store %arg23[%c2, %c0_63, %c0_64], %127 {strides = array<i32>} : memref<4x10x8xf32, #tpu.memory_space<vmem>>, vector<1x5x8xf32>,
    %128 = vector.extract_strided_slice %55 {offsets = [0, 24], sizes = [5, 8], strides = [1, 1]} : vector<10x96xf32> to vector<5x8xf32>
    %129 = vector.extract_strided_slice %55 {offsets = [0, 56], sizes = [5, 8], strides = [1, 1]} : vector<10x96xf32> to vector<5x8xf32>
    %130 = vector.extract_strided_slice %55 {offsets = [0, 88], sizes = [5, 8], strides = [1, 1]} : vector<10x96xf32> to vector<5x8xf32>
    %131 = arith.truncf %128 : vector<5x8xf32> to vector<5x8xbf16>
    %132 = arith.truncf %129 : vector<5x8xf32> to vector<5x8xbf16>
    %cst_65 = arith.constant dense<0.000000e+00> : vector<5x5xf32>
    %133 = tpu.matmul %131, %132, %cst_65 {dimension_numbers = #tpu.dot_dimension_numbers<[1], [1], [0], [0], [0, 0, 1, 0], [], []>} : vector<5x8xbf16>, vector<5x8xbf16>, vector<5x5xf32> -> vector<5x5xf32>
    %cst_66 = arith.constant 0.353553385 : f32
    %134 = vector.broadcast %cst_66 : f32 to vector<5x5xf32>
    %135 = arith.mulf %133, %134 : vector<5x5xf32>
    %cst_67 = arith.constant dense<0xFF800000> : vector<5xf32>
    %136 = vector.multi_reduction <maximumf>, %135, %cst_67 [1] : vector<5x5xf32> to vector<5xf32>
    %137 = vector.shape_cast %136 : vector<5xf32> to vector<5x1xf32>
    %138 = vector.broadcast %137 : vector<5x1xf32> to vector<5x5xf32>
    %139 = arith.subf %135, %138 : vector<5x5xf32>
    %140 = math.exp %139 : vector<5x5xf32>
    %cst_68 = arith.constant dense<0.000000e+00> : vector<5xf32>
    %141 = vector.multi_reduction <add>, %140, %cst_68 [1] : vector<5x5xf32> to vector<5xf32>
    %142 = vector.shape_cast %141 : vector<5xf32> to vector<5x1xf32>
    %143 = tpu.reciprocal %142 {approx = true} : vector<5x1xf32> -> vector<5x1xf32>
    %144 = vector.broadcast %143 : vector<5x1xf32> to vector<5x5xf32>
    %145 = arith.mulf %140, %144 : vector<5x5xf32>
    %146 = arith.truncf %145 : vector<5x5xf32> to vector<5x5xbf16>
    %147 = arith.truncf %130 : vector<5x8xf32> to vector<5x8xbf16>
    %cst_69 = arith.constant dense<0.000000e+00> : vector<5x8xf32>
    %148 = tpu.matmul %146, %147, %cst_69 {dimension_numbers = #tpu.dot_dimension_numbers<[1], [0], [0], [1], [0, 0, 1, 1], [], []>} : vector<5x5xbf16>, vector<5x8xbf16>, vector<5x8xf32> -> vector<5x8xf32>
    %c3 = arith.constant 3 : index
    %c0_70 = arith.constant 0 : index
    %c0_71 = arith.constant 0 : index
    %149 = vector.load %arg23[%c3, %c0_70, %c0_71] : memref<4x10x8xf32, #tpu.memory_space<vmem>>, vector<1x5x8xf32>
    %150 = vector.shape_cast %149 : vector<1x5x8xf32> to vector<5x8xf32>
    %151 = vector.shape_cast %148 : vector<5x8xf32> to vector<1x5x8xf32>
    tpu.vector_store %arg23[%c3, %c0_70, %c0_71], %151 {strides = array<i32>} : memref<4x10x8xf32, #tpu.memory_space<vmem>>, vector<1x5x8xf32>,
    %152 = vector.extract_strided_slice %55 {offsets = [5, 0], sizes = [5, 8], strides = [1, 1]} : vector<10x96xf32> to vector<5x8xf32>
    %153 = vector.extract_strided_slice %55 {offsets = [5, 32], sizes = [5, 8], strides = [1, 1]} : vector<10x96xf32> to vector<5x8xf32>
    %154 = vector.extract_strided_slice %55 {offsets = [5, 64], sizes = [5, 8], strides = [1, 1]} : vector<10x96xf32> to vector<5x8xf32>
    %155 = arith.truncf %152 : vector<5x8xf32> to vector<5x8xbf16>
    %156 = arith.truncf %153 : vector<5x8xf32> to vector<5x8xbf16>
    %cst_72 = arith.constant dense<0.000000e+00> : vector<5x5xf32>
    %157 = tpu.matmul %155, %156, %cst_72 {dimension_numbers = #tpu.dot_dimension_numbers<[1], [1], [0], [0], [0, 0, 1, 0], [], []>} : vector<5x8xbf16>, vector<5x8xbf16>, vector<5x5xf32> -> vector<5x5xf32>
    %cst_73 = arith.constant 0.353553385 : f32
    %158 = vector.broadcast %cst_73 : f32 to vector<5x5xf32>
    %159 = arith.mulf %157, %158 : vector<5x5xf32>
    %cst_74 = arith.constant dense<0xFF800000> : vector<5xf32>
    %160 = vector.multi_reduction <maximumf>, %159, %cst_74 [1] : vector<5x5xf32> to vector<5xf32>
    %161 = vector.shape_cast %160 : vector<5xf32> to vector<5x1xf32>
    %162 = vector.broadcast %161 : vector<5x1xf32> to vector<5x5xf32>
    %163 = arith.subf %159, %162 : vector<5x5xf32>
    %164 = math.exp %163 : vector<5x5xf32>
    %cst_75 = arith.constant dense<0.000000e+00> : vector<5xf32>
    %165 = vector.multi_reduction <add>, %164, %cst_75 [1] : vector<5x5xf32> to vector<5xf32>
    %166 = vector.shape_cast %165 : vector<5xf32> to vector<5x1xf32>
    %167 = tpu.reciprocal %166 {approx = true} : vector<5x1xf32> -> vector<5x1xf32>
    %168 = vector.broadcast %167 : vector<5x1xf32> to vector<5x5xf32>
    %169 = arith.mulf %164, %168 : vector<5x5xf32>
    %170 = arith.truncf %169 : vector<5x5xf32> to vector<5x5xbf16>
    %171 = arith.truncf %154 : vector<5x8xf32> to vector<5x8xbf16>
    %cst_76 = arith.constant dense<0.000000e+00> : vector<5x8xf32>
    %172 = tpu.matmul %170, %171, %cst_76 {dimension_numbers = #tpu.dot_dimension_numbers<[1], [0], [0], [1], [0, 0, 1, 1], [], []>} : vector<5x5xbf16>, vector<5x8xbf16>, vector<5x8xf32> -> vector<5x8xf32>
    %c0_77 = arith.constant 0 : index
    %c5_78 = arith.constant 5 : index
    %c0_79 = arith.constant 0 : index
    %173 = vector.load %arg23[%c0_77, %c5_78, %c0_79] : memref<4x10x8xf32, #tpu.memory_space<vmem>>, vector<1x5x8xf32>
    %174 = vector.shape_cast %173 : vector<1x5x8xf32> to vector<5x8xf32>
    %175 = vector.shape_cast %172 : vector<5x8xf32> to vector<1x5x8xf32>
    tpu.vector_store %arg23[%c0_77, %c5_78, %c0_79], %175 {strides = array<i32>} : memref<4x10x8xf32, #tpu.memory_space<vmem>>, vector<1x5x8xf32>,
    %176 = vector.extract_strided_slice %55 {offsets = [5, 8], sizes = [5, 8], strides = [1, 1]} : vector<10x96xf32> to vector<5x8xf32>
    %177 = vector.extract_strided_slice %55 {offsets = [5, 40], sizes = [5, 8], strides = [1, 1]} : vector<10x96xf32> to vector<5x8xf32>
    %178 = vector.extract_strided_slice %55 {offsets = [5, 72], sizes = [5, 8], strides = [1, 1]} : vector<10x96xf32> to vector<5x8xf32>
    %179 = arith.truncf %176 : vector<5x8xf32> to vector<5x8xbf16>
    %180 = arith.truncf %177 : vector<5x8xf32> to vector<5x8xbf16>
    %cst_80 = arith.constant dense<0.000000e+00> : vector<5x5xf32>
    %181 = tpu.matmul %179, %180, %cst_80 {dimension_numbers = #tpu.dot_dimension_numbers<[1], [1], [0], [0], [0, 0, 1, 0], [], []>} : vector<5x8xbf16>, vector<5x8xbf16>, vector<5x5xf32> -> vector<5x5xf32>
    %cst_81 = arith.constant 0.353553385 : f32
    %182 = vector.broadcast %cst_81 : f32 to vector<5x5xf32>
    %183 = arith.mulf %181, %182 : vector<5x5xf32>
    %cst_82 = arith.constant dense<0xFF800000> : vector<5xf32>
    %184 = vector.multi_reduction <maximumf>, %183, %cst_82 [1] : vector<5x5xf32> to vector<5xf32>
    %185 = vector.shape_cast %184 : vector<5xf32> to vector<5x1xf32>
    %186 = vector.broadcast %185 : vector<5x1xf32> to vector<5x5xf32>
    %187 = arith.subf %183, %186 : vector<5x5xf32>
    %188 = math.exp %187 : vector<5x5xf32>
    %cst_83 = arith.constant dense<0.000000e+00> : vector<5xf32>
    %189 = vector.multi_reduction <add>, %188, %cst_83 [1] : vector<5x5xf32> to vector<5xf32>
    %190 = vector.shape_cast %189 : vector<5xf32> to vector<5x1xf32>
    %191 = tpu.reciprocal %190 {approx = true} : vector<5x1xf32> -> vector<5x1xf32>
    %192 = vector.broadcast %191 : vector<5x1xf32> to vector<5x5xf32>
    %193 = arith.mulf %188, %192 : vector<5x5xf32>
    %194 = arith.truncf %193 : vector<5x5xf32> to vector<5x5xbf16>
    %195 = arith.truncf %178 : vector<5x8xf32> to vector<5x8xbf16>
    %cst_84 = arith.constant dense<0.000000e+00> : vector<5x8xf32>
    %196 = tpu.matmul %194, %195, %cst_84 {dimension_numbers = #tpu.dot_dimension_numbers<[1], [0], [0], [1], [0, 0, 1, 1], [], []>} : vector<5x5xbf16>, vector<5x8xbf16>, vector<5x8xf32> -> vector<5x8xf32>
    %c1_85 = arith.constant 1 : index
    %c5_86 = arith.constant 5 : index
    %c0_87 = arith.constant 0 : index
    %197 = vector.load %arg23[%c1_85, %c5_86, %c0_87] : memref<4x10x8xf32, #tpu.memory_space<vmem>>, vector<1x5x8xf32>
    %198 = vector.shape_cast %197 : vector<1x5x8xf32> to vector<5x8xf32>
    %199 = vector.shape_cast %196 : vector<5x8xf32> to vector<1x5x8xf32>
    tpu.vector_store %arg23[%c1_85, %c5_86, %c0_87], %199 {strides = array<i32>} : memref<4x10x8xf32, #tpu.memory_space<vmem>>, vector<1x5x8xf32>,
    %200 = vector.extract_strided_slice %55 {offsets = [5, 16], sizes = [5, 8], strides = [1, 1]} : vector<10x96xf32> to vector<5x8xf32>
    %201 = vector.extract_strided_slice %55 {offsets = [5, 48], sizes = [5, 8], strides = [1, 1]} : vector<10x96xf32> to vector<5x8xf32>
    %202 = vector.extract_strided_slice %55 {offsets = [5, 80], sizes = [5, 8], strides = [1, 1]} : vector<10x96xf32> to vector<5x8xf32>
    %203 = arith.truncf %200 : vector<5x8xf32> to vector<5x8xbf16>
    %204 = arith.truncf %201 : vector<5x8xf32> to vector<5x8xbf16>
    %cst_88 = arith.constant dense<0.000000e+00> : vector<5x5xf32>
    %205 = tpu.matmul %203, %204, %cst_88 {dimension_numbers = #tpu.dot_dimension_numbers<[1], [1], [0], [0], [0, 0, 1, 0], [], []>} : vector<5x8xbf16>, vector<5x8xbf16>, vector<5x5xf32> -> vector<5x5xf32>
    %cst_89 = arith.constant 0.353553385 : f32
    %206 = vector.broadcast %cst_89 : f32 to vector<5x5xf32>
    %207 = arith.mulf %205, %206 : vector<5x5xf32>
    %cst_90 = arith.constant dense<0xFF800000> : vector<5xf32>
    %208 = vector.multi_reduction <maximumf>, %207, %cst_90 [1] : vector<5x5xf32> to vector<5xf32>
    %209 = vector.shape_cast %208 : vector<5xf32> to vector<5x1xf32>
    %210 = vector.broadcast %209 : vector<5x1xf32> to vector<5x5xf32>
    %211 = arith.subf %207, %210 : vector<5x5xf32>
    %212 = math.exp %211 : vector<5x5xf32>
    %cst_91 = arith.constant dense<0.000000e+00> : vector<5xf32>
    %213 = vector.multi_reduction <add>, %212, %cst_91 [1] : vector<5x5xf32> to vector<5xf32>
    %214 = vector.shape_cast %213 : vector<5xf32> to vector<5x1xf32>
    %215 = tpu.reciprocal %214 {approx = true} : vector<5x1xf32> -> vector<5x1xf32>
    %216 = vector.broadcast %215 : vector<5x1xf32> to vector<5x5xf32>
    %217 = arith.mulf %212, %216 : vector<5x5xf32>
    %218 = arith.truncf %217 : vector<5x5xf32> to vector<5x5xbf16>
    %219 = arith.truncf %202 : vector<5x8xf32> to vector<5x8xbf16>
    %cst_92 = arith.constant dense<0.000000e+00> : vector<5x8xf32>
    %220 = tpu.matmul %218, %219, %cst_92 {dimension_numbers = #tpu.dot_dimension_numbers<[1], [0], [0], [1], [0, 0, 1, 1], [], []>} : vector<5x5xbf16>, vector<5x8xbf16>, vector<5x8xf32> -> vector<5x8xf32>
    %c2_93 = arith.constant 2 : index
    %c5_94 = arith.constant 5 : index
    %c0_95 = arith.constant 0 : index
    %221 = vector.load %arg23[%c2_93, %c5_94, %c0_95] : memref<4x10x8xf32, #tpu.memory_space<vmem>>, vector<1x5x8xf32>
    %222 = vector.shape_cast %221 : vector<1x5x8xf32> to vector<5x8xf32>
    %223 = vector.shape_cast %220 : vector<5x8xf32> to vector<1x5x8xf32>
    tpu.vector_store %arg23[%c2_93, %c5_94, %c0_95], %223 {strides = array<i32>} : memref<4x10x8xf32, #tpu.memory_space<vmem>>, vector<1x5x8xf32>,
    %224 = vector.extract_strided_slice %55 {offsets = [5, 24], sizes = [5, 8], strides = [1, 1]} : vector<10x96xf32> to vector<5x8xf32>
    %225 = vector.extract_strided_slice %55 {offsets = [5, 56], sizes = [5, 8], strides = [1, 1]} : vector<10x96xf32> to vector<5x8xf32>
    %226 = vector.extract_strided_slice %55 {offsets = [5, 88], sizes = [5, 8], strides = [1, 1]} : vector<10x96xf32> to vector<5x8xf32>
    %227 = arith.truncf %224 : vector<5x8xf32> to vector<5x8xbf16>
    %228 = arith.truncf %225 : vector<5x8xf32> to vector<5x8xbf16>
    %cst_96 = arith.constant dense<0.000000e+00> : vector<5x5xf32>
    %229 = tpu.matmul %227, %228, %cst_96 {dimension_numbers = #tpu.dot_dimension_numbers<[1], [1], [0], [0], [0, 0, 1, 0], [], []>} : vector<5x8xbf16>, vector<5x8xbf16>, vector<5x5xf32> -> vector<5x5xf32>
    %cst_97 = arith.constant 0.353553385 : f32
    %230 = vector.broadcast %cst_97 : f32 to vector<5x5xf32>
    %231 = arith.mulf %229, %230 : vector<5x5xf32>
    %cst_98 = arith.constant dense<0xFF800000> : vector<5xf32>
    %232 = vector.multi_reduction <maximumf>, %231, %cst_98 [1] : vector<5x5xf32> to vector<5xf32>
    %233 = vector.shape_cast %232 : vector<5xf32> to vector<5x1xf32>
    %234 = vector.broadcast %233 : vector<5x1xf32> to vector<5x5xf32>
    %235 = arith.subf %231, %234 : vector<5x5xf32>
    %236 = math.exp %235 : vector<5x5xf32>
    %cst_99 = arith.constant dense<0.000000e+00> : vector<5xf32>
    %237 = vector.multi_reduction <add>, %236, %cst_99 [1] : vector<5x5xf32> to vector<5xf32>
    %238 = vector.shape_cast %237 : vector<5xf32> to vector<5x1xf32>
    %239 = tpu.reciprocal %238 {approx = true} : vector<5x1xf32> -> vector<5x1xf32>
    %240 = vector.broadcast %239 : vector<5x1xf32> to vector<5x5xf32>
    %241 = arith.mulf %236, %240 : vector<5x5xf32>
    %242 = arith.truncf %241 : vector<5x5xf32> to vector<5x5xbf16>
    %243 = arith.truncf %226 : vector<5x8xf32> to vector<5x8xbf16>
    %cst_100 = arith.constant dense<0.000000e+00> : vector<5x8xf32>
    %244 = tpu.matmul %242, %243, %cst_100 {dimension_numbers = #tpu.dot_dimension_numbers<[1], [0], [0], [1], [0, 0, 1, 1], [], []>} : vector<5x5xbf16>, vector<5x8xbf16>, vector<5x8xf32> -> vector<5x8xf32>
    %c3_101 = arith.constant 3 : index
    %c5_102 = arith.constant 5 : index
    %c0_103 = arith.constant 0 : index
    %245 = vector.load %arg23[%c3_101, %c5_102, %c0_103] : memref<4x10x8xf32, #tpu.memory_space<vmem>>, vector<1x5x8xf32>
    %246 = vector.shape_cast %245 : vector<1x5x8xf32> to vector<5x8xf32>
    %247 = vector.shape_cast %244 : vector<5x8xf32> to vector<1x5x8xf32>
    tpu.vector_store %arg23[%c3_101, %c5_102, %c0_103], %247 {strides = array<i32>} : memref<4x10x8xf32, #tpu.memory_space<vmem>>, vector<1x5x8xf32>,
    %c0_104 = arith.constant 0 : index
    %c0_105 = arith.constant 0 : index
    %c0_106 = arith.constant 0 : index
    %248 = vector.load %arg10[%c0_104, %c0_105, %c0_106] : memref<2x1x32xf32, #tpu.memory_space<vmem>>, vector<1x1x32xf32>
    %249 = vector.shape_cast %248 : vector<1x1x32xf32> to vector<1x32xf32>
    %c0_107 = arith.constant 0 : index
    %c0_108 = arith.constant 0 : index
    %c0_109 = arith.constant 0 : index
    %250 = vector.load %arg23[%c0_107, %c0_108, %c0_109] : memref<4x10x8xf32, #tpu.memory_space<vmem>>, vector<1x10x8xf32>
    %251 = vector.shape_cast %250 : vector<1x10x8xf32> to vector<10x8xf32>
    %c0_110 = arith.constant 0 : index
    %c0_111 = arith.constant 0 : index
    %c0_112 = arith.constant 0 : index
    %252 = vector.load %arg9[%c0_110, %c0_111, %c0_112] : memref<2x32x32xbf16, #tpu.memory_space<vmem>>, vector<1x8x32xbf16>
    %253 = vector.shape_cast %252 : vector<1x8x32xbf16> to vector<8x32xbf16>
    %254 = arith.truncf %251 : vector<10x8xf32> to vector<10x8xbf16>
    %cst_113 = arith.constant dense<0.000000e+00> : vector<10x32xf32>
    %255 = tpu.matmul %254, %253, %cst_113 {dimension_numbers = #tpu.dot_dimension_numbers<[1], [0], [0], [1], [0, 0, 1, 1], [], []>} : vector<10x8xbf16>, vector<8x32xbf16>, vector<10x32xf32> -> vector<10x32xf32>
    %256 = vector.broadcast %249 : vector<1x32xf32> to vector<10x32xf32>
    %257 = arith.addf %256, %255 : vector<10x32xf32>
    %c1_114 = arith.constant 1 : index
    %c0_115 = arith.constant 0 : index
    %c0_116 = arith.constant 0 : index
    %258 = vector.load %arg23[%c1_114, %c0_115, %c0_116] : memref<4x10x8xf32, #tpu.memory_space<vmem>>, vector<1x10x8xf32>
    %259 = vector.shape_cast %258 : vector<1x10x8xf32> to vector<10x8xf32>
    %c0_117 = arith.constant 0 : index
    %c8 = arith.constant 8 : index
    %c0_118 = arith.constant 0 : index
    %260 = vector.load %arg9[%c0_117, %c8, %c0_118] : memref<2x32x32xbf16, #tpu.memory_space<vmem>>, vector<1x8x32xbf16>
    %261 = vector.shape_cast %260 : vector<1x8x32xbf16> to vector<8x32xbf16>
    %262 = arith.truncf %259 : vector<10x8xf32> to vector<10x8xbf16>
    %cst_119 = arith.constant dense<0.000000e+00> : vector<10x32xf32>
    %263 = tpu.matmul %262, %261, %cst_119 {dimension_numbers = #tpu.dot_dimension_numbers<[1], [0], [0], [1], [0, 0, 1, 1], [], []>} : vector<10x8xbf16>, vector<8x32xbf16>, vector<10x32xf32> -> vector<10x32xf32>
    %264 = arith.addf %257, %263 : vector<10x32xf32>
    %c2_120 = arith.constant 2 : index
    %c0_121 = arith.constant 0 : index
    %c0_122 = arith.constant 0 : index
    %265 = vector.load %arg23[%c2_120, %c0_121, %c0_122] : memref<4x10x8xf32, #tpu.memory_space<vmem>>, vector<1x10x8xf32>
    %266 = vector.shape_cast %265 : vector<1x10x8xf32> to vector<10x8xf32>
    %c0_123 = arith.constant 0 : index
    %c16 = arith.constant 16 : index
    %c0_124 = arith.constant 0 : index
    %267 = vector.load %arg9[%c0_123, %c16, %c0_124] : memref<2x32x32xbf16, #tpu.memory_space<vmem>>, vector<1x8x32xbf16>
    %268 = vector.shape_cast %267 : vector<1x8x32xbf16> to vector<8x32xbf16>
    %269 = arith.truncf %266 : vector<10x8xf32> to vector<10x8xbf16>
    %cst_125 = arith.constant dense<0.000000e+00> : vector<10x32xf32>
    %270 = tpu.matmul %269, %268, %cst_125 {dimension_numbers = #tpu.dot_dimension_numbers<[1], [0], [0], [1], [0, 0, 1, 1], [], []>} : vector<10x8xbf16>, vector<8x32xbf16>, vector<10x32xf32> -> vector<10x32xf32>
    %271 = arith.addf %264, %270 : vector<10x32xf32>
    %c3_126 = arith.constant 3 : index
    %c0_127 = arith.constant 0 : index
    %c0_128 = arith.constant 0 : index
    %272 = vector.load %arg23[%c3_126, %c0_127, %c0_128] : memref<4x10x8xf32, #tpu.memory_space<vmem>>, vector<1x10x8xf32>
    %273 = vector.shape_cast %272 : vector<1x10x8xf32> to vector<10x8xf32>
    %c0_129 = arith.constant 0 : index
    %c24 = arith.constant 24 : index
    %c0_130 = arith.constant 0 : index
    %274 = vector.load %arg9[%c0_129, %c24, %c0_130] : memref<2x32x32xbf16, #tpu.memory_space<vmem>>, vector<1x8x32xbf16>
    %275 = vector.shape_cast %274 : vector<1x8x32xbf16> to vector<8x32xbf16>
    %276 = arith.truncf %273 : vector<10x8xf32> to vector<10x8xbf16>
    %cst_131 = arith.constant dense<0.000000e+00> : vector<10x32xf32>
    %277 = tpu.matmul %276, %275, %cst_131 {dimension_numbers = #tpu.dot_dimension_numbers<[1], [0], [0], [1], [0, 0, 1, 1], [], []>} : vector<10x8xbf16>, vector<8x32xbf16>, vector<10x32xf32> -> vector<10x32xf32>
    %278 = arith.addf %271, %277 : vector<10x32xf32>
    %279 = arith.addf %23, %278 : vector<10x32xf32>
    %c0_132 = arith.constant 0 : index
    %c0_133 = arith.constant 0 : index
    %c0_134 = arith.constant 0 : index
    %280 = vector.load %arg11[%c0_132, %c0_133, %c0_134] : memref<2x1x32xf32, #tpu.memory_space<vmem>>, vector<1x1x32xf32>
    %281 = vector.shape_cast %280 : vector<1x1x32xf32> to vector<1x32xf32>
    %c0_135 = arith.constant 0 : index
    %c0_136 = arith.constant 0 : index
    %c0_137 = arith.constant 0 : index
    %282 = vector.load %arg12[%c0_135, %c0_136, %c0_137] : memref<2x1x32xf32, #tpu.memory_space<vmem>>, vector<1x1x32xf32>
    %283 = vector.shape_cast %282 : vector<1x1x32xf32> to vector<1x32xf32>
    %cst_138 = arith.constant dense<0.000000e+00> : vector<10xf32>
    %284 = vector.multi_reduction <add>, %279, %cst_138 [1] : vector<10x32xf32> to vector<10xf32>
    %285 = vector.shape_cast %284 : vector<10xf32> to vector<10x1xf32>
    %cst_139 = arith.constant 3.200000e+01 : f32
    %286 = vector.broadcast %cst_139 : f32 to vector<10x1xf32>
    %287 = arith.divf %285, %286 : vector<10x1xf32>
    %288 = vector.broadcast %287 : vector<10x1xf32> to vector<10x32xf32>
    %289 = arith.subf %279, %288 : vector<10x32xf32>
    %290 = arith.mulf %289, %289 : vector<10x32xf32>
    %cst_140 = arith.constant dense<0.000000e+00> : vector<10xf32>
    %291 = vector.multi_reduction <add>, %290, %cst_140 [1] : vector<10x32xf32> to vector<10xf32>
    %292 = vector.shape_cast %291 : vector<10xf32> to vector<10x1xf32>
    %cst_141 = arith.constant 3.200000e+01 : f32
    %293 = vector.broadcast %cst_141 : f32 to vector<10x1xf32>
    %294 = arith.divf %292, %293 : vector<10x1xf32>
    %cst_142 = arith.constant 9.99999997E-7 : f32
    %295 = vector.broadcast %cst_142 : f32 to vector<10x1xf32>
    %296 = arith.addf %294, %295 : vector<10x1xf32>
    %297 = math.rsqrt %296 : vector<10x1xf32>
    %298 = vector.broadcast %297 : vector<10x1xf32> to vector<10x32xf32>
    %299 = arith.mulf %289, %298 : vector<10x32xf32>
    %300 = vector.broadcast %281 : vector<1x32xf32> to vector<10x32xf32>
    %301 = arith.mulf %299, %300 : vector<10x32xf32>
    %302 = vector.broadcast %283 : vector<1x32xf32> to vector<10x32xf32>
    %303 = arith.addf %301, %302 : vector<10x32xf32>
    %c0_143 = arith.constant 0 : index
    %c0_144 = arith.constant 0 : index
    %c0_145 = arith.constant 0 : index
    %304 = vector.load %arg13[%c0_143, %c0_144, %c0_145] : memref<2x32x128xbf16, #tpu.memory_space<vmem>>, vector<1x32x128xbf16>
    %305 = vector.shape_cast %304 : vector<1x32x128xbf16> to vector<32x128xbf16>
    %306 = arith.truncf %303 : vector<10x32xf32> to vector<10x32xbf16>
    %cst_146 = arith.constant dense<0.000000e+00> : vector<10x128xf32>
    %307 = tpu.matmul %306, %305, %cst_146 {dimension_numbers = #tpu.dot_dimension_numbers<[1], [0], [0], [1], [0, 0, 1, 1], [], []>} : vector<10x32xbf16>, vector<32x128xbf16>, vector<10x128xf32> -> vector<10x128xf32>
    %c0_147 = arith.constant 0 : index
    %c0_148 = arith.constant 0 : index
    %c0_149 = arith.constant 0 : index
    %308 = vector.load %arg14[%c0_147, %c0_148, %c0_149] : memref<2x1x128xf32, #tpu.memory_space<vmem>>, vector<1x1x128xf32>
    %309 = vector.shape_cast %308 : vector<1x1x128xf32> to vector<1x128xf32>
    %310 = vector.broadcast %309 : vector<1x128xf32> to vector<10x128xf32>
    %311 = arith.addf %307, %310 : vector<10x128xf32>
    %cst_150 = arith.constant 0.707106769 : f32
    %312 = vector.broadcast %cst_150 : f32 to vector<10x128xf32>
    %313 = arith.mulf %311, %312 : vector<10x128xf32>
    %314 = math.absf %313 : vector<10x128xf32>
    %cst_151 = arith.constant 0.327591091 : f32
    %315 = vector.broadcast %cst_151 : f32 to vector<10x128xf32>
    %316 = arith.mulf %315, %314 : vector<10x128xf32>
    %cst_152 = arith.constant 1.000000e+00 : f32
    %317 = vector.broadcast %cst_152 : f32 to vector<10x128xf32>
    %318 = arith.addf %317, %316 : vector<10x128xf32>
    %cst_153 = arith.constant 1.000000e+00 : f32
    %319 = vector.broadcast %cst_153 : f32 to vector<10x128xf32>
    %320 = arith.divf %319, %318 : vector<10x128xf32>
    %cst_154 = arith.constant 1.06140542 : f32
    %321 = vector.broadcast %cst_154 : f32 to vector<10x128xf32>
    %322 = arith.mulf %321, %320 : vector<10x128xf32>
    %cst_155 = arith.constant 1.45315206 : f32
    %323 = vector.broadcast %cst_155 : f32 to vector<10x128xf32>
    %324 = arith.subf %322, %323 : vector<10x128xf32>
    %325 = arith.mulf %324, %320 : vector<10x128xf32>
    %cst_156 = arith.constant 1.42141378 : f32
    %326 = vector.broadcast %cst_156 : f32 to vector<10x128xf32>
    %327 = arith.addf %325, %326 : vector<10x128xf32>
    %328 = arith.mulf %327, %320 : vector<10x128xf32>
    %cst_157 = arith.constant 0.284496725 : f32
    %329 = vector.broadcast %cst_157 : f32 to vector<10x128xf32>
    %330 = arith.subf %328, %329 : vector<10x128xf32>
    %331 = arith.mulf %330, %320 : vector<10x128xf32>
    %cst_158 = arith.constant 0.254829586 : f32
    %332 = vector.broadcast %cst_158 : f32 to vector<10x128xf32>
    %333 = arith.addf %331, %332 : vector<10x128xf32>
    %334 = arith.mulf %333, %320 : vector<10x128xf32>
    %cst_159 = arith.constant 0.000000e+00 : f32
    %335 = vector.broadcast %cst_159 : f32 to vector<10x128xf32>
    %336 = arith.subf %335, %314 : vector<10x128xf32>
    %337 = arith.mulf %336, %314 : vector<10x128xf32>
    %338 = math.exp %337 : vector<10x128xf32>
    %339 = arith.mulf %334, %338 : vector<10x128xf32>
    %cst_160 = arith.constant 1.000000e+00 : f32
    %340 = vector.broadcast %cst_160 : f32 to vector<10x128xf32>
    %341 = arith.subf %340, %339 : vector<10x128xf32>
    %cst_161 = arith.constant 0.000000e+00 : f32
    %342 = vector.broadcast %cst_161 : f32 to vector<10x128xf32>
    %343 = arith.cmpf oge, %313, %342 : vector<10x128xf32>
    %cst_162 = arith.constant 0.000000e+00 : f32
    %344 = vector.broadcast %cst_162 : f32 to vector<10x128xf32>
    %345 = arith.subf %344, %341 : vector<10x128xf32>
    %346 = arith.select %343, %341, %345 : vector<10x128xi1>, vector<10x128xf32>
    %cst_163 = arith.constant 5.000000e-01 : f32
    %347 = vector.broadcast %cst_163 : f32 to vector<10x128xf32>
    %348 = arith.mulf %347, %311 : vector<10x128xf32>
    %cst_164 = arith.constant 1.000000e+00 : f32
    %349 = vector.broadcast %cst_164 : f32 to vector<10x128xf32>
    %350 = arith.addf %349, %346 : vector<10x128xf32>
    %351 = arith.mulf %348, %350 : vector<10x128xf32>
    %c0_165 = arith.constant 0 : index
    %c0_166 = arith.constant 0 : index
    %c0_167 = arith.constant 0 : index
    %352 = vector.load %arg15[%c0_165, %c0_166, %c0_167] : memref<2x128x32xbf16, #tpu.memory_space<vmem>>, vector<1x128x32xbf16>
    %353 = vector.shape_cast %352 : vector<1x128x32xbf16> to vector<128x32xbf16>
    %354 = arith.truncf %351 : vector<10x128xf32> to vector<10x128xbf16>
    %cst_168 = arith.constant dense<0.000000e+00> : vector<10x32xf32>
    %355 = tpu.matmul %354, %353, %cst_168 {dimension_numbers = #tpu.dot_dimension_numbers<[1], [0], [0], [1], [0, 0, 1, 1], [], []>} : vector<10x128xbf16>, vector<128x32xbf16>, vector<10x32xf32> -> vector<10x32xf32>
    %356 = arith.addf %279, %355 : vector<10x32xf32>
    %c0_169 = arith.constant 0 : index
    %c0_170 = arith.constant 0 : index
    %c0_171 = arith.constant 0 : index
    %357 = vector.load %arg16[%c0_169, %c0_170, %c0_171] : memref<2x1x32xf32, #tpu.memory_space<vmem>>, vector<1x1x32xf32>
    %358 = vector.shape_cast %357 : vector<1x1x32xf32> to vector<1x32xf32>
    %359 = vector.broadcast %358 : vector<1x32xf32> to vector<10x32xf32>
    %360 = arith.addf %356, %359 : vector<10x32xf32>
    %c1_172 = arith.constant 1 : index
    %c0_173 = arith.constant 0 : index
    %c0_174 = arith.constant 0 : index
    %361 = vector.load %arg5[%c1_172, %c0_173, %c0_174] : memref<2x1x32xf32, #tpu.memory_space<vmem>>, vector<1x1x32xf32>
    %362 = vector.shape_cast %361 : vector<1x1x32xf32> to vector<1x32xf32>
    %c1_175 = arith.constant 1 : index
    %c0_176 = arith.constant 0 : index
    %c0_177 = arith.constant 0 : index
    %363 = vector.load %arg6[%c1_175, %c0_176, %c0_177] : memref<2x1x32xf32, #tpu.memory_space<vmem>>, vector<1x1x32xf32>
    %364 = vector.shape_cast %363 : vector<1x1x32xf32> to vector<1x32xf32>
    %cst_178 = arith.constant dense<0.000000e+00> : vector<10xf32>
    %365 = vector.multi_reduction <add>, %360, %cst_178 [1] : vector<10x32xf32> to vector<10xf32>
    %366 = vector.shape_cast %365 : vector<10xf32> to vector<10x1xf32>
    %cst_179 = arith.constant 3.200000e+01 : f32
    %367 = vector.broadcast %cst_179 : f32 to vector<10x1xf32>
    %368 = arith.divf %366, %367 : vector<10x1xf32>
    %369 = vector.broadcast %368 : vector<10x1xf32> to vector<10x32xf32>
    %370 = arith.subf %360, %369 : vector<10x32xf32>
    %371 = arith.mulf %370, %370 : vector<10x32xf32>
    %cst_180 = arith.constant dense<0.000000e+00> : vector<10xf32>
    %372 = vector.multi_reduction <add>, %371, %cst_180 [1] : vector<10x32xf32> to vector<10xf32>
    %373 = vector.shape_cast %372 : vector<10xf32> to vector<10x1xf32>
    %cst_181 = arith.constant 3.200000e+01 : f32
    %374 = vector.broadcast %cst_181 : f32 to vector<10x1xf32>
    %375 = arith.divf %373, %374 : vector<10x1xf32>
    %cst_182 = arith.constant 9.99999997E-7 : f32
    %376 = vector.broadcast %cst_182 : f32 to vector<10x1xf32>
    %377 = arith.addf %375, %376 : vector<10x1xf32>
    %378 = math.rsqrt %377 : vector<10x1xf32>
    %379 = vector.broadcast %378 : vector<10x1xf32> to vector<10x32xf32>
    %380 = arith.mulf %370, %379 : vector<10x32xf32>
    %381 = vector.broadcast %362 : vector<1x32xf32> to vector<10x32xf32>
    %382 = arith.mulf %380, %381 : vector<10x32xf32>
    %383 = vector.broadcast %364 : vector<1x32xf32> to vector<10x32xf32>
    %384 = arith.addf %382, %383 : vector<10x32xf32>
    %c1_183 = arith.constant 1 : index
    %c0_184 = arith.constant 0 : index
    %c0_185 = arith.constant 0 : index
    %385 = vector.load %arg7[%c1_183, %c0_184, %c0_185] : memref<2x32x96xbf16, #tpu.memory_space<vmem>>, vector<1x32x96xbf16>
    %386 = vector.shape_cast %385 : vector<1x32x96xbf16> to vector<32x96xbf16>
    %387 = arith.truncf %384 : vector<10x32xf32> to vector<10x32xbf16>
    %cst_186 = arith.constant dense<0.000000e+00> : vector<10x96xf32>
    %388 = tpu.matmul %387, %386, %cst_186 {dimension_numbers = #tpu.dot_dimension_numbers<[1], [0], [0], [1], [0, 0, 1, 1], [], []>} : vector<10x32xbf16>, vector<32x96xbf16>, vector<10x96xf32> -> vector<10x96xf32>
    %c1_187 = arith.constant 1 : index
    %c0_188 = arith.constant 0 : index
    %c0_189 = arith.constant 0 : index
    %389 = vector.load %arg8[%c1_187, %c0_188, %c0_189] : memref<2x1x96xf32, #tpu.memory_space<vmem>>, vector<1x1x96xf32>
    %390 = vector.shape_cast %389 : vector<1x1x96xf32> to vector<1x96xf32>
    %391 = vector.broadcast %390 : vector<1x96xf32> to vector<10x96xf32>
    %392 = arith.addf %388, %391 : vector<10x96xf32>
    %393 = vector.extract_strided_slice %392 {offsets = [0, 0], sizes = [5, 8], strides = [1, 1]} : vector<10x96xf32> to vector<5x8xf32>
    %394 = vector.extract_strided_slice %392 {offsets = [0, 32], sizes = [5, 8], strides = [1, 1]} : vector<10x96xf32> to vector<5x8xf32>
    %395 = vector.extract_strided_slice %392 {offsets = [0, 64], sizes = [5, 8], strides = [1, 1]} : vector<10x96xf32> to vector<5x8xf32>
    %396 = arith.truncf %393 : vector<5x8xf32> to vector<5x8xbf16>
    %397 = arith.truncf %394 : vector<5x8xf32> to vector<5x8xbf16>
    %cst_190 = arith.constant dense<0.000000e+00> : vector<5x5xf32>
    %398 = tpu.matmul %396, %397, %cst_190 {dimension_numbers = #tpu.dot_dimension_numbers<[1], [1], [0], [0], [0, 0, 1, 0], [], []>} : vector<5x8xbf16>, vector<5x8xbf16>, vector<5x5xf32> -> vector<5x5xf32>
    %cst_191 = arith.constant 0.353553385 : f32
    %399 = vector.broadcast %cst_191 : f32 to vector<5x5xf32>
    %400 = arith.mulf %398, %399 : vector<5x5xf32>
    %cst_192 = arith.constant dense<0xFF800000> : vector<5xf32>
    %401 = vector.multi_reduction <maximumf>, %400, %cst_192 [1] : vector<5x5xf32> to vector<5xf32>
    %402 = vector.shape_cast %401 : vector<5xf32> to vector<5x1xf32>
    %403 = vector.broadcast %402 : vector<5x1xf32> to vector<5x5xf32>
    %404 = arith.subf %400, %403 : vector<5x5xf32>
    %405 = math.exp %404 : vector<5x5xf32>
    %cst_193 = arith.constant dense<0.000000e+00> : vector<5xf32>
    %406 = vector.multi_reduction <add>, %405, %cst_193 [1] : vector<5x5xf32> to vector<5xf32>
    %407 = vector.shape_cast %406 : vector<5xf32> to vector<5x1xf32>
    %408 = tpu.reciprocal %407 {approx = true} : vector<5x1xf32> -> vector<5x1xf32>
    %409 = vector.broadcast %408 : vector<5x1xf32> to vector<5x5xf32>
    %410 = arith.mulf %405, %409 : vector<5x5xf32>
    %411 = arith.truncf %410 : vector<5x5xf32> to vector<5x5xbf16>
    %412 = arith.truncf %395 : vector<5x8xf32> to vector<5x8xbf16>
    %cst_194 = arith.constant dense<0.000000e+00> : vector<5x8xf32>
    %413 = tpu.matmul %411, %412, %cst_194 {dimension_numbers = #tpu.dot_dimension_numbers<[1], [0], [0], [1], [0, 0, 1, 1], [], []>} : vector<5x5xbf16>, vector<5x8xbf16>, vector<5x8xf32> -> vector<5x8xf32>
    %c0_195 = arith.constant 0 : index
    %c0_196 = arith.constant 0 : index
    %c0_197 = arith.constant 0 : index
    %414 = vector.load %arg23[%c0_195, %c0_196, %c0_197] : memref<4x10x8xf32, #tpu.memory_space<vmem>>, vector<1x5x8xf32>
    %415 = vector.shape_cast %414 : vector<1x5x8xf32> to vector<5x8xf32>
    %416 = vector.shape_cast %413 : vector<5x8xf32> to vector<1x5x8xf32>
    tpu.vector_store %arg23[%c0_195, %c0_196, %c0_197], %416 {strides = array<i32>} : memref<4x10x8xf32, #tpu.memory_space<vmem>>, vector<1x5x8xf32>,
    %417 = vector.extract_strided_slice %392 {offsets = [0, 8], sizes = [5, 8], strides = [1, 1]} : vector<10x96xf32> to vector<5x8xf32>
    %418 = vector.extract_strided_slice %392 {offsets = [0, 40], sizes = [5, 8], strides = [1, 1]} : vector<10x96xf32> to vector<5x8xf32>
    %419 = vector.extract_strided_slice %392 {offsets = [0, 72], sizes = [5, 8], strides = [1, 1]} : vector<10x96xf32> to vector<5x8xf32>
    %420 = arith.truncf %417 : vector<5x8xf32> to vector<5x8xbf16>
    %421 = arith.truncf %418 : vector<5x8xf32> to vector<5x8xbf16>
    %cst_198 = arith.constant dense<0.000000e+00> : vector<5x5xf32>
    %422 = tpu.matmul %420, %421, %cst_198 {dimension_numbers = #tpu.dot_dimension_numbers<[1], [1], [0], [0], [0, 0, 1, 0], [], []>} : vector<5x8xbf16>, vector<5x8xbf16>, vector<5x5xf32> -> vector<5x5xf32>
    %cst_199 = arith.constant 0.353553385 : f32
    %423 = vector.broadcast %cst_199 : f32 to vector<5x5xf32>
    %424 = arith.mulf %422, %423 : vector<5x5xf32>
    %cst_200 = arith.constant dense<0xFF800000> : vector<5xf32>
    %425 = vector.multi_reduction <maximumf>, %424, %cst_200 [1] : vector<5x5xf32> to vector<5xf32>
    %426 = vector.shape_cast %425 : vector<5xf32> to vector<5x1xf32>
    %427 = vector.broadcast %426 : vector<5x1xf32> to vector<5x5xf32>
    %428 = arith.subf %424, %427 : vector<5x5xf32>
    %429 = math.exp %428 : vector<5x5xf32>
    %cst_201 = arith.constant dense<0.000000e+00> : vector<5xf32>
    %430 = vector.multi_reduction <add>, %429, %cst_201 [1] : vector<5x5xf32> to vector<5xf32>
    %431 = vector.shape_cast %430 : vector<5xf32> to vector<5x1xf32>
    %432 = tpu.reciprocal %431 {approx = true} : vector<5x1xf32> -> vector<5x1xf32>
    %433 = vector.broadcast %432 : vector<5x1xf32> to vector<5x5xf32>
    %434 = arith.mulf %429, %433 : vector<5x5xf32>
    %435 = arith.truncf %434 : vector<5x5xf32> to vector<5x5xbf16>
    %436 = arith.truncf %419 : vector<5x8xf32> to vector<5x8xbf16>
    %cst_202 = arith.constant dense<0.000000e+00> : vector<5x8xf32>
    %437 = tpu.matmul %435, %436, %cst_202 {dimension_numbers = #tpu.dot_dimension_numbers<[1], [0], [0], [1], [0, 0, 1, 1], [], []>} : vector<5x5xbf16>, vector<5x8xbf16>, vector<5x8xf32> -> vector<5x8xf32>
    %c1_203 = arith.constant 1 : index
    %c0_204 = arith.constant 0 : index
    %c0_205 = arith.constant 0 : index
    %438 = vector.load %arg23[%c1_203, %c0_204, %c0_205] : memref<4x10x8xf32, #tpu.memory_space<vmem>>, vector<1x5x8xf32>
    %439 = vector.shape_cast %438 : vector<1x5x8xf32> to vector<5x8xf32>
    %440 = vector.shape_cast %437 : vector<5x8xf32> to vector<1x5x8xf32>
    tpu.vector_store %arg23[%c1_203, %c0_204, %c0_205], %440 {strides = array<i32>} : memref<4x10x8xf32, #tpu.memory_space<vmem>>, vector<1x5x8xf32>,
    %441 = vector.extract_strided_slice %392 {offsets = [0, 16], sizes = [5, 8], strides = [1, 1]} : vector<10x96xf32> to vector<5x8xf32>
    %442 = vector.extract_strided_slice %392 {offsets = [0, 48], sizes = [5, 8], strides = [1, 1]} : vector<10x96xf32> to vector<5x8xf32>
    %443 = vector.extract_strided_slice %392 {offsets = [0, 80], sizes = [5, 8], strides = [1, 1]} : vector<10x96xf32> to vector<5x8xf32>
    %444 = arith.truncf %441 : vector<5x8xf32> to vector<5x8xbf16>
    %445 = arith.truncf %442 : vector<5x8xf32> to vector<5x8xbf16>
    %cst_206 = arith.constant dense<0.000000e+00> : vector<5x5xf32>
    %446 = tpu.matmul %444, %445, %cst_206 {dimension_numbers = #tpu.dot_dimension_numbers<[1], [1], [0], [0], [0, 0, 1, 0], [], []>} : vector<5x8xbf16>, vector<5x8xbf16>, vector<5x5xf32> -> vector<5x5xf32>
    %cst_207 = arith.constant 0.353553385 : f32
    %447 = vector.broadcast %cst_207 : f32 to vector<5x5xf32>
    %448 = arith.mulf %446, %447 : vector<5x5xf32>
    %cst_208 = arith.constant dense<0xFF800000> : vector<5xf32>
    %449 = vector.multi_reduction <maximumf>, %448, %cst_208 [1] : vector<5x5xf32> to vector<5xf32>
    %450 = vector.shape_cast %449 : vector<5xf32> to vector<5x1xf32>
    %451 = vector.broadcast %450 : vector<5x1xf32> to vector<5x5xf32>
    %452 = arith.subf %448, %451 : vector<5x5xf32>
    %453 = math.exp %452 : vector<5x5xf32>
    %cst_209 = arith.constant dense<0.000000e+00> : vector<5xf32>
    %454 = vector.multi_reduction <add>, %453, %cst_209 [1] : vector<5x5xf32> to vector<5xf32>
    %455 = vector.shape_cast %454 : vector<5xf32> to vector<5x1xf32>
    %456 = tpu.reciprocal %455 {approx = true} : vector<5x1xf32> -> vector<5x1xf32>
    %457 = vector.broadcast %456 : vector<5x1xf32> to vector<5x5xf32>
    %458 = arith.mulf %453, %457 : vector<5x5xf32>
    %459 = arith.truncf %458 : vector<5x5xf32> to vector<5x5xbf16>
    %460 = arith.truncf %443 : vector<5x8xf32> to vector<5x8xbf16>
    %cst_210 = arith.constant dense<0.000000e+00> : vector<5x8xf32>
    %461 = tpu.matmul %459, %460, %cst_210 {dimension_numbers = #tpu.dot_dimension_numbers<[1], [0], [0], [1], [0, 0, 1, 1], [], []>} : vector<5x5xbf16>, vector<5x8xbf16>, vector<5x8xf32> -> vector<5x8xf32>
    %c2_211 = arith.constant 2 : index
    %c0_212 = arith.constant 0 : index
    %c0_213 = arith.constant 0 : index
    %462 = vector.load %arg23[%c2_211, %c0_212, %c0_213] : memref<4x10x8xf32, #tpu.memory_space<vmem>>, vector<1x5x8xf32>
    %463 = vector.shape_cast %462 : vector<1x5x8xf32> to vector<5x8xf32>
    %464 = vector.shape_cast %461 : vector<5x8xf32> to vector<1x5x8xf32>
    tpu.vector_store %arg23[%c2_211, %c0_212, %c0_213], %464 {strides = array<i32>} : memref<4x10x8xf32, #tpu.memory_space<vmem>>, vector<1x5x8xf32>,
    %465 = vector.extract_strided_slice %392 {offsets = [0, 24], sizes = [5, 8], strides = [1, 1]} : vector<10x96xf32> to vector<5x8xf32>
    %466 = vector.extract_strided_slice %392 {offsets = [0, 56], sizes = [5, 8], strides = [1, 1]} : vector<10x96xf32> to vector<5x8xf32>
    %467 = vector.extract_strided_slice %392 {offsets = [0, 88], sizes = [5, 8], strides = [1, 1]} : vector<10x96xf32> to vector<5x8xf32>
    %468 = arith.truncf %465 : vector<5x8xf32> to vector<5x8xbf16>
    %469 = arith.truncf %466 : vector<5x8xf32> to vector<5x8xbf16>
    %cst_214 = arith.constant dense<0.000000e+00> : vector<5x5xf32>
    %470 = tpu.matmul %468, %469, %cst_214 {dimension_numbers = #tpu.dot_dimension_numbers<[1], [1], [0], [0], [0, 0, 1, 0], [], []>} : vector<5x8xbf16>, vector<5x8xbf16>, vector<5x5xf32> -> vector<5x5xf32>
    %cst_215 = arith.constant 0.353553385 : f32
    %471 = vector.broadcast %cst_215 : f32 to vector<5x5xf32>
    %472 = arith.mulf %470, %471 : vector<5x5xf32>
    %cst_216 = arith.constant dense<0xFF800000> : vector<5xf32>
    %473 = vector.multi_reduction <maximumf>, %472, %cst_216 [1] : vector<5x5xf32> to vector<5xf32>
    %474 = vector.shape_cast %473 : vector<5xf32> to vector<5x1xf32>
    %475 = vector.broadcast %474 : vector<5x1xf32> to vector<5x5xf32>
    %476 = arith.subf %472, %475 : vector<5x5xf32>
    %477 = math.exp %476 : vector<5x5xf32>
    %cst_217 = arith.constant dense<0.000000e+00> : vector<5xf32>
    %478 = vector.multi_reduction <add>, %477, %cst_217 [1] : vector<5x5xf32> to vector<5xf32>
    %479 = vector.shape_cast %478 : vector<5xf32> to vector<5x1xf32>
    %480 = tpu.reciprocal %479 {approx = true} : vector<5x1xf32> -> vector<5x1xf32>
    %481 = vector.broadcast %480 : vector<5x1xf32> to vector<5x5xf32>
    %482 = arith.mulf %477, %481 : vector<5x5xf32>
    %483 = arith.truncf %482 : vector<5x5xf32> to vector<5x5xbf16>
    %484 = arith.truncf %467 : vector<5x8xf32> to vector<5x8xbf16>
    %cst_218 = arith.constant dense<0.000000e+00> : vector<5x8xf32>
    %485 = tpu.matmul %483, %484, %cst_218 {dimension_numbers = #tpu.dot_dimension_numbers<[1], [0], [0], [1], [0, 0, 1, 1], [], []>} : vector<5x5xbf16>, vector<5x8xbf16>, vector<5x8xf32> -> vector<5x8xf32>
    %c3_219 = arith.constant 3 : index
    %c0_220 = arith.constant 0 : index
    %c0_221 = arith.constant 0 : index
    %486 = vector.load %arg23[%c3_219, %c0_220, %c0_221] : memref<4x10x8xf32, #tpu.memory_space<vmem>>, vector<1x5x8xf32>
    %487 = vector.shape_cast %486 : vector<1x5x8xf32> to vector<5x8xf32>
    %488 = vector.shape_cast %485 : vector<5x8xf32> to vector<1x5x8xf32>
    tpu.vector_store %arg23[%c3_219, %c0_220, %c0_221], %488 {strides = array<i32>} : memref<4x10x8xf32, #tpu.memory_space<vmem>>, vector<1x5x8xf32>,
    %489 = vector.extract_strided_slice %392 {offsets = [5, 0], sizes = [5, 8], strides = [1, 1]} : vector<10x96xf32> to vector<5x8xf32>
    %490 = vector.extract_strided_slice %392 {offsets = [5, 32], sizes = [5, 8], strides = [1, 1]} : vector<10x96xf32> to vector<5x8xf32>
    %491 = vector.extract_strided_slice %392 {offsets = [5, 64], sizes = [5, 8], strides = [1, 1]} : vector<10x96xf32> to vector<5x8xf32>
    %492 = arith.truncf %489 : vector<5x8xf32> to vector<5x8xbf16>
    %493 = arith.truncf %490 : vector<5x8xf32> to vector<5x8xbf16>
    %cst_222 = arith.constant dense<0.000000e+00> : vector<5x5xf32>
    %494 = tpu.matmul %492, %493, %cst_222 {dimension_numbers = #tpu.dot_dimension_numbers<[1], [1], [0], [0], [0, 0, 1, 0], [], []>} : vector<5x8xbf16>, vector<5x8xbf16>, vector<5x5xf32> -> vector<5x5xf32>
    %cst_223 = arith.constant 0.353553385 : f32
    %495 = vector.broadcast %cst_223 : f32 to vector<5x5xf32>
    %496 = arith.mulf %494, %495 : vector<5x5xf32>
    %cst_224 = arith.constant dense<0xFF800000> : vector<5xf32>
    %497 = vector.multi_reduction <maximumf>, %496, %cst_224 [1] : vector<5x5xf32> to vector<5xf32>
    %498 = vector.shape_cast %497 : vector<5xf32> to vector<5x1xf32>
    %499 = vector.broadcast %498 : vector<5x1xf32> to vector<5x5xf32>
    %500 = arith.subf %496, %499 : vector<5x5xf32>
    %501 = math.exp %500 : vector<5x5xf32>
    %cst_225 = arith.constant dense<0.000000e+00> : vector<5xf32>
    %502 = vector.multi_reduction <add>, %501, %cst_225 [1] : vector<5x5xf32> to vector<5xf32>
    %503 = vector.shape_cast %502 : vector<5xf32> to vector<5x1xf32>
    %504 = tpu.reciprocal %503 {approx = true} : vector<5x1xf32> -> vector<5x1xf32>
    %505 = vector.broadcast %504 : vector<5x1xf32> to vector<5x5xf32>
    %506 = arith.mulf %501, %505 : vector<5x5xf32>
    %507 = arith.truncf %506 : vector<5x5xf32> to vector<5x5xbf16>
    %508 = arith.truncf %491 : vector<5x8xf32> to vector<5x8xbf16>
    %cst_226 = arith.constant dense<0.000000e+00> : vector<5x8xf32>
    %509 = tpu.matmul %507, %508, %cst_226 {dimension_numbers = #tpu.dot_dimension_numbers<[1], [0], [0], [1], [0, 0, 1, 1], [], []>} : vector<5x5xbf16>, vector<5x8xbf16>, vector<5x8xf32> -> vector<5x8xf32>
    %c0_227 = arith.constant 0 : index
    %c5_228 = arith.constant 5 : index
    %c0_229 = arith.constant 0 : index
    %510 = vector.load %arg23[%c0_227, %c5_228, %c0_229] : memref<4x10x8xf32, #tpu.memory_space<vmem>>, vector<1x5x8xf32>
    %511 = vector.shape_cast %510 : vector<1x5x8xf32> to vector<5x8xf32>
    %512 = vector.shape_cast %509 : vector<5x8xf32> to vector<1x5x8xf32>
    tpu.vector_store %arg23[%c0_227, %c5_228, %c0_229], %512 {strides = array<i32>} : memref<4x10x8xf32, #tpu.memory_space<vmem>>, vector<1x5x8xf32>,
    %513 = vector.extract_strided_slice %392 {offsets = [5, 8], sizes = [5, 8], strides = [1, 1]} : vector<10x96xf32> to vector<5x8xf32>
    %514 = vector.extract_strided_slice %392 {offsets = [5, 40], sizes = [5, 8], strides = [1, 1]} : vector<10x96xf32> to vector<5x8xf32>
    %515 = vector.extract_strided_slice %392 {offsets = [5, 72], sizes = [5, 8], strides = [1, 1]} : vector<10x96xf32> to vector<5x8xf32>
    %516 = arith.truncf %513 : vector<5x8xf32> to vector<5x8xbf16>
    %517 = arith.truncf %514 : vector<5x8xf32> to vector<5x8xbf16>
    %cst_230 = arith.constant dense<0.000000e+00> : vector<5x5xf32>
    %518 = tpu.matmul %516, %517, %cst_230 {dimension_numbers = #tpu.dot_dimension_numbers<[1], [1], [0], [0], [0, 0, 1, 0], [], []>} : vector<5x8xbf16>, vector<5x8xbf16>, vector<5x5xf32> -> vector<5x5xf32>
    %cst_231 = arith.constant 0.353553385 : f32
    %519 = vector.broadcast %cst_231 : f32 to vector<5x5xf32>
    %520 = arith.mulf %518, %519 : vector<5x5xf32>
    %cst_232 = arith.constant dense<0xFF800000> : vector<5xf32>
    %521 = vector.multi_reduction <maximumf>, %520, %cst_232 [1] : vector<5x5xf32> to vector<5xf32>
    %522 = vector.shape_cast %521 : vector<5xf32> to vector<5x1xf32>
    %523 = vector.broadcast %522 : vector<5x1xf32> to vector<5x5xf32>
    %524 = arith.subf %520, %523 : vector<5x5xf32>
    %525 = math.exp %524 : vector<5x5xf32>
    %cst_233 = arith.constant dense<0.000000e+00> : vector<5xf32>
    %526 = vector.multi_reduction <add>, %525, %cst_233 [1] : vector<5x5xf32> to vector<5xf32>
    %527 = vector.shape_cast %526 : vector<5xf32> to vector<5x1xf32>
    %528 = tpu.reciprocal %527 {approx = true} : vector<5x1xf32> -> vector<5x1xf32>
    %529 = vector.broadcast %528 : vector<5x1xf32> to vector<5x5xf32>
    %530 = arith.mulf %525, %529 : vector<5x5xf32>
    %531 = arith.truncf %530 : vector<5x5xf32> to vector<5x5xbf16>
    %532 = arith.truncf %515 : vector<5x8xf32> to vector<5x8xbf16>
    %cst_234 = arith.constant dense<0.000000e+00> : vector<5x8xf32>
    %533 = tpu.matmul %531, %532, %cst_234 {dimension_numbers = #tpu.dot_dimension_numbers<[1], [0], [0], [1], [0, 0, 1, 1], [], []>} : vector<5x5xbf16>, vector<5x8xbf16>, vector<5x8xf32> -> vector<5x8xf32>
    %c1_235 = arith.constant 1 : index
    %c5_236 = arith.constant 5 : index
    %c0_237 = arith.constant 0 : index
    %534 = vector.load %arg23[%c1_235, %c5_236, %c0_237] : memref<4x10x8xf32, #tpu.memory_space<vmem>>, vector<1x5x8xf32>
    %535 = vector.shape_cast %534 : vector<1x5x8xf32> to vector<5x8xf32>
    %536 = vector.shape_cast %533 : vector<5x8xf32> to vector<1x5x8xf32>
    tpu.vector_store %arg23[%c1_235, %c5_236, %c0_237], %536 {strides = array<i32>} : memref<4x10x8xf32, #tpu.memory_space<vmem>>, vector<1x5x8xf32>,
    %537 = vector.extract_strided_slice %392 {offsets = [5, 16], sizes = [5, 8], strides = [1, 1]} : vector<10x96xf32> to vector<5x8xf32>
    %538 = vector.extract_strided_slice %392 {offsets = [5, 48], sizes = [5, 8], strides = [1, 1]} : vector<10x96xf32> to vector<5x8xf32>
    %539 = vector.extract_strided_slice %392 {offsets = [5, 80], sizes = [5, 8], strides = [1, 1]} : vector<10x96xf32> to vector<5x8xf32>
    %540 = arith.truncf %537 : vector<5x8xf32> to vector<5x8xbf16>
    %541 = arith.truncf %538 : vector<5x8xf32> to vector<5x8xbf16>
    %cst_238 = arith.constant dense<0.000000e+00> : vector<5x5xf32>
    %542 = tpu.matmul %540, %541, %cst_238 {dimension_numbers = #tpu.dot_dimension_numbers<[1], [1], [0], [0], [0, 0, 1, 0], [], []>} : vector<5x8xbf16>, vector<5x8xbf16>, vector<5x5xf32> -> vector<5x5xf32>
    %cst_239 = arith.constant 0.353553385 : f32
    %543 = vector.broadcast %cst_239 : f32 to vector<5x5xf32>
    %544 = arith.mulf %542, %543 : vector<5x5xf32>
    %cst_240 = arith.constant dense<0xFF800000> : vector<5xf32>
    %545 = vector.multi_reduction <maximumf>, %544, %cst_240 [1] : vector<5x5xf32> to vector<5xf32>
    %546 = vector.shape_cast %545 : vector<5xf32> to vector<5x1xf32>
    %547 = vector.broadcast %546 : vector<5x1xf32> to vector<5x5xf32>
    %548 = arith.subf %544, %547 : vector<5x5xf32>
    %549 = math.exp %548 : vector<5x5xf32>
    %cst_241 = arith.constant dense<0.000000e+00> : vector<5xf32>
    %550 = vector.multi_reduction <add>, %549, %cst_241 [1] : vector<5x5xf32> to vector<5xf32>
    %551 = vector.shape_cast %550 : vector<5xf32> to vector<5x1xf32>
    %552 = tpu.reciprocal %551 {approx = true} : vector<5x1xf32> -> vector<5x1xf32>
    %553 = vector.broadcast %552 : vector<5x1xf32> to vector<5x5xf32>
    %554 = arith.mulf %549, %553 : vector<5x5xf32>
    %555 = arith.truncf %554 : vector<5x5xf32> to vector<5x5xbf16>
    %556 = arith.truncf %539 : vector<5x8xf32> to vector<5x8xbf16>
    %cst_242 = arith.constant dense<0.000000e+00> : vector<5x8xf32>
    %557 = tpu.matmul %555, %556, %cst_242 {dimension_numbers = #tpu.dot_dimension_numbers<[1], [0], [0], [1], [0, 0, 1, 1], [], []>} : vector<5x5xbf16>, vector<5x8xbf16>, vector<5x8xf32> -> vector<5x8xf32>
    %c2_243 = arith.constant 2 : index
    %c5_244 = arith.constant 5 : index
    %c0_245 = arith.constant 0 : index
    %558 = vector.load %arg23[%c2_243, %c5_244, %c0_245] : memref<4x10x8xf32, #tpu.memory_space<vmem>>, vector<1x5x8xf32>
    %559 = vector.shape_cast %558 : vector<1x5x8xf32> to vector<5x8xf32>
    %560 = vector.shape_cast %557 : vector<5x8xf32> to vector<1x5x8xf32>
    tpu.vector_store %arg23[%c2_243, %c5_244, %c0_245], %560 {strides = array<i32>} : memref<4x10x8xf32, #tpu.memory_space<vmem>>, vector<1x5x8xf32>,
    %561 = vector.extract_strided_slice %392 {offsets = [5, 24], sizes = [5, 8], strides = [1, 1]} : vector<10x96xf32> to vector<5x8xf32>
    %562 = vector.extract_strided_slice %392 {offsets = [5, 56], sizes = [5, 8], strides = [1, 1]} : vector<10x96xf32> to vector<5x8xf32>
    %563 = vector.extract_strided_slice %392 {offsets = [5, 88], sizes = [5, 8], strides = [1, 1]} : vector<10x96xf32> to vector<5x8xf32>
    %564 = arith.truncf %561 : vector<5x8xf32> to vector<5x8xbf16>
    %565 = arith.truncf %562 : vector<5x8xf32> to vector<5x8xbf16>
    %cst_246 = arith.constant dense<0.000000e+00> : vector<5x5xf32>
    %566 = tpu.matmul %564, %565, %cst_246 {dimension_numbers = #tpu.dot_dimension_numbers<[1], [1], [0], [0], [0, 0, 1, 0], [], []>} : vector<5x8xbf16>, vector<5x8xbf16>, vector<5x5xf32> -> vector<5x5xf32>
    %cst_247 = arith.constant 0.353553385 : f32
    %567 = vector.broadcast %cst_247 : f32 to vector<5x5xf32>
    %568 = arith.mulf %566, %567 : vector<5x5xf32>
    %cst_248 = arith.constant dense<0xFF800000> : vector<5xf32>
    %569 = vector.multi_reduction <maximumf>, %568, %cst_248 [1] : vector<5x5xf32> to vector<5xf32>
    %570 = vector.shape_cast %569 : vector<5xf32> to vector<5x1xf32>
    %571 = vector.broadcast %570 : vector<5x1xf32> to vector<5x5xf32>
    %572 = arith.subf %568, %571 : vector<5x5xf32>
    %573 = math.exp %572 : vector<5x5xf32>
    %cst_249 = arith.constant dense<0.000000e+00> : vector<5xf32>
    %574 = vector.multi_reduction <add>, %573, %cst_249 [1] : vector<5x5xf32> to vector<5xf32>
    %575 = vector.shape_cast %574 : vector<5xf32> to vector<5x1xf32>
    %576 = tpu.reciprocal %575 {approx = true} : vector<5x1xf32> -> vector<5x1xf32>
    %577 = vector.broadcast %576 : vector<5x1xf32> to vector<5x5xf32>
    %578 = arith.mulf %573, %577 : vector<5x5xf32>
    %579 = arith.truncf %578 : vector<5x5xf32> to vector<5x5xbf16>
    %580 = arith.truncf %563 : vector<5x8xf32> to vector<5x8xbf16>
    %cst_250 = arith.constant dense<0.000000e+00> : vector<5x8xf32>
    %581 = tpu.matmul %579, %580, %cst_250 {dimension_numbers = #tpu.dot_dimension_numbers<[1], [0], [0], [1], [0, 0, 1, 1], [], []>} : vector<5x5xbf16>, vector<5x8xbf16>, vector<5x8xf32> -> vector<5x8xf32>
    %c3_251 = arith.constant 3 : index
    %c5_252 = arith.constant 5 : index
    %c0_253 = arith.constant 0 : index
    %582 = vector.load %arg23[%c3_251, %c5_252, %c0_253] : memref<4x10x8xf32, #tpu.memory_space<vmem>>, vector<1x5x8xf32>
    %583 = vector.shape_cast %582 : vector<1x5x8xf32> to vector<5x8xf32>
    %584 = vector.shape_cast %581 : vector<5x8xf32> to vector<1x5x8xf32>
    tpu.vector_store %arg23[%c3_251, %c5_252, %c0_253], %584 {strides = array<i32>} : memref<4x10x8xf32, #tpu.memory_space<vmem>>, vector<1x5x8xf32>,
    %c1_254 = arith.constant 1 : index
    %c0_255 = arith.constant 0 : index
    %c0_256 = arith.constant 0 : index
    %585 = vector.load %arg10[%c1_254, %c0_255, %c0_256] : memref<2x1x32xf32, #tpu.memory_space<vmem>>, vector<1x1x32xf32>
    %586 = vector.shape_cast %585 : vector<1x1x32xf32> to vector<1x32xf32>
    %c0_257 = arith.constant 0 : index
    %c0_258 = arith.constant 0 : index
    %c0_259 = arith.constant 0 : index
    %587 = vector.load %arg23[%c0_257, %c0_258, %c0_259] : memref<4x10x8xf32, #tpu.memory_space<vmem>>, vector<1x10x8xf32>
    %588 = vector.shape_cast %587 : vector<1x10x8xf32> to vector<10x8xf32>
    %c1_260 = arith.constant 1 : index
    %c0_261 = arith.constant 0 : index
    %c0_262 = arith.constant 0 : index
    %589 = vector.load %arg9[%c1_260, %c0_261, %c0_262] : memref<2x32x32xbf16, #tpu.memory_space<vmem>>, vector<1x8x32xbf16>
    %590 = vector.shape_cast %589 : vector<1x8x32xbf16> to vector<8x32xbf16>
    %591 = arith.truncf %588 : vector<10x8xf32> to vector<10x8xbf16>
    %cst_263 = arith.constant dense<0.000000e+00> : vector<10x32xf32>
    %592 = tpu.matmul %591, %590, %cst_263 {dimension_numbers = #tpu.dot_dimension_numbers<[1], [0], [0], [1], [0, 0, 1, 1], [], []>} : vector<10x8xbf16>, vector<8x32xbf16>, vector<10x32xf32> -> vector<10x32xf32>
    %593 = vector.broadcast %586 : vector<1x32xf32> to vector<10x32xf32>
    %594 = arith.addf %593, %592 : vector<10x32xf32>
    %c1_264 = arith.constant 1 : index
    %c0_265 = arith.constant 0 : index
    %c0_266 = arith.constant 0 : index
    %595 = vector.load %arg23[%c1_264, %c0_265, %c0_266] : memref<4x10x8xf32, #tpu.memory_space<vmem>>, vector<1x10x8xf32>
    %596 = vector.shape_cast %595 : vector<1x10x8xf32> to vector<10x8xf32>
    %c1_267 = arith.constant 1 : index
    %c8_268 = arith.constant 8 : index
    %c0_269 = arith.constant 0 : index
    %597 = vector.load %arg9[%c1_267, %c8_268, %c0_269] : memref<2x32x32xbf16, #tpu.memory_space<vmem>>, vector<1x8x32xbf16>
    %598 = vector.shape_cast %597 : vector<1x8x32xbf16> to vector<8x32xbf16>
    %599 = arith.truncf %596 : vector<10x8xf32> to vector<10x8xbf16>
    %cst_270 = arith.constant dense<0.000000e+00> : vector<10x32xf32>
    %600 = tpu.matmul %599, %598, %cst_270 {dimension_numbers = #tpu.dot_dimension_numbers<[1], [0], [0], [1], [0, 0, 1, 1], [], []>} : vector<10x8xbf16>, vector<8x32xbf16>, vector<10x32xf32> -> vector<10x32xf32>
    %601 = arith.addf %594, %600 : vector<10x32xf32>
    %c2_271 = arith.constant 2 : index
    %c0_272 = arith.constant 0 : index
    %c0_273 = arith.constant 0 : index
    %602 = vector.load %arg23[%c2_271, %c0_272, %c0_273] : memref<4x10x8xf32, #tpu.memory_space<vmem>>, vector<1x10x8xf32>
    %603 = vector.shape_cast %602 : vector<1x10x8xf32> to vector<10x8xf32>
    %c1_274 = arith.constant 1 : index
    %c16_275 = arith.constant 16 : index
    %c0_276 = arith.constant 0 : index
    %604 = vector.load %arg9[%c1_274, %c16_275, %c0_276] : memref<2x32x32xbf16, #tpu.memory_space<vmem>>, vector<1x8x32xbf16>
    %605 = vector.shape_cast %604 : vector<1x8x32xbf16> to vector<8x32xbf16>
    %606 = arith.truncf %603 : vector<10x8xf32> to vector<10x8xbf16>
    %cst_277 = arith.constant dense<0.000000e+00> : vector<10x32xf32>
    %607 = tpu.matmul %606, %605, %cst_277 {dimension_numbers = #tpu.dot_dimension_numbers<[1], [0], [0], [1], [0, 0, 1, 1], [], []>} : vector<10x8xbf16>, vector<8x32xbf16>, vector<10x32xf32> -> vector<10x32xf32>
    %608 = arith.addf %601, %607 : vector<10x32xf32>
    %c3_278 = arith.constant 3 : index
    %c0_279 = arith.constant 0 : index
    %c0_280 = arith.constant 0 : index
    %609 = vector.load %arg23[%c3_278, %c0_279, %c0_280] : memref<4x10x8xf32, #tpu.memory_space<vmem>>, vector<1x10x8xf32>
    %610 = vector.shape_cast %609 : vector<1x10x8xf32> to vector<10x8xf32>
    %c1_281 = arith.constant 1 : index
    %c24_282 = arith.constant 24 : index
    %c0_283 = arith.constant 0 : index
    %611 = vector.load %arg9[%c1_281, %c24_282, %c0_283] : memref<2x32x32xbf16, #tpu.memory_space<vmem>>, vector<1x8x32xbf16>
    %612 = vector.shape_cast %611 : vector<1x8x32xbf16> to vector<8x32xbf16>
    %613 = arith.truncf %610 : vector<10x8xf32> to vector<10x8xbf16>
    %cst_284 = arith.constant dense<0.000000e+00> : vector<10x32xf32>
    %614 = tpu.matmul %613, %612, %cst_284 {dimension_numbers = #tpu.dot_dimension_numbers<[1], [0], [0], [1], [0, 0, 1, 1], [], []>} : vector<10x8xbf16>, vector<8x32xbf16>, vector<10x32xf32> -> vector<10x32xf32>
    %615 = arith.addf %608, %614 : vector<10x32xf32>
    %616 = arith.addf %360, %615 : vector<10x32xf32>
    %c1_285 = arith.constant 1 : index
    %c0_286 = arith.constant 0 : index
    %c0_287 = arith.constant 0 : index
    %617 = vector.load %arg11[%c1_285, %c0_286, %c0_287] : memref<2x1x32xf32, #tpu.memory_space<vmem>>, vector<1x1x32xf32>
    %618 = vector.shape_cast %617 : vector<1x1x32xf32> to vector<1x32xf32>
    %c1_288 = arith.constant 1 : index
    %c0_289 = arith.constant 0 : index
    %c0_290 = arith.constant 0 : index
    %619 = vector.load %arg12[%c1_288, %c0_289, %c0_290] : memref<2x1x32xf32, #tpu.memory_space<vmem>>, vector<1x1x32xf32>
    %620 = vector.shape_cast %619 : vector<1x1x32xf32> to vector<1x32xf32>
    %cst_291 = arith.constant dense<0.000000e+00> : vector<10xf32>
    %621 = vector.multi_reduction <add>, %616, %cst_291 [1] : vector<10x32xf32> to vector<10xf32>
    %622 = vector.shape_cast %621 : vector<10xf32> to vector<10x1xf32>
    %cst_292 = arith.constant 3.200000e+01 : f32
    %623 = vector.broadcast %cst_292 : f32 to vector<10x1xf32>
    %624 = arith.divf %622, %623 : vector<10x1xf32>
    %625 = vector.broadcast %624 : vector<10x1xf32> to vector<10x32xf32>
    %626 = arith.subf %616, %625 : vector<10x32xf32>
    %627 = arith.mulf %626, %626 : vector<10x32xf32>
    %cst_293 = arith.constant dense<0.000000e+00> : vector<10xf32>
    %628 = vector.multi_reduction <add>, %627, %cst_293 [1] : vector<10x32xf32> to vector<10xf32>
    %629 = vector.shape_cast %628 : vector<10xf32> to vector<10x1xf32>
    %cst_294 = arith.constant 3.200000e+01 : f32
    %630 = vector.broadcast %cst_294 : f32 to vector<10x1xf32>
    %631 = arith.divf %629, %630 : vector<10x1xf32>
    %cst_295 = arith.constant 9.99999997E-7 : f32
    %632 = vector.broadcast %cst_295 : f32 to vector<10x1xf32>
    %633 = arith.addf %631, %632 : vector<10x1xf32>
    %634 = math.rsqrt %633 : vector<10x1xf32>
    %635 = vector.broadcast %634 : vector<10x1xf32> to vector<10x32xf32>
    %636 = arith.mulf %626, %635 : vector<10x32xf32>
    %637 = vector.broadcast %618 : vector<1x32xf32> to vector<10x32xf32>
    %638 = arith.mulf %636, %637 : vector<10x32xf32>
    %639 = vector.broadcast %620 : vector<1x32xf32> to vector<10x32xf32>
    %640 = arith.addf %638, %639 : vector<10x32xf32>
    %c1_296 = arith.constant 1 : index
    %c0_297 = arith.constant 0 : index
    %c0_298 = arith.constant 0 : index
    %641 = vector.load %arg13[%c1_296, %c0_297, %c0_298] : memref<2x32x128xbf16, #tpu.memory_space<vmem>>, vector<1x32x128xbf16>
    %642 = vector.shape_cast %641 : vector<1x32x128xbf16> to vector<32x128xbf16>
    %643 = arith.truncf %640 : vector<10x32xf32> to vector<10x32xbf16>
    %cst_299 = arith.constant dense<0.000000e+00> : vector<10x128xf32>
    %644 = tpu.matmul %643, %642, %cst_299 {dimension_numbers = #tpu.dot_dimension_numbers<[1], [0], [0], [1], [0, 0, 1, 1], [], []>} : vector<10x32xbf16>, vector<32x128xbf16>, vector<10x128xf32> -> vector<10x128xf32>
    %c1_300 = arith.constant 1 : index
    %c0_301 = arith.constant 0 : index
    %c0_302 = arith.constant 0 : index
    %645 = vector.load %arg14[%c1_300, %c0_301, %c0_302] : memref<2x1x128xf32, #tpu.memory_space<vmem>>, vector<1x1x128xf32>
    %646 = vector.shape_cast %645 : vector<1x1x128xf32> to vector<1x128xf32>
    %647 = vector.broadcast %646 : vector<1x128xf32> to vector<10x128xf32>
    %648 = arith.addf %644, %647 : vector<10x128xf32>
    %cst_303 = arith.constant 0.707106769 : f32
    %649 = vector.broadcast %cst_303 : f32 to vector<10x128xf32>
    %650 = arith.mulf %648, %649 : vector<10x128xf32>
    %651 = math.absf %650 : vector<10x128xf32>
    %cst_304 = arith.constant 0.327591091 : f32
    %652 = vector.broadcast %cst_304 : f32 to vector<10x128xf32>
    %653 = arith.mulf %652, %651 : vector<10x128xf32>
    %cst_305 = arith.constant 1.000000e+00 : f32
    %654 = vector.broadcast %cst_305 : f32 to vector<10x128xf32>
    %655 = arith.addf %654, %653 : vector<10x128xf32>
    %cst_306 = arith.constant 1.000000e+00 : f32
    %656 = vector.broadcast %cst_306 : f32 to vector<10x128xf32>
    %657 = arith.divf %656, %655 : vector<10x128xf32>
    %cst_307 = arith.constant 1.06140542 : f32
    %658 = vector.broadcast %cst_307 : f32 to vector<10x128xf32>
    %659 = arith.mulf %658, %657 : vector<10x128xf32>
    %cst_308 = arith.constant 1.45315206 : f32
    %660 = vector.broadcast %cst_308 : f32 to vector<10x128xf32>
    %661 = arith.subf %659, %660 : vector<10x128xf32>
    %662 = arith.mulf %661, %657 : vector<10x128xf32>
    %cst_309 = arith.constant 1.42141378 : f32
    %663 = vector.broadcast %cst_309 : f32 to vector<10x128xf32>
    %664 = arith.addf %662, %663 : vector<10x128xf32>
    %665 = arith.mulf %664, %657 : vector<10x128xf32>
    %cst_310 = arith.constant 0.284496725 : f32
    %666 = vector.broadcast %cst_310 : f32 to vector<10x128xf32>
    %667 = arith.subf %665, %666 : vector<10x128xf32>
    %668 = arith.mulf %667, %657 : vector<10x128xf32>
    %cst_311 = arith.constant 0.254829586 : f32
    %669 = vector.broadcast %cst_311 : f32 to vector<10x128xf32>
    %670 = arith.addf %668, %669 : vector<10x128xf32>
    %671 = arith.mulf %670, %657 : vector<10x128xf32>
    %cst_312 = arith.constant 0.000000e+00 : f32
    %672 = vector.broadcast %cst_312 : f32 to vector<10x128xf32>
    %673 = arith.subf %672, %651 : vector<10x128xf32>
    %674 = arith.mulf %673, %651 : vector<10x128xf32>
    %675 = math.exp %674 : vector<10x128xf32>
    %676 = arith.mulf %671, %675 : vector<10x128xf32>
    %cst_313 = arith.constant 1.000000e+00 : f32
    %677 = vector.broadcast %cst_313 : f32 to vector<10x128xf32>
    %678 = arith.subf %677, %676 : vector<10x128xf32>
    %cst_314 = arith.constant 0.000000e+00 : f32
    %679 = vector.broadcast %cst_314 : f32 to vector<10x128xf32>
    %680 = arith.cmpf oge, %650, %679 : vector<10x128xf32>
    %cst_315 = arith.constant 0.000000e+00 : f32
    %681 = vector.broadcast %cst_315 : f32 to vector<10x128xf32>
    %682 = arith.subf %681, %678 : vector<10x128xf32>
    %683 = arith.select %680, %678, %682 : vector<10x128xi1>, vector<10x128xf32>
    %cst_316 = arith.constant 5.000000e-01 : f32
    %684 = vector.broadcast %cst_316 : f32 to vector<10x128xf32>
    %685 = arith.mulf %684, %648 : vector<10x128xf32>
    %cst_317 = arith.constant 1.000000e+00 : f32
    %686 = vector.broadcast %cst_317 : f32 to vector<10x128xf32>
    %687 = arith.addf %686, %683 : vector<10x128xf32>
    %688 = arith.mulf %685, %687 : vector<10x128xf32>
    %c1_318 = arith.constant 1 : index
    %c0_319 = arith.constant 0 : index
    %c0_320 = arith.constant 0 : index
    %689 = vector.load %arg15[%c1_318, %c0_319, %c0_320] : memref<2x128x32xbf16, #tpu.memory_space<vmem>>, vector<1x128x32xbf16>
    %690 = vector.shape_cast %689 : vector<1x128x32xbf16> to vector<128x32xbf16>
    %691 = arith.truncf %688 : vector<10x128xf32> to vector<10x128xbf16>
    %cst_321 = arith.constant dense<0.000000e+00> : vector<10x32xf32>
    %692 = tpu.matmul %691, %690, %cst_321 {dimension_numbers = #tpu.dot_dimension_numbers<[1], [0], [0], [1], [0, 0, 1, 1], [], []>} : vector<10x128xbf16>, vector<128x32xbf16>, vector<10x32xf32> -> vector<10x32xf32>
    %693 = arith.addf %616, %692 : vector<10x32xf32>
    %c1_322 = arith.constant 1 : index
    %c0_323 = arith.constant 0 : index
    %c0_324 = arith.constant 0 : index
    %694 = vector.load %arg16[%c1_322, %c0_323, %c0_324] : memref<2x1x32xf32, #tpu.memory_space<vmem>>, vector<1x1x32xf32>
    %695 = vector.shape_cast %694 : vector<1x1x32xf32> to vector<1x32xf32>
    %696 = vector.broadcast %695 : vector<1x32xf32> to vector<10x32xf32>
    %697 = arith.addf %693, %696 : vector<10x32xf32>
    %c0_325 = arith.constant 0 : index
    %c0_326 = arith.constant 0 : index
    %698 = vector.load %arg17[%c0_325, %c0_326] : memref<1x32xf32, #tpu.memory_space<vmem>>, vector<1x32xf32>
    %c0_327 = arith.constant 0 : index
    %c0_328 = arith.constant 0 : index
    %699 = vector.load %arg18[%c0_327, %c0_328] : memref<1x32xf32, #tpu.memory_space<vmem>>, vector<1x32xf32>
    %cst_329 = arith.constant dense<0.000000e+00> : vector<10xf32>
    %700 = vector.multi_reduction <add>, %697, %cst_329 [1] : vector<10x32xf32> to vector<10xf32>
    %701 = vector.shape_cast %700 : vector<10xf32> to vector<10x1xf32>
    %cst_330 = arith.constant 3.200000e+01 : f32
    %702 = vector.broadcast %cst_330 : f32 to vector<10x1xf32>
    %703 = arith.divf %701, %702 : vector<10x1xf32>
    %704 = vector.broadcast %703 : vector<10x1xf32> to vector<10x32xf32>
    %705 = arith.subf %697, %704 : vector<10x32xf32>
    %706 = arith.mulf %705, %705 : vector<10x32xf32>
    %cst_331 = arith.constant dense<0.000000e+00> : vector<10xf32>
    %707 = vector.multi_reduction <add>, %706, %cst_331 [1] : vector<10x32xf32> to vector<10xf32>
    %708 = vector.shape_cast %707 : vector<10xf32> to vector<10x1xf32>
    %cst_332 = arith.constant 3.200000e+01 : f32
    %709 = vector.broadcast %cst_332 : f32 to vector<10x1xf32>
    %710 = arith.divf %708, %709 : vector<10x1xf32>
    %cst_333 = arith.constant 9.99999997E-7 : f32
    %711 = vector.broadcast %cst_333 : f32 to vector<10x1xf32>
    %712 = arith.addf %710, %711 : vector<10x1xf32>
    %713 = math.rsqrt %712 : vector<10x1xf32>
    %714 = vector.broadcast %713 : vector<10x1xf32> to vector<10x32xf32>
    %715 = arith.mulf %705, %714 : vector<10x32xf32>
    %716 = vector.broadcast %698 : vector<1x32xf32> to vector<10x32xf32>
    %717 = arith.mulf %715, %716 : vector<10x32xf32>
    %718 = vector.broadcast %699 : vector<1x32xf32> to vector<10x32xf32>
    %719 = arith.addf %717, %718 : vector<10x32xf32>
    %720 = vector.extract_strided_slice %719 {offsets = [0, 0], sizes = [1, 32], strides = [1, 1]} : vector<10x32xf32> to vector<1x32xf32>
    %c0_334 = arith.constant 0 : index
    %c0_335 = arith.constant 0 : index
    %721 = vector.load %arg19[%c0_334, %c0_335] : memref<32x128xbf16, #tpu.memory_space<vmem>>, vector<32x128xbf16>
    %722 = arith.truncf %720 : vector<1x32xf32> to vector<1x32xbf16>
    %cst_336 = arith.constant dense<0.000000e+00> : vector<1x128xf32>
    %723 = tpu.matmul %722, %721, %cst_336 {dimension_numbers = #tpu.dot_dimension_numbers<[1], [0], [0], [1], [0, 0, 1, 1], [], []>} : vector<1x32xbf16>, vector<32x128xbf16>, vector<1x128xf32> -> vector<1x128xf32>
    %c0_337 = arith.constant 0 : index
    %c0_338 = arith.constant 0 : index
    %724 = vector.load %arg20[%c0_337, %c0_338] : memref<1x128xf32, #tpu.memory_space<vmem>>, vector<1x128xf32>
    %725 = arith.addf %723, %724 : vector<1x128xf32>
    %c0_339 = arith.constant 0 : index
    %c0_340 = arith.constant 0 : index
    %726 = vector.load %arg21[%c0_339, %c0_340] : memref<2x128xf32, #tpu.memory_space<vmem>>, vector<1x128xf32>
    tpu.vector_store %arg21[%c0_339, %c0_340], %725 {strides = array<i32>} : memref<2x128xf32, #tpu.memory_space<vmem>>, vector<1x128xf32>,
    %727 = vector.extract_strided_slice %719 {offsets = [5, 0], sizes = [1, 32], strides = [1, 1]} : vector<10x32xf32> to vector<1x32xf32>
    %c0_341 = arith.constant 0 : index
    %c0_342 = arith.constant 0 : index
    %728 = vector.load %arg19[%c0_341, %c0_342] : memref<32x128xbf16, #tpu.memory_space<vmem>>, vector<32x128xbf16>
    %729 = arith.truncf %727 : vector<1x32xf32> to vector<1x32xbf16>
    %cst_343 = arith.constant dense<0.000000e+00> : vector<1x128xf32>
    %730 = tpu.matmul %729, %728, %cst_343 {dimension_numbers = #tpu.dot_dimension_numbers<[1], [0], [0], [1], [0, 0, 1, 1], [], []>} : vector<1x32xbf16>, vector<32x128xbf16>, vector<1x128xf32> -> vector<1x128xf32>
    %c0_344 = arith.constant 0 : index
    %c0_345 = arith.constant 0 : index
    %731 = vector.load %arg20[%c0_344, %c0_345] : memref<1x128xf32, #tpu.memory_space<vmem>>, vector<1x128xf32>
    %732 = arith.addf %730, %731 : vector<1x128xf32>
    %c1_346 = arith.constant 1 : index
    %c0_347 = arith.constant 0 : index
    %733 = vector.load %arg21[%c1_346, %c0_347] : memref<2x128xf32, #tpu.memory_space<vmem>>, vector<1x128xf32>
    tpu.vector_store %arg21[%c1_346, %c0_347], %732 {strides = array<i32>} : memref<2x128xf32, #tpu.memory_space<vmem>>, vector<1x128xf32>,
    return
  }
}

</mosaic_0001>

<llo_original>
// kernel: vit_forward.1
$region0: #{vit_forward.1}
  #allocation0 [shape = 'u32[]', space=smem, size = 0x4, offset = 0x4, fixed_abs, tag = 'smem constant byte address 0x4 - core index']
  #allocation1 [shape = 'u32[144,128]{1,0:T(1,128)}', space=vmem, size = 0x12000, scoped, tag = 'internal scratch']
  #allocation2 [shape = 'f32[10,32]{1,0:T(8,128)}', space=vmem, size = 0x2000, scoped, tag = 'scratch operand']
  #allocation3 [shape = 'f32[4,10,8]{2,1,0:T(8,128)}', space=vmem, size = 0x8000, scoped, tag = 'scratch operand']
  %s0 = inlined_call_operand.vmem [shape: f32[8,768], index: 0, kind: input, shape index: {}]
  %s1 = inlined_call_operand.vmem [shape: bf16[768,32], index: 1, kind: input, shape index: {}]
  %s2 = inlined_call_operand.vmem [shape: f32[1,32], index: 2, kind: input, shape index: {}]
  %s3 = inlined_call_operand.vmem [shape: f32[1,32], index: 3, kind: input, shape index: {}]
  %s4 = inlined_call_operand.vmem [shape: f32[5,32], index: 4, kind: input, shape index: {}]
  %s5 = inlined_call_operand.vmem [shape: f32[2,1,32], index: 5, kind: input, shape index: {}]
  %s6 = inlined_call_operand.vmem [shape: f32[2,1,32], index: 6, kind: input, shape index: {}]
  %s7 = inlined_call_operand.vmem [shape: bf16[2,32,96], index: 7, kind: input, shape index: {}]
  %s8 = inlined_call_operand.vmem [shape: f32[2,1,96], index: 8, kind: input, shape index: {}]
  %s9 = inlined_call_operand.vmem [shape: bf16[2,32,32], index: 9, kind: input, shape index: {}]
  %s10 = inlined_call_operand.vmem [shape: f32[2,1,32], index: 10, kind: input, shape index: {}]
  %s11 = inlined_call_operand.vmem [shape: f32[2,1,32], index: 11, kind: input, shape index: {}]
  %s12 = inlined_call_operand.vmem [shape: f32[2,1,32], index: 12, kind: input, shape index: {}]
  %s13 = inlined_call_operand.vmem [shape: bf16[2,32,128], index: 13, kind: input, shape index: {}]
  %s14 = inlined_call_operand.vmem [shape: f32[2,1,128], index: 14, kind: input, shape index: {}]
  %s15 = inlined_call_operand.vmem [shape: bf16[2,128,32], index: 15, kind: input, shape index: {}]
  %s16 = inlined_call_operand.vmem [shape: f32[2,1,32], index: 16, kind: input, shape index: {}]
  %s17 = inlined_call_operand.vmem [shape: f32[1,32], index: 17, kind: input, shape index: {}]
  %s18 = inlined_call_operand.vmem [shape: f32[1,32], index: 18, kind: input, shape index: {}]
  %s19 = inlined_call_operand.vmem [shape: bf16[32,128], index: 19, kind: input, shape index: {}]
  %s20 = inlined_call_operand.vmem [shape: f32[1,128], index: 20, kind: input, shape index: {}]
  %s21 = inlined_call_operand.hbm [shape: f32[2,128], index: 21, kind: output, shape index: {}]
  %s22 = sld [smem:[#allocation0]]
  $region94: #{vit_forward.1} parent=0
    _
  %s24 = ssub.s32 1, %s22
  %s25 = scalar_select 0, %s24, %s22
  $region1: #{vit_forward.1} parent=0
    #allocation4 [shape = 'u8[1024]{0}', space=vmem, size = 0x400, scoped, tag = 'output window, operand 0, single buffered']
    #allocation5 [shape = 's32[1]{0}', space=sflag, size = 0x4, scoped, tag = 'scoped memory for vit_forward.1']
    %26 = vsyncpa [#allocation5], 0
    // Predicated region
    $region2: #{vit_forward.1} parent=1 // pred_check
      _
    $region3: #{vit_forward.1} parent=1 // pred_check_branch
      %28 = sbr.rel (0) target = $region5
    $region4: #{vit_forward.1} parent=1 // pred_region
      _
    $region5: #{vit_forward.1} parent=1 // pred_fallthru
      _
    // Predicated region
    $region6: #{vit_forward.1} parent=1 // pred_check
      _
    $region7: #{vit_forward.1} parent=1 // pred_check_branch
      %30 = sbr.rel (0) target = $region9
    $region8: #{vit_forward.1} parent=1 // pred_region
      _
    $region9: #{vit_forward.1} parent=1 // pred_fallthru
      _
    // Predicated region
    $region10: #{vit_forward.1} parent=1 // pred_check
      _
    $region11: #{vit_forward.1} parent=1 // pred_check_branch
      %32 = sbr.rel (0) target = $region13
    $region12: #{vit_forward.1} parent=1 // pred_region
      _
    $region13: #{vit_forward.1} parent=1 // pred_fallthru
      _
    // Predicated region
    $region14: #{vit_forward.1} parent=1 // pred_check
      _
    $region15: #{vit_forward.1} parent=1 // pred_check_branch
      %34 = sbr.rel (0) target = $region17
    $region16: #{vit_forward.1} parent=1 // pred_region
      _
    $region17: #{vit_forward.1} parent=1 // pred_fallthru
      _
    // Predicated region
    $region18: #{vit_forward.1} parent=1 // pred_check
      _
    $region19: #{vit_forward.1} parent=1 // pred_check_branch
      %36 = sbr.rel (0) target = $region21
    $region20: #{vit_forward.1} parent=1 // pred_region
      _
    $region21: #{vit_forward.1} parent=1 // pred_fallthru
      _
    // Predicated region
    $region22: #{vit_forward.1} parent=1 // pred_check
      _
    $region23: #{vit_forward.1} parent=1 // pred_check_branch
      %38 = sbr.rel (0) target = $region25
    $region24: #{vit_forward.1} parent=1 // pred_region
      _
    $region25: #{vit_forward.1} parent=1 // pred_fallthru
      _
    // Predicated region
    $region26: #{vit_forward.1} parent=1 // pred_check
      _
    $region27: #{vit_forward.1} parent=1 // pred_check_branch
      %40 = sbr.rel (0) target = $region29
    $region28: #{vit_forward.1} parent=1 // pred_region
      _
    $region29: #{vit_forward.1} parent=1 // pred_fallthru
      _
    // Predicated region
    $region30: #{vit_forward.1} parent=1 // pred_check
      _
    $region31: #{vit_forward.1} parent=1 // pred_check_branch
      %42 = sbr.rel (0) target = $region33
    $region32: #{vit_forward.1} parent=1 // pred_region
      _
    $region33: #{vit_forward.1} parent=1 // pred_fallthru
      _
    // Predicated region
    $region34: #{vit_forward.1} parent=1 // pred_check
      _
    $region35: #{vit_forward.1} parent=1 // pred_check_branch
      %44 = sbr.rel (0) target = $region37
    $region36: #{vit_forward.1} parent=1 // pred_region
      _
    $region37: #{vit_forward.1} parent=1 // pred_fallthru
      _
    // Predicated region
    $region38: #{vit_forward.1} parent=1 // pred_check
      _
    $region39: #{vit_forward.1} parent=1 // pred_check_branch
      %46 = sbr.rel (0) target = $region41
    $region40: #{vit_forward.1} parent=1 // pred_region
      _
    $region41: #{vit_forward.1} parent=1 // pred_fallthru
      _
    // Predicated region
    $region42: #{vit_forward.1} parent=1 // pred_check
      _
    $region43: #{vit_forward.1} parent=1 // pred_check_branch
      %48 = sbr.rel (0) target = $region45
    $region44: #{vit_forward.1} parent=1 // pred_region
      _
    $region45: #{vit_forward.1} parent=1 // pred_fallthru
      _
    // Predicated region
    $region46: #{vit_forward.1} parent=1 // pred_check
      _
    $region47: #{vit_forward.1} parent=1 // pred_check_branch
      %50 = sbr.rel (0) target = $region49
    $region48: #{vit_forward.1} parent=1 // pred_region
      _
    $region49: #{vit_forward.1} parent=1 // pred_fallthru
      _
    // Predicated region
    $region50: #{vit_forward.1} parent=1 // pred_check
      _
    $region51: #{vit_forward.1} parent=1 // pred_check_branch
      %52 = sbr.rel (0) target = $region53
    $region52: #{vit_forward.1} parent=1 // pred_region
      _
    $region53: #{vit_forward.1} parent=1 // pred_fallthru
      _
    // Predicated region
    $region54: #{vit_forward.1} parent=1 // pred_check
      _
    $region55: #{vit_forward.1} parent=1 // pred_check_branch
      %54 = sbr.rel (0) target = $region57
    $region56: #{vit_forward.1} parent=1 // pred_region
      _
    $region57: #{vit_forward.1} parent=1 // pred_fallthru
      _
    // Predicated region
    $region58: #{vit_forward.1} parent=1 // pred_check
      _
    $region59: #{vit_forward.1} parent=1 // pred_check_branch
      %56 = sbr.rel (0) target = $region61
    $region60: #{vit_forward.1} parent=1 // pred_region
      _
    $region61: #{vit_forward.1} parent=1 // pred_fallthru
      _
    // Predicated region
    $region62: #{vit_forward.1} parent=1 // pred_check
      _
    $region63: #{vit_forward.1} parent=1 // pred_check_branch
      %58 = sbr.rel (0) target = $region65
    $region64: #{vit_forward.1} parent=1 // pred_region
      _
    $region65: #{vit_forward.1} parent=1 // pred_fallthru
      _
    // Predicated region
    $region66: #{vit_forward.1} parent=1 // pred_check
      _
    $region67: #{vit_forward.1} parent=1 // pred_check_branch
      %60 = sbr.rel (0) target = $region69
    $region68: #{vit_forward.1} parent=1 // pred_region
      _
    $region69: #{vit_forward.1} parent=1 // pred_fallthru
      _
    // Predicated region
    $region70: #{vit_forward.1} parent=1 // pred_check
      _
    $region71: #{vit_forward.1} parent=1 // pred_check_branch
      %62 = sbr.rel (0) target = $region73
    $region72: #{vit_forward.1} parent=1 // pred_region
      _
    $region73: #{vit_forward.1} parent=1 // pred_fallthru
      _
    // Predicated region
    $region74: #{vit_forward.1} parent=1 // pred_check
      _
    $region75: #{vit_forward.1} parent=1 // pred_check_branch
      %64 = sbr.rel (0) target = $region77
    $region76: #{vit_forward.1} parent=1 // pred_region
      _
    $region77: #{vit_forward.1} parent=1 // pred_fallthru
      _
    // Predicated region
    $region78: #{vit_forward.1} parent=1 // pred_check
      _
    $region79: #{vit_forward.1} parent=1 // pred_check_branch
      %66 = sbr.rel (0) target = $region81
    $region80: #{vit_forward.1} parent=1 // pred_region
      _
    $region81: #{vit_forward.1} parent=1 // pred_fallthru
      _
    // Predicated region
    $region82: #{vit_forward.1} parent=1 // pred_check
      _
    $region83: #{vit_forward.1} parent=1 // pred_check_branch
      %68 = sbr.rel (0) target = $region85
    $region84: #{vit_forward.1} parent=1 // pred_region
      _
    $region85: #{vit_forward.1} parent=1 // pred_fallthru
      _
    %v70 = vld [vmem:[%s0] sm:$0xff]
    %v71 = vld [vmem:[%s0 + $0x8] sm:$0xff]
    %v72 = vld [vmem:[%s0 + $0x10] sm:$0xff]
    %v73 = vld [vmem:[%s0 + $0x18] sm:$0xff]
    %v74 = vld [vmem:[%s0 + $0x20] sm:$0xff]
    %v75 = vld [vmem:[%s0 + $0x28] sm:$0xff]
    %v76 = vld [vmem:[%s1] sm:$0xf]
    %v77 = vld [vmem:[%s1 + $0x4] sm:$0xf]
    %v78 = vld [vmem:[%s1 + $0x8] sm:$0xf]
    %v79 = vld [vmem:[%s1 + $0xc] sm:$0xf]
    %v80 = vld [vmem:[%s1 + $0x10] sm:$0xf]
    %v81 = vld [vmem:[%s1 + $0x14] sm:$0xf]
    %v82 = vld [vmem:[%s1 + $0x18] sm:$0xf]
    %v83 = vld [vmem:[%s1 + $0x1c] sm:$0xf]
    %v84 = vld [vmem:[%s1 + $0x20] sm:$0xf]
    %v85 = vld [vmem:[%s1 + $0x24] sm:$0xf]
    %v86 = vld [vmem:[%s1 + $0x28] sm:$0xf]
    %v87 = vld [vmem:[%s1 + $0x2c] sm:$0xf]
    %v88 = vld [vmem:[%s1 + $0x30] sm:$0xf]
    %v89 = vld [vmem:[%s1 + $0x34] sm:$0xf]
    %v90 = vld [vmem:[%s1 + $0x38] sm:$0xf]
    %v91 = vld [vmem:[%s1 + $0x3c] sm:$0xf]
    %v92 = vld [vmem:[%s1 + $0x40] sm:$0xf]
    %v93 = vld [vmem:[%s1 + $0x44] sm:$0xf]
    %v94 = vld [vmem:[%s1 + $0x48] sm:$0xf]
    %v95 = vld [vmem:[%s1 + $0x4c] sm:$0xf]
    %v96 = vld [vmem:[%s1 + $0x50] sm:$0xf]
    %v97 = vld [vmem:[%s1 + $0x54] sm:$0xf]
    %v98 = vld [vmem:[%s1 + $0x58] sm:$0xf]
    %v99 = vld [vmem:[%s1 + $0x5c] sm:$0xf]
    %v100 = vld [vmem:[%s1 + $0x60] sm:$0xf]
    %v101 = vld [vmem:[%s1 + $0x64] sm:$0xf]
    %v102 = vld [vmem:[%s1 + $0x68] sm:$0xf]
    %v103 = vld [vmem:[%s1 + $0x6c] sm:$0xf]
    %v104 = vld [vmem:[%s1 + $0x70] sm:$0xf]
    %v105 = vld [vmem:[%s1 + $0x74] sm:$0xf]
    %v106 = vld [vmem:[%s1 + $0x78] sm:$0xf]
    %v107 = vld [vmem:[%s1 + $0x7c] sm:$0xf]
    %v108 = vld [vmem:[%s1 + $0x80] sm:$0xf]
    %v109 = vld [vmem:[%s1 + $0x84] sm:$0xf]
    %v110 = vld [vmem:[%s1 + $0x88] sm:$0xf]
    %v111 = vld [vmem:[%s1 + $0x8c] sm:$0xf]
    %v112 = vld [vmem:[%s1 + $0x90] sm:$0xf]
    %v113 = vld [vmem:[%s1 + $0x94] sm:$0xf]
    %v114 = vld [vmem:[%s1 + $0x98] sm:$0xf]
    %v115 = vld [vmem:[%s1 + $0x9c] sm:$0xf]
    %v116 = vld [vmem:[%s1 + $0xa0] sm:$0xf]
    %v117 = vld [vmem:[%s1 + $0xa4] sm:$0xf]
    %v118 = vld [vmem:[%s1 + $0xa8] sm:$0xf]
    %v119 = vld [vmem:[%s1 + $0xac] sm:$0xf]
    %v120 = vld [vmem:[%s1 + $0xb0] sm:$0xf]
    %v121 = vld [vmem:[%s1 + $0xb4] sm:$0xf]
    %v122 = vld [vmem:[%s1 + $0xb8] sm:$0xf]
    %v123 = vld [vmem:[%s1 + $0xbc] sm:$0xf]
    %v124 = vld [vmem:[%s1 + $0xc0] sm:$0xf]
    %v125 = vld [vmem:[%s1 + $0xc4] sm:$0xf]
    %v126 = vld [vmem:[%s1 + $0xc8] sm:$0xf]
    %v127 = vld [vmem:[%s1 + $0xcc] sm:$0xf]
    %v128 = vld [vmem:[%s1 + $0xd0] sm:$0xf]
    %v129 = vld [vmem:[%s1 + $0xd4] sm:$0xf]
    %v130 = vld [vmem:[%s1 + $0xd8] sm:$0xf]
    %v131 = vld [vmem:[%s1 + $0xdc] sm:$0xf]
    %v132 = vld [vmem:[%s1 + $0xe0] sm:$0xf]
    %v133 = vld [vmem:[%s1 + $0xe4] sm:$0xf]
    %v134 = vld [vmem:[%s1 + $0xe8] sm:$0xf]
    %v135 = vld [vmem:[%s1 + $0xec] sm:$0xf]
    %v136 = vld [vmem:[%s1 + $0xf0] sm:$0xf]
    %v137 = vld [vmem:[%s1 + $0xf4] sm:$0xf]
    %v138 = vld [vmem:[%s1 + $0xf8] sm:$0xf]
    %v139 = vld [vmem:[%s1 + $0xfc] sm:$0xf]
    %v140 = vld [vmem:[%s1 + $0x100] sm:$0xf]
    %v141 = vld [vmem:[%s1 + $0x104] sm:$0xf]
    %v142 = vld [vmem:[%s1 + $0x108] sm:$0xf]
    %v143 = vld [vmem:[%s1 + $0x10c] sm:$0xf]
    %v144 = vld [vmem:[%s1 + $0x110] sm:$0xf]
    %v145 = vld [vmem:[%s1 + $0x114] sm:$0xf]
    %v146 = vld [vmem:[%s1 + $0x118] sm:$0xf]
    %v147 = vld [vmem:[%s1 + $0x11c] sm:$0xf]
    %v148 = vld [vmem:[%s1 + $0x120] sm:$0xf]
    %v149 = vld [vmem:[%s1 + $0x124] sm:$0xf]
    %v150 = vld [vmem:[%s1 + $0x128] sm:$0xf]
    %v151 = vld [vmem:[%s1 + $0x12c] sm:$0xf]
    %v152 = vld [vmem:[%s1 + $0x130] sm:$0xf]
    %v153 = vld [vmem:[%s1 + $0x134] sm:$0xf]
    %v154 = vld [vmem:[%s1 + $0x138] sm:$0xf]
    %v155 = vld [vmem:[%s1 + $0x13c] sm:$0xf]
    %v156 = vld [vmem:[%s1 + $0x140] sm:$0xf]
    %v157 = vld [vmem:[%s1 + $0x144] sm:$0xf]
    %v158 = vld [vmem:[%s1 + $0x148] sm:$0xf]
    %v159 = vld [vmem:[%s1 + $0x14c] sm:$0xf]
    %v160 = vld [vmem:[%s1 + $0x150] sm:$0xf]
    %v161 = vld [vmem:[%s1 + $0x154] sm:$0xf]
    %v162 = vld [vmem:[%s1 + $0x158] sm:$0xf]
    %v163 = vld [vmem:[%s1 + $0x15c] sm:$0xf]
    %v164 = vld [vmem:[%s1 + $0x160] sm:$0xf]
    %v165 = vld [vmem:[%s1 + $0x164] sm:$0xf]
    %v166 = vld [vmem:[%s1 + $0x168] sm:$0xf]
    %v167 = vld [vmem:[%s1 + $0x16c] sm:$0xf]
    %v168 = vld [vmem:[%s1 + $0x170] sm:$0xf]
    %v169 = vld [vmem:[%s1 + $0x174] sm:$0xf]
    %v170 = vld [vmem:[%s1 + $0x178] sm:$0xf]
    %v171 = vld [vmem:[%s1 + $0x17c] sm:$0xf]
    %v172 = vpack.c.bf16 %v70, %v70
    %v173 = vpack.c.bf16 %v71, %v71
    %v174 = vpack.c.bf16 %v72, %v72
    %v175 = vpack.c.bf16 %v73, %v73
    %v176 = vpack.c.bf16 %v74, %v74
    %v177 = vpack.c.bf16 %v75, %v75
    %v178 = vld [vmem:[%s2] sm:$0x1]
    %v180 = vlaneseq
    %v181 = vshrl.u32 %v180, 7
    %v182 = vsub.s32 0, %v181
    %v183 = vrot.slane %v178, %v182
    %v281 = vunpack.c.l.b16 %v76
    %v282 = vunpack.c.l.b16 %v77
    %v283 = vunpack.c.l.b16 %v78
    %v284 = vunpack.c.l.b16 %v79
    %v285 = vunpack.c.l.b16 %v80
    %v286 = vunpack.c.l.b16 %v81
    %v287 = vunpack.c.l.b16 %v82
    %v288 = vunpack.c.l.b16 %v83
    %v289 = vunpack.c.l.b16 %v84
    %v290 = vunpack.c.l.b16 %v85
    %v291 = vunpack.c.l.b16 %v86
    %v292 = vunpack.c.l.b16 %v87
    %v293 = vunpack.c.l.b16 %v88
    %v294 = vunpack.c.l.b16 %v89
    %v295 = vunpack.c.l.b16 %v90
    %v296 = vunpack.c.l.b16 %v91
    %v297 = vunpack.c.l.b16 %v92
    %v298 = vunpack.c.l.b16 %v93
    %v299 = vunpack.c.l.b16 %v94
    %v300 = vunpack.c.l.b16 %v95
    %v301 = vunpack.c.l.b16 %v96
    %v302 = vunpack.c.l.b16 %v97
    %v303 = vunpack.c.l.b16 %v98
    %v304 = vunpack.c.l.b16 %v99
    %v305 = vunpack.c.l.b16 %v100
    %v306 = vunpack.c.l.b16 %v101
    %v307 = vunpack.c.l.b16 %v102
    %v308 = vunpack.c.l.b16 %v103
    %v309 = vunpack.c.l.b16 %v104
    %v310 = vunpack.c.l.b16 %v105
    %v311 = vunpack.c.l.b16 %v106
    %v312 = vunpack.c.l.b16 %v107
    %v313 = vunpack.c.l.b16 %v108
    %v314 = vunpack.c.l.b16 %v109
    %v315 = vunpack.c.l.b16 %v110
    %v316 = vunpack.c.l.b16 %v111
    %v317 = vunpack.c.l.b16 %v112
    %v318 = vunpack.c.l.b16 %v113
    %v319 = vunpack.c.l.b16 %v114
    %v320 = vunpack.c.l.b16 %v115
    %v321 = vunpack.c.l.b16 %v116
    %v322 = vunpack.c.l.b16 %v117
    %v323 = vunpack.c.l.b16 %v118
    %v324 = vunpack.c.l.b16 %v119
    %v325 = vunpack.c.l.b16 %v120
    %v326 = vunpack.c.l.b16 %v121
    %v327 = vunpack.c.l.b16 %v122
    %v328 = vunpack.c.l.b16 %v123
    %v329 = vunpack.c.l.b16 %v124
    %v330 = vunpack.c.l.b16 %v125
    %v331 = vunpack.c.l.b16 %v126
    %v332 = vunpack.c.l.b16 %v127
    %v333 = vunpack.c.l.b16 %v128
    %v334 = vunpack.c.l.b16 %v129
    %v335 = vunpack.c.l.b16 %v130
    %v336 = vunpack.c.l.b16 %v131
    %v337 = vunpack.c.l.b16 %v132
    %v338 = vunpack.c.l.b16 %v133
    %v339 = vunpack.c.l.b16 %v134
    %v340 = vunpack.c.l.b16 %v135
    %v341 = vunpack.c.l.b16 %v136
    %v342 = vunpack.c.l.b16 %v137
    %v343 = vunpack.c.l.b16 %v138
    %v344 = vunpack.c.l.b16 %v139
    %v345 = vunpack.c.l.b16 %v140
    %v346 = vunpack.c.l.b16 %v141
    %v347 = vunpack.c.l.b16 %v142
    %v348 = vunpack.c.l.b16 %v143
    %v349 = vunpack.c.l.b16 %v144
    %v350 = vunpack.c.l.b16 %v145
    %v351 = vunpack.c.l.b16 %v146
    %v352 = vunpack.c.l.b16 %v147
    %v353 = vunpack.c.l.b16 %v148
    %v354 = vunpack.c.l.b16 %v149
    %v355 = vunpack.c.l.b16 %v150
    %v356 = vunpack.c.l.b16 %v151
    %v357 = vunpack.c.l.b16 %v152
    %v358 = vunpack.c.l.b16 %v153
    %v359 = vunpack.c.l.b16 %v154
    %v360 = vunpack.c.l.b16 %v155
    %v361 = vunpack.c.l.b16 %v156
    %v362 = vunpack.c.l.b16 %v157
    %v363 = vunpack.c.l.b16 %v158
    %v364 = vunpack.c.l.b16 %v159
    %v365 = vunpack.c.l.b16 %v160
    %v366 = vunpack.c.l.b16 %v161
    %v367 = vunpack.c.l.b16 %v162
    %v368 = vunpack.c.l.b16 %v163
    %v369 = vunpack.c.l.b16 %v164
    %v370 = vunpack.c.l.b16 %v165
    %v371 = vunpack.c.l.b16 %v166
    %v372 = vunpack.c.l.b16 %v167
    %v373 = vunpack.c.l.b16 %v168
    %v374 = vunpack.c.l.b16 %v169
    %v375 = vunpack.c.l.b16 %v170
    %v376 = vunpack.c.l.b16 %v171
    %v377 = vpack.c.b16 %v282, %v281
    %v378 = vpack.c.b16 %v284, %v283
    %v379 = vpack.c.b16 %v286, %v285
    %v380 = vpack.c.b16 %v288, %v287
    %v381 = vpack.c.b16 %v290, %v289
    %v382 = vpack.c.b16 %v292, %v291
    %v383 = vpack.c.b16 %v294, %v293
    %v384 = vpack.c.b16 %v296, %v295
    %v385 = vpack.c.b16 %v298, %v297
    %v386 = vpack.c.b16 %v300, %v299
    %v387 = vpack.c.b16 %v302, %v301
    %v388 = vpack.c.b16 %v304, %v303
    %v389 = vpack.c.b16 %v306, %v305
    %v390 = vpack.c.b16 %v308, %v307
    %v391 = vpack.c.b16 %v310, %v309
    %v392 = vpack.c.b16 %v312, %v311
    %v393 = vpack.c.b16 %v314, %v313
    %v394 = vpack.c.b16 %v316, %v315
    %v395 = vpack.c.b16 %v318, %v317
    %v396 = vpack.c.b16 %v320, %v319
    %v397 = vpack.c.b16 %v322, %v321
    %v398 = vpack.c.b16 %v324, %v323
    %v399 = vpack.c.b16 %v326, %v325
    %v400 = vpack.c.b16 %v328, %v327
    %v401 = vpack.c.b16 %v330, %v329
    %v402 = vpack.c.b16 %v332, %v331
    %v403 = vpack.c.b16 %v334, %v333
    %v404 = vpack.c.b16 %v336, %v335
    %v405 = vpack.c.b16 %v338, %v337
    %v406 = vpack.c.b16 %v340, %v339
    %v407 = vpack.c.b16 %v342, %v341
    %v408 = vpack.c.b16 %v344, %v343
    %v409 = vpack.c.b16 %v346, %v345
    %v410 = vpack.c.b16 %v348, %v347
    %v411 = vpack.c.b16 %v350, %v349
    %v412 = vpack.c.b16 %v352, %v351
    %v413 = vpack.c.b16 %v354, %v353
    %v414 = vpack.c.b16 %v356, %v355
    %v415 = vpack.c.b16 %v358, %v357
    %v416 = vpack.c.b16 %v360, %v359
    %v417 = vpack.c.b16 %v362, %v361
    %v418 = vpack.c.b16 %v364, %v363
    %v419 = vpack.c.b16 %v366, %v365
    %v420 = vpack.c.b16 %v368, %v367
    %v421 = vpack.c.b16 %v370, %v369
    %v422 = vpack.c.b16 %v372, %v371
    %v423 = vpack.c.b16 %v374, %v373
    %v424 = vpack.c.b16 %v376, %v375
    %473 = vmatprep.subr.bf16.mxu0 0
    %474 = vmatpush1.bf16.msra.mxu0 %v384
    %475 = vmatprep.subr.bf16.mxu0 0
    %476 = vmatpush1.bf16.msra.mxu0 %v383
    %477 = vmatprep.subr.bf16.mxu0 0
    %478 = vmatpush1.bf16.msra.mxu0 %v382
    %479 = vmatprep.subr.bf16.mxu0 0
    %480 = vmatpush1.bf16.msra.mxu0 %v381
    %481 = vmatprep.subr.bf16.mxu0 0
    %482 = vmatpush1.bf16.msra.mxu0 %v380
    %483 = vmatprep.subr.bf16.mxu0 0
    %484 = vmatpush1.bf16.msra.mxu0 %v379
    %485 = vmatprep.subr.bf16.mxu0 0
    %486 = vmatpush1.bf16.msra.mxu0 %v378
    %487 = vmatprep.subr.bf16.mxu0 0
    %488 = vmatpush1.bf16.msra.mxu0 %v377
    %489 = vmatprep.subr.bf16.mxu0 0
    %490 = vmatpush2.bf16.msra.mxu0 %v392
    %491 = vmatprep.subr.bf16.mxu0 0
    %492 = vmatpush2.bf16.msra.mxu0 %v391
    %493 = vmatprep.subr.bf16.mxu0 0
    %494 = vmatpush2.bf16.msra.mxu0 %v390
    %495 = vmatprep.subr.bf16.mxu0 0
    %496 = vmatpush2.bf16.msra.mxu0 %v389
    %497 = vmatprep.subr.bf16.mxu0 0
    %498 = vmatpush2.bf16.msra.mxu0 %v388
    %499 = vmatprep.subr.bf16.mxu0 0
    %500 = vmatpush2.bf16.msra.mxu0 %v387
    %501 = vmatprep.subr.bf16.mxu0 0
    %502 = vmatpush2.bf16.msra.mxu0 %v386
    %503 = vmatprep.subr.bf16.mxu0 0
    %504 = vmatpush2.bf16.msra.mxu0 %v385
    %505 = vmatprep.mubr.bf16.mxu0 %v173
    %506 = vmatmul.mubr.bf16.gmra.mxu0 %v172
    %v507 = vpop.f32.mrf.mxu0
    %v508 = vadd.f32 %v183, %v507
    %v509 = vpop.f32.mrf.mxu0
    %v510 = vpop.f32.mrf.mxu0
    %v511 = vpop.f32.mrf.mxu0
    %512 = vdwg.mxu0
    %513 = vmatprep.subr.bf16.mxu0 0
    %514 = vmatpush1.bf16.msra.mxu0 %v400
    %515 = vmatprep.subr.bf16.mxu0 0
    %516 = vmatpush1.bf16.msra.mxu0 %v399
    %517 = vmatprep.subr.bf16.mxu0 0
    %518 = vmatpush1.bf16.msra.mxu0 %v398
    %519 = vmatprep.subr.bf16.mxu0 0
    %520 = vmatpush1.bf16.msra.mxu0 %v397
    %521 = vmatprep.subr.bf16.mxu0 0
    %522 = vmatpush1.bf16.msra.mxu0 %v396
    %523 = vmatprep.subr.bf16.mxu0 0
    %524 = vmatpush1.bf16.msra.mxu0 %v395
    %525 = vmatprep.subr.bf16.mxu0 0
    %526 = vmatpush1.bf16.msra.mxu0 %v394
    %527 = vmatprep.subr.bf16.mxu0 0
    %528 = vmatpush1.bf16.msra.mxu0 %v393
    %529 = vmatprep.subr.bf16.mxu0 0
    %530 = vmatpush2.bf16.msra.mxu0 %v408
    %531 = vmatprep.subr.bf16.mxu0 0
    %532 = vmatpush2.bf16.msra.mxu0 %v407
    %533 = vmatprep.subr.bf16.mxu0 0
    %534 = vmatpush2.bf16.msra.mxu0 %v406
    %535 = vmatprep.subr.bf16.mxu0 0
    %536 = vmatpush2.bf16.msra.mxu0 %v405
    %537 = vmatprep.subr.bf16.mxu0 0
    %538 = vmatpush2.bf16.msra.mxu0 %v404
    %539 = vmatprep.subr.bf16.mxu0 0
    %540 = vmatpush2.bf16.msra.mxu0 %v403
    %541 = vmatprep.subr.bf16.mxu0 0
    %542 = vmatpush2.bf16.msra.mxu0 %v402
    %543 = vmatprep.subr.bf16.mxu0 0
    %544 = vmatpush2.bf16.msra.mxu0 %v401
    %545 = vmatprep.mubr.bf16.mxu0 %v175
    %546 = vmatmul.mubr.bf16.gmra.mxu0 %v174
    %v547 = vpop.f32.mrf.mxu0
    %v548 = vadd.f32 %v508, %v547
    %v549 = vpop.f32.mrf.mxu0
    %v550 = vpop.f32.mrf.mxu0
    %v551 = vpop.f32.mrf.mxu0
    %552 = vdwg.mxu0
    %553 = vmatprep.subr.bf16.mxu0 0
    %554 = vmatpush1.bf16.msra.mxu0 %v416
    %555 = vmatprep.subr.bf16.mxu0 0
    %556 = vmatpush1.bf16.msra.mxu0 %v415
    %557 = vmatprep.subr.bf16.mxu0 0
    %558 = vmatpush1.bf16.msra.mxu0 %v414
    %559 = vmatprep.subr.bf16.mxu0 0
    %560 = vmatpush1.bf16.msra.mxu0 %v413
    %561 = vmatprep.subr.bf16.mxu0 0
    %562 = vmatpush1.bf16.msra.mxu0 %v412
    %563 = vmatprep.subr.bf16.mxu0 0
    %564 = vmatpush1.bf16.msra.mxu0 %v411
    %565 = vmatprep.subr.bf16.mxu0 0
    %566 = vmatpush1.bf16.msra.mxu0 %v410
    %567 = vmatprep.subr.bf16.mxu0 0
    %568 = vmatpush1.bf16.msra.mxu0 %v409
    %569 = vmatprep.subr.bf16.mxu0 0
    %570 = vmatpush2.bf16.msra.mxu0 %v424
    %571 = vmatprep.subr.bf16.mxu0 0
    %572 = vmatpush2.bf16.msra.mxu0 %v423
    %573 = vmatprep.subr.bf16.mxu0 0
    %574 = vmatpush2.bf16.msra.mxu0 %v422
    %575 = vmatprep.subr.bf16.mxu0 0
    %576 = vmatpush2.bf16.msra.mxu0 %v421
    %577 = vmatprep.subr.bf16.mxu0 0
    %578 = vmatpush2.bf16.msra.mxu0 %v420
    %579 = vmatprep.subr.bf16.mxu0 0
    %580 = vmatpush2.bf16.msra.mxu0 %v419
    %581 = vmatprep.subr.bf16.mxu0 0
    %582 = vmatpush2.bf16.msra.mxu0 %v418
    %583 = vmatprep.subr.bf16.mxu0 0
    %584 = vmatpush2.bf16.msra.mxu0 %v417
    %585 = vmatprep.mubr.bf16.mxu0 %v177
    %586 = vmatmul.mubr.bf16.gmra.mxu0 %v176
    %v587 = vpop.f32.mrf.mxu0
    %v588 = vadd.f32 %v548, %v587
    %v589 = vpop.f32.mrf.mxu0
    %v590 = vpop.f32.mrf.mxu0
    %v591 = vpop.f32.mrf.mxu0
    %592 = vdwg.mxu0
    %v593 = vld [vmem:[%s3] sm:$0x1]
    %v594 = vld [vmem:[%s4] sm:$0x1]
    %v595 = vadd.f32 %v593, %v594
    %vm596 = vcmask 253952
    %597 = vst.msk [vmem:[#allocation2] sm:$0x1] %vm596, %v595
    %v598 = vld [vmem:[%s4 + $0x1] sm:$0xf]
    %v599 = vadd.f32 %v588, %v598
    %vm600 = vcmask 257024
    %601 = vst.msk [vmem:[#allocation2 + $0x1] sm:$0xf] %vm600, %v599
    %v602 = vld [vmem:[%s3] sm:$0x1]
    %v603 = vld [vmem:[%s4] sm:$0x1]
    %v604 = vadd.f32 %v602, %v603
    %605 = vst.msk [vmem:[#allocation2 + $0x5] sm:$0x1] %vm596, %v604
    %v606 = vld [vmem:[%s4 + $0x1] sm:$0xf]
    %v608 = vrot.slane %v606, 4
    %v610 = vadd.f32 %v588, %v608
    %vm611 = vcmask 261124
    %612 = vst.msk [vmem:[#allocation2 + $0x2] sm:$0xf0] %vm611, %v610
    %v613 = vld [vmem:[#allocation2] sm:$0xff]
    %v614 = vld [vmem:[#allocation2 + $0x8] sm:$0x3]
    %v615 = vld [vmem:[%s5] sm:$0x1]
    %v616 = vld [vmem:[%s6] sm:$0x1]
    %vm617 = vcmask 261120
    %v618 = vsel %vm617, %v613, 0.0
    %619 = vadd.xlane.f32.xlu0 %v618
    %v620 = vpop.xlane.xlu0 %619
    %vm621 = vcmask 254976
    %v622 = vsel %vm621, %v614, 0.0
    %623 = vadd.xlane.f32.xlu0 %v622
    %v624 = vpop.xlane.xlu0 %623
    %v625 = vrcp.pop 32.0
    %v626 = vmul.f32 %v620, %v625
    %v627 = vmul.f32 %v624, %v625
    %v628 = vsub.f32 %v613, %v626
    %v629 = vsub.f32 %v614, %v627
    %v630 = vmul.f32 %v628, %v628
    %v631 = vmul.f32 %v629, %v629
    %v632 = vsel %vm617, %v630, 0.0
    %633 = vadd.xlane.f32.xlu0 %v632
    %v634 = vpop.xlane.xlu0 %633
    %v635 = vsel %vm621, %v631, 0.0
    %636 = vadd.xlane.f32.xlu0 %v635
    %v637 = vpop.xlane.xlu0 %636
    %v638 = vmul.f32 %v634, %v625
    %v639 = vmul.f32 %v637, %v625
    %v640 = vadd.f32 %v638, 1e-06
    %v641 = vadd.f32 %v639, 1e-06
    %v642 = vrsqrt.pop %v640
    %v643 = vrsqrt.pop %v641
    %v644 = vmul.f32 %v628, %v642
    %v645 = vmul.f32 %v629, %v643
    %v647 = vlaneseq
    %v648 = vshrl.u32 %v647, 7
    %v649 = vsub.s32 0, %v648
    %v650 = vrot.slane %v615, %v649
    %v652 = vmul.f32 %v644, %v650
    %v653 = vmul.f32 %v645, %v650
    %v655 = vlaneseq
    %v656 = vshrl.u32 %v655, 7
    %v657 = vsub.s32 0, %v656
    %v658 = vrot.slane %v616, %v657
    %v660 = vadd.f32 %v652, %v658
    %v661 = vadd.f32 %v653, %v658
    %v662 = vld [vmem:[%s7] sm:$0xf]
    %v663 = vld [vmem:[%s7 + $0x4] sm:$0xf]
    %v664 = vld [vmem:[%s7 + $0x8] sm:$0xf]
    %v665 = vld [vmem:[%s7 + $0xc] sm:$0xf]
    %v666 = vpack.c.bf16 %v661, %v660
    %v667 = vld [vmem:[%s8] sm:$0x1]
    %v669 = vlaneseq
    %v670 = vshrl.u32 %v669, 7
    %v671 = vsub.s32 0, %v670
    %v672 = vrot.slane %v667, %v671
    %v678 = vunpack.c.l.b16 %v662
    %v679 = vunpack.c.l.b16 %v663
    %v680 = vunpack.c.l.b16 %v664
    %v681 = vunpack.c.l.b16 %v665
    %v682 = vpack.c.b16 %v679, %v678
    %v683 = vpack.c.b16 %v681, %v680
    %v687 = vsel %vm617, %v666, 0
    %689 = vmatprep.subr.bf16.mxu0 0
    %690 = vmatpush1.bf16.msra.mxu0 0
    %691 = vmatprep.subr.bf16.mxu0 0
    %692 = vmatpush1.bf16.msra.mxu0 0
    %693 = vmatprep.subr.bf16.mxu0 0
    %694 = vmatpush1.bf16.msra.mxu0 0
    %695 = vmatprep.subr.bf16.mxu0 0
    %696 = vmatpush1.bf16.msra.mxu0 0
    %697 = vmatprep.subr.bf16.mxu0 0
    %698 = vmatpush1.bf16.msra.mxu0 0
    %699 = vmatprep.subr.bf16.mxu0 0
    %700 = vmatpush1.bf16.msra.mxu0 0
    %701 = vmatprep.subr.bf16.mxu0 0
    %702 = vmatpush1.bf16.msra.mxu0 %v683
    %703 = vmatprep.subr.bf16.mxu0 0
    %704 = vmatpush1.bf16.msra.mxu0 %v682
    %705 = vmatprep.subr.bf16.mxu0 0
    %706 = vmatpush2.bf16.msra.mxu0 0
    %707 = vmatprep.subr.bf16.mxu0 0
    %708 = vmatpush2.bf16.msra.mxu0 0
    %709 = vmatprep.subr.bf16.mxu0 0
    %710 = vmatpush2.bf16.msra.mxu0 0
    %711 = vmatprep.subr.bf16.mxu0 0
    %712 = vmatpush2.bf16.msra.mxu0 0
    %713 = vmatprep.subr.bf16.mxu0 0
    %714 = vmatpush2.bf16.msra.mxu0 0
    %715 = vmatprep.subr.bf16.mxu0 0
    %716 = vmatpush2.bf16.msra.mxu0 0
    %717 = vmatprep.subr.bf16.mxu0 0
    %718 = vmatpush2.bf16.msra.mxu0 0
    %719 = vmatprep.subr.bf16.mxu0 0
    %720 = vmatpush2.bf16.msra.mxu0 0
    %721 = vmatprep.mubr.bf16.mxu0 0
    %722 = vmatmul.mubr.bf16.gmra.mxu0 %v687
    %v723 = vpop.f32.mrf.mxu0
    %v724 = vadd.f32 %v672, %v723
    %v725 = vpop.f32.mrf.mxu0
    %v726 = vpop.f32.mrf.mxu0
    %v727 = vadd.f32 %v672, %v726
    %v728 = vpop.f32.mrf.mxu0
    %729 = vdwg.mxu0
    %v730 = vpack.c.bf16 %v724, %v724
    %732 = vrot.lane.b32.xlu0 %v730, 96
    %v733 = vpop.permute.xlu0 %732
    %vm734 = vcmask 64512
    %v736 = vsel %vm734, %v730, 0
    %v739 = vsel %vm734, %v733, 0
    %741 = vmatprep.subr.bf16.mxu0 0
    %742 = vmatpush1.bf16.xpose.msra.mxu0 0
    %743 = vmatprep.subr.bf16.mxu0 0
    %744 = vmatpush1.bf16.xpose.msra.mxu0 0
    %745 = vmatprep.subr.bf16.mxu0 0
    %746 = vmatpush1.bf16.xpose.msra.mxu0 0
    %747 = vmatprep.subr.bf16.mxu0 0
    %748 = vmatpush1.bf16.xpose.msra.mxu0 0
    %749 = vmatprep.subr.bf16.mxu0 0
    %750 = vmatpush1.bf16.xpose.msra.mxu0 0
    %751 = vmatprep.subr.bf16.mxu0 0
    %752 = vmatpush1.bf16.xpose.msra.mxu0 0
    %753 = vmatprep.subr.bf16.mxu0 0
    %754 = vmatpush1.bf16.xpose.msra.mxu0 0
    %755 = vmatprep.subr.bf16.mxu0 0
    %756 = vmatpush1.bf16.xpose.msra.mxu0 %v739
    %757 = vmatprep.subr.bf16.mxu0 0
    %758 = vmatpush2.bf16.xpose.msra.mxu0 0
    %759 = vmatprep.subr.bf16.mxu0 0
    %760 = vmatpush2.bf16.xpose.msra.mxu0 0
    %761 = vmatprep.subr.bf16.mxu0 0
    %762 = vmatpush2.bf16.xpose.msra.mxu0 0
    %763 = vmatprep.subr.bf16.mxu0 0
    %764 = vmatpush2.bf16.xpose.msra.mxu0 0
    %765 = vmatprep.subr.bf16.mxu0 0
    %766 = vmatpush2.bf16.xpose.msra.mxu0 0
    %767 = vmatprep.subr.bf16.mxu0 0
    %768 = vmatpush2.bf16.xpose.msra.mxu0 0
    %769 = vmatprep.subr.bf16.mxu0 0
    %770 = vmatpush2.bf16.xpose.msra.mxu0 0
    %771 = vmatprep.subr.bf16.mxu0 0
    %772 = vmatpush2.bf16.xpose.msra.mxu0 0
    %773 = vmatprep.mubr.bf16.mxu0 0
    %774 = vmatmul.mubr.bf16.gmra.mxu0 %v736
    %v775 = vpop.f32.mrf.mxu0
    %v776 = vadd.f32 0.0, %v775
    %v777 = vpop.f32.mrf.mxu0
    %v778 = vpop.f32.mrf.mxu0
    %v779 = vpop.f32.mrf.mxu0
    %780 = vdwg.mxu0
    %v781 = vmul.f32 %v776, 0.35355338
    %vm782 = vcmask 36864
    %v783 = vsel %vm782, %v781, -inf
    %784 = vmax.xlane.f32.xlu0 %v783
    %v785 = vpop.xlane.xlu0 %784
    %v786 = vsub.f32 %v781, %v785
    %v787 = vmul.f32 %v786, 1.442695
    %v788 = vpow.pop %v787
    %v789 = vsel %vm782, %v788, 0.0
    %790 = vadd.xlane.f32.xlu0 %v789
    %v791 = vpop.xlane.xlu0 %790
    %v792 = vrcp.pop %v791
    %v793 = vmul.f32 %v788, %v792
    %v794 = vpack.c.bf16 %v793, %v793
    %795 = vrot.lane.b32.xlu0 %v730, 64
    %v796 = vpop.permute.xlu0 %795
    %vm797 = vcmask 39936
    %v799 = vsel %vm797, %v794, 0
    %vm801 = vcmask 1041408
    %vm802 = vcmask 1042432
    %v803 = vsel %vm801, 4294967295, 65535
    %v804 = vsel %vm802, %v803, 0
    %v806 = vand.u32 %v796, %v804
    %808 = vmatprep.subr.bf16.mxu0 0
    %809 = vmatpush1.bf16.msra.mxu0 0
    %810 = vmatprep.subr.bf16.mxu0 0
    %811 = vmatpush1.bf16.msra.mxu0 0
    %812 = vmatprep.subr.bf16.mxu0 0
    %813 = vmatpush1.bf16.msra.mxu0 0
    %814 = vmatprep.subr.bf16.mxu0 0
    %815 = vmatpush1.bf16.msra.mxu0 0
    %816 = vmatprep.subr.bf16.mxu0 0
    %817 = vmatpush1.bf16.msra.mxu0 0
    %818 = vmatprep.subr.bf16.mxu0 0
    %819 = vmatpush1.bf16.msra.mxu0 0
    %820 = vmatprep.subr.bf16.mxu0 0
    %821 = vmatpush1.bf16.msra.mxu0 0
    %822 = vmatprep.subr.bf16.mxu0 0
    %823 = vmatpush1.bf16.msra.mxu0 %v806
    %824 = vmatprep.subr.bf16.mxu0 0
    %825 = vmatpush2.bf16.msra.mxu0 0
    %826 = vmatprep.subr.bf16.mxu0 0
    %827 = vmatpush2.bf16.msra.mxu0 0
    %828 = vmatprep.subr.bf16.mxu0 0
    %829 = vmatpush2.bf16.msra.mxu0 0
    %830 = vmatprep.subr.bf16.mxu0 0
    %831 = vmatpush2.bf16.msra.mxu0 0
    %832 = vmatprep.subr.bf16.mxu0 0
    %833 = vmatpush2.bf16.msra.mxu0 0
    %834 = vmatprep.subr.bf16.mxu0 0
    %835 = vmatpush2.bf16.msra.mxu0 0
    %836 = vmatprep.subr.bf16.mxu0 0
    %837 = vmatpush2.bf16.msra.mxu0 0
    %838 = vmatprep.subr.bf16.mxu0 0
    %839 = vmatpush2.bf16.msra.mxu0 0
    %840 = vmatprep.mubr.bf16.mxu0 0
    %841 = vmatmul.mubr.bf16.gmra.mxu0 %v799
    %v842 = vpop.f32.mrf.mxu0
    %v843 = vadd.f32 0.0, %v842
    %v844 = vpop.f32.mrf.mxu0
    %v845 = vpop.f32.mrf.mxu0
    %v846 = vpop.f32.mrf.mxu0
    %847 = vdwg.mxu0
    %vm848 = vcmask 61440
    %849 = vst.msk [vmem:[#allocation3] sm:$0x1f] %vm848, %v843
    %850 = vrot.lane.b32.xlu0 %v730, 120
    %v851 = vpop.permute.xlu0 %850
    %852 = vrot.lane.b32.xlu0 %v730, 88
    %v853 = vpop.permute.xlu0 %852
    %v855 = vsel %vm734, %v851, 0
    %v858 = vsel %vm734, %v853, 0
    %860 = vmatprep.subr.bf16.mxu0 0
    %861 = vmatpush1.bf16.xpose.msra.mxu0 0
    %862 = vmatprep.subr.bf16.mxu0 0
    %863 = vmatpush1.bf16.xpose.msra.mxu0 0
    %864 = vmatprep.subr.bf16.mxu0 0
    %865 = vmatpush1.bf16.xpose.msra.mxu0 0
    %866 = vmatprep.subr.bf16.mxu0 0
    %867 = vmatpush1.bf16.xpose.msra.mxu0 0
    %868 = vmatprep.subr.bf16.mxu0 0
    %869 = vmatpush1.bf16.xpose.msra.mxu0 0
    %870 = vmatprep.subr.bf16.mxu0 0
    %871 = vmatpush1.bf16.xpose.msra.mxu0 0
    %872 = vmatprep.subr.bf16.mxu0 0
    %873 = vmatpush1.bf16.xpose.msra.mxu0 0
    %874 = vmatprep.subr.bf16.mxu0 0
    %875 = vmatpush1.bf16.xpose.msra.mxu0 %v858
    %876 = vmatprep.subr.bf16.mxu0 0
    %877 = vmatpush2.bf16.xpose.msra.mxu0 0
    %878 = vmatprep.subr.bf16.mxu0 0
    %879 = vmatpush2.bf16.xpose.msra.mxu0 0
    %880 = vmatprep.subr.bf16.mxu0 0
    %881 = vmatpush2.bf16.xpose.msra.mxu0 0
    %882 = vmatprep.subr.bf16.mxu0 0
    %883 = vmatpush2.bf16.xpose.msra.mxu0 0
    %884 = vmatprep.subr.bf16.mxu0 0
    %885 = vmatpush2.bf16.xpose.msra.mxu0 0
    %886 = vmatprep.subr.bf16.mxu0 0
    %887 = vmatpush2.bf16.xpose.msra.mxu0 0
    %888 = vmatprep.subr.bf16.mxu0 0
    %889 = vmatpush2.bf16.xpose.msra.mxu0 0
    %890 = vmatprep.subr.bf16.mxu0 0
    %891 = vmatpush2.bf16.xpose.msra.mxu0 0
    %892 = vmatprep.mubr.bf16.mxu0 0
    %893 = vmatmul.mubr.bf16.gmra.mxu0 %v855
    %v894 = vpop.f32.mrf.mxu0
    %v895 = vadd.f32 0.0, %v894
    %v896 = vpop.f32.mrf.mxu0
    %v897 = vpop.f32.mrf.mxu0
    %v898 = vpop.f32.mrf.mxu0
    %899 = vdwg.mxu0
    %v900 = vmul.f32 %v895, 0.35355338
    %v901 = vsel %vm782, %v900, -inf
    %902 = vmax.xlane.f32.xlu0 %v901
    %v903 = vpop.xlane.xlu0 %902
    %v904 = vsub.f32 %v900, %v903
    %v905 = vmul.f32 %v904, 1.442695
    %v906 = vpow.pop %v905
    %v907 = vsel %vm782, %v906, 0.0
    %908 = vadd.xlane.f32.xlu0 %v907
    %v909 = vpop.xlane.xlu0 %908
    %v910 = vrcp.pop %v909
    %v911 = vmul.f32 %v906, %v910
    %v912 = vpack.c.bf16 %v911, %v911
    %913 = vrot.lane.b32.xlu0 %v730, 56
    %v914 = vpop.permute.xlu0 %913
    %v916 = vsel %vm797, %v912, 0
    %v919 = vand.u32 %v914, %v804
    %921 = vmatprep.subr.bf16.mxu0 0
    %922 = vmatpush1.bf16.msra.mxu0 0
    %923 = vmatprep.subr.bf16.mxu0 0
    %924 = vmatpush1.bf16.msra.mxu0 0
    %925 = vmatprep.subr.bf16.mxu0 0
    %926 = vmatpush1.bf16.msra.mxu0 0
    %927 = vmatprep.subr.bf16.mxu0 0
    %928 = vmatpush1.bf16.msra.mxu0 0
    %929 = vmatprep.subr.bf16.mxu0 0
    %930 = vmatpush1.bf16.msra.mxu0 0
    %931 = vmatprep.subr.bf16.mxu0 0
    %932 = vmatpush1.bf16.msra.mxu0 0
    %933 = vmatprep.subr.bf16.mxu0 0
    %934 = vmatpush1.bf16.msra.mxu0 0
    %935 = vmatprep.subr.bf16.mxu0 0
    %936 = vmatpush1.bf16.msra.mxu0 %v919
    %937 = vmatprep.subr.bf16.mxu0 0
    %938 = vmatpush2.bf16.msra.mxu0 0
    %939 = vmatprep.subr.bf16.mxu0 0
    %940 = vmatpush2.bf16.msra.mxu0 0
    %941 = vmatprep.subr.bf16.mxu0 0
    %942 = vmatpush2.bf16.msra.mxu0 0
    %943 = vmatprep.subr.bf16.mxu0 0
    %944 = vmatpush2.bf16.msra.mxu0 0
    %945 = vmatprep.subr.bf16.mxu0 0
    %946 = vmatpush2.bf16.msra.mxu0 0
    %947 = vmatprep.subr.bf16.mxu0 0
    %948 = vmatpush2.bf16.msra.mxu0 0
    %949 = vmatprep.subr.bf16.mxu0 0
    %950 = vmatpush2.bf16.msra.mxu0 0
    %951 = vmatprep.subr.bf16.mxu0 0
    %952 = vmatpush2.bf16.msra.mxu0 0
    %953 = vmatprep.mubr.bf16.mxu0 0
    %954 = vmatmul.mubr.bf16.gmra.mxu0 %v916
    %v955 = vpop.f32.mrf.mxu0
    %v956 = vadd.f32 0.0, %v955
    %v957 = vpop.f32.mrf.mxu0
    %v958 = vpop.f32.mrf.mxu0
    %v959 = vpop.f32.mrf.mxu0
    %960 = vdwg.mxu0
    %s961 = scalar_lea.vmem [#allocation3], 16
    %962 = vst.msk [vmem:[%s961] sm:$0x1f] %vm848, %v956
    %963 = vrot.lane.b32.xlu0 %v730, 112
    %v964 = vpop.permute.xlu0 %963
    %965 = vrot.lane.b32.xlu0 %v730, 80
    %v966 = vpop.permute.xlu0 %965
    %v968 = vsel %vm734, %v964, 0
    %v971 = vsel %vm734, %v966, 0
    %973 = vmatprep.subr.bf16.mxu0 0
    %974 = vmatpush1.bf16.xpose.msra.mxu0 0
    %975 = vmatprep.subr.bf16.mxu0 0
    %976 = vmatpush1.bf16.xpose.msra.mxu0 0
    %977 = vmatprep.subr.bf16.mxu0 0
    %978 = vmatpush1.bf16.xpose.msra.mxu0 0
    %979 = vmatprep.subr.bf16.mxu0 0
    %980 = vmatpush1.bf16.xpose.msra.mxu0 0
    %981 = vmatprep.subr.bf16.mxu0 0
    %982 = vmatpush1.bf16.xpose.msra.mxu0 0
    %983 = vmatprep.subr.bf16.mxu0 0
    %984 = vmatpush1.bf16.xpose.msra.mxu0 0
    %985 = vmatprep.subr.bf16.mxu0 0
    %986 = vmatpush1.bf16.xpose.msra.mxu0 0
    %987 = vmatprep.subr.bf16.mxu0 0
    %988 = vmatpush1.bf16.xpose.msra.mxu0 %v971
    %989 = vmatprep.subr.bf16.mxu0 0
    %990 = vmatpush2.bf16.xpose.msra.mxu0 0
    %991 = vmatprep.subr.bf16.mxu0 0
    %992 = vmatpush2.bf16.xpose.msra.mxu0 0
    %993 = vmatprep.subr.bf16.mxu0 0
    %994 = vmatpush2.bf16.xpose.msra.mxu0 0
    %995 = vmatprep.subr.bf16.mxu0 0
    %996 = vmatpush2.bf16.xpose.msra.mxu0 0
    %997 = vmatprep.subr.bf16.mxu0 0
    %998 = vmatpush2.bf16.xpose.msra.mxu0 0
    %999 = vmatprep.subr.bf16.mxu0 0
    %1000 = vmatpush2.bf16.xpose.msra.mxu0 0
    %1001 = vmatprep.subr.bf16.mxu0 0
    %1002 = vmatpush2.bf16.xpose.msra.mxu0 0
    %1003 = vmatprep.subr.bf16.mxu0 0
    %1004 = vmatpush2.bf16.xpose.msra.mxu0 0
    %1005 = vmatprep.mubr.bf16.mxu0 0
    %1006 = vmatmul.mubr.bf16.gmra.mxu0 %v968
    %v1007 = vpop.f32.mrf.mxu0
    %v1008 = vadd.f32 0.0, %v1007
    %v1009 = vpop.f32.mrf.mxu0
    %v1010 = vpop.f32.mrf.mxu0
    %v1011 = vpop.f32.mrf.mxu0
    %1012 = vdwg.mxu0
    %v1013 = vmul.f32 %v1008, 0.35355338
    %v1014 = vsel %vm782, %v1013, -inf
    %1015 = vmax.xlane.f32.xlu0 %v1014
    %v1016 = vpop.xlane.xlu0 %1015
    %v1017 = vsub.f32 %v1013, %v1016
    %v1018 = vmul.f32 %v1017, 1.442695
    %v1019 = vpow.pop %v1018
    %v1020 = vsel %vm782, %v1019, 0.0
    %1021 = vadd.xlane.f32.xlu0 %v1020
    %v1022 = vpop.xlane.xlu0 %1021
    %v1023 = vrcp.pop %v1022
    %v1024 = vmul.f32 %v1019, %v1023
    %v1025 = vpack.c.bf16 %v1024, %v1024
    %1026 = vrot.lane.b32.xlu0 %v730, 48
    %v1027 = vpop.permute.xlu0 %1026
    %v1029 = vsel %vm797, %v1025, 0
    %v1032 = vand.u32 %v1027, %v804
    %1034 = vmatprep.subr.bf16.mxu0 0
    %1035 = vmatpush1.bf16.msra.mxu0 0
    %1036 = vmatprep.subr.bf16.mxu0 0
    %1037 = vmatpush1.bf16.msra.mxu0 0
    %1038 = vmatprep.subr.bf16.mxu0 0
    %1039 = vmatpush1.bf16.msra.mxu0 0
    %1040 = vmatprep.subr.bf16.mxu0 0
    %1041 = vmatpush1.bf16.msra.mxu0 0
    %1042 = vmatprep.subr.bf16.mxu0 0
    %1043 = vmatpush1.bf16.msra.mxu0 0
    %1044 = vmatprep.subr.bf16.mxu0 0
    %1045 = vmatpush1.bf16.msra.mxu0 0
    %1046 = vmatprep.subr.bf16.mxu0 0
    %1047 = vmatpush1.bf16.msra.mxu0 0
    %1048 = vmatprep.subr.bf16.mxu0 0
    %1049 = vmatpush1.bf16.msra.mxu0 %v1032
    %1050 = vmatprep.subr.bf16.mxu0 0
    %1051 = vmatpush2.bf16.msra.mxu0 0
    %1052 = vmatprep.subr.bf16.mxu0 0
    %1053 = vmatpush2.bf16.msra.mxu0 0
    %1054 = vmatprep.subr.bf16.mxu0 0
    %1055 = vmatpush2.bf16.msra.mxu0 0
    %1056 = vmatprep.subr.bf16.mxu0 0
    %1057 = vmatpush2.bf16.msra.mxu0 0
    %1058 = vmatprep.subr.bf16.mxu0 0
    %1059 = vmatpush2.bf16.msra.mxu0 0
    %1060 = vmatprep.subr.bf16.mxu0 0
    %1061 = vmatpush2.bf16.msra.mxu0 0
    %1062 = vmatprep.subr.bf16.mxu0 0
    %1063 = vmatpush2.bf16.msra.mxu0 0
    %1064 = vmatprep.subr.bf16.mxu0 0
    %1065 = vmatpush2.bf16.msra.mxu0 0
    %1066 = vmatprep.mubr.bf16.mxu0 0
    %1067 = vmatmul.mubr.bf16.gmra.mxu0 %v1029
    %v1068 = vpop.f32.mrf.mxu0
    %v1069 = vadd.f32 0.0, %v1068
    %v1070 = vpop.f32.mrf.mxu0
    %v1071 = vpop.f32.mrf.mxu0
    %v1072 = vpop.f32.mrf.mxu0
    %1073 = vdwg.mxu0
    %s1074 = scalar_lea.vmem [#allocation3], 32
    %1075 = vst.msk [vmem:[%s1074] sm:$0x1f] %vm848, %v1069
    %1076 = vrot.lane.b32.xlu0 %v730, 104
    %v1077 = vpop.permute.xlu0 %1076
    %1078 = vrot.lane.b32.xlu0 %v730, 72
    %v1079 = vpop.permute.xlu0 %1078
    %v1081 = vsel %vm734, %v1077, 0
    %v1084 = vsel %vm734, %v1079, 0
    %1086 = vmatprep.subr.bf16.mxu0 0
    %1087 = vmatpush1.bf16.xpose.msra.mxu0 0
    %1088 = vmatprep.subr.bf16.mxu0 0
    %1089 = vmatpush1.bf16.xpose.msra.mxu0 0
    %1090 = vmatprep.subr.bf16.mxu0 0
    %1091 = vmatpush1.bf16.xpose.msra.mxu0 0
    %1092 = vmatprep.subr.bf16.mxu0 0
    %1093 = vmatpush1.bf16.xpose.msra.mxu0 0
    %1094 = vmatprep.subr.bf16.mxu0 0
    %1095 = vmatpush1.bf16.xpose.msra.mxu0 0
    %1096 = vmatprep.subr.bf16.mxu0 0
    %1097 = vmatpush1.bf16.xpose.msra.mxu0 0
    %1098 = vmatprep.subr.bf16.mxu0 0
    %1099 = vmatpush1.bf16.xpose.msra.mxu0 0
    %1100 = vmatprep.subr.bf16.mxu0 0
    %1101 = vmatpush1.bf16.xpose.msra.mxu0 %v1084
    %1102 = vmatprep.subr.bf16.mxu0 0
    %1103 = vmatpush2.bf16.xpose.msra.mxu0 0
    %1104 = vmatprep.subr.bf16.mxu0 0
    %1105 = vmatpush2.bf16.xpose.msra.mxu0 0
    %1106 = vmatprep.subr.bf16.mxu0 0
    %1107 = vmatpush2.bf16.xpose.msra.mxu0 0
    %1108 = vmatprep.subr.bf16.mxu0 0
    %1109 = vmatpush2.bf16.xpose.msra.mxu0 0
    %1110 = vmatprep.subr.bf16.mxu0 0
    %1111 = vmatpush2.bf16.xpose.msra.mxu0 0
    %1112 = vmatprep.subr.bf16.mxu0 0
    %1113 = vmatpush2.bf16.xpose.msra.mxu0 0
    %1114 = vmatprep.subr.bf16.mxu0 0
    %1115 = vmatpush2.bf16.xpose.msra.mxu0 0
    %1116 = vmatprep.subr.bf16.mxu0 0
    %1117 = vmatpush2.bf16.xpose.msra.mxu0 0
    %1118 = vmatprep.mubr.bf16.mxu0 0
    %1119 = vmatmul.mubr.bf16.gmra.mxu0 %v1081
    %v1120 = vpop.f32.mrf.mxu0
    %v1121 = vadd.f32 0.0, %v1120
    %v1122 = vpop.f32.mrf.mxu0
    %v1123 = vpop.f32.mrf.mxu0
    %v1124 = vpop.f32.mrf.mxu0
    %1125 = vdwg.mxu0
    %v1126 = vmul.f32 %v1121, 0.35355338
    %v1127 = vsel %vm782, %v1126, -inf
    %1128 = vmax.xlane.f32.xlu0 %v1127
    %v1129 = vpop.xlane.xlu0 %1128
    %v1130 = vsub.f32 %v1126, %v1129
    %v1131 = vmul.f32 %v1130, 1.442695
    %v1132 = vpow.pop %v1131
    %v1133 = vsel %vm782, %v1132, 0.0
    %1134 = vadd.xlane.f32.xlu0 %v1133
    %v1135 = vpop.xlane.xlu0 %1134
    %v1136 = vrcp.pop %v1135
    %v1137 = vmul.f32 %v1132, %v1136
    %v1138 = vpack.c.bf16 %v1137, %v1137
    %1139 = vrot.lane.b32.xlu0 %v730, 40
    %v1140 = vpop.permute.xlu0 %1139
    %v1142 = vsel %vm797, %v1138, 0
    %v1145 = vand.u32 %v1140, %v804
    %1147 = vmatprep.subr.bf16.mxu0 0
    %1148 = vmatpush1.bf16.msra.mxu0 0
    %1149 = vmatprep.subr.bf16.mxu0 0
    %1150 = vmatpush1.bf16.msra.mxu0 0
    %1151 = vmatprep.subr.bf16.mxu0 0
    %1152 = vmatpush1.bf16.msra.mxu0 0
    %1153 = vmatprep.subr.bf16.mxu0 0
    %1154 = vmatpush1.bf16.msra.mxu0 0
    %1155 = vmatprep.subr.bf16.mxu0 0
    %1156 = vmatpush1.bf16.msra.mxu0 0
    %1157 = vmatprep.subr.bf16.mxu0 0
    %1158 = vmatpush1.bf16.msra.mxu0 0
    %1159 = vmatprep.subr.bf16.mxu0 0
    %1160 = vmatpush1.bf16.msra.mxu0 0
    %1161 = vmatprep.subr.bf16.mxu0 0
    %1162 = vmatpush1.bf16.msra.mxu0 %v1145
    %1163 = vmatprep.subr.bf16.mxu0 0
    %1164 = vmatpush2.bf16.msra.mxu0 0
    %1165 = vmatprep.subr.bf16.mxu0 0
    %1166 = vmatpush2.bf16.msra.mxu0 0
    %1167 = vmatprep.subr.bf16.mxu0 0
    %1168 = vmatpush2.bf16.msra.mxu0 0
    %1169 = vmatprep.subr.bf16.mxu0 0
    %1170 = vmatpush2.bf16.msra.mxu0 0
    %1171 = vmatprep.subr.bf16.mxu0 0
    %1172 = vmatpush2.bf16.msra.mxu0 0
    %1173 = vmatprep.subr.bf16.mxu0 0
    %1174 = vmatpush2.bf16.msra.mxu0 0
    %1175 = vmatprep.subr.bf16.mxu0 0
    %1176 = vmatpush2.bf16.msra.mxu0 0
    %1177 = vmatprep.subr.bf16.mxu0 0
    %1178 = vmatpush2.bf16.msra.mxu0 0
    %1179 = vmatprep.mubr.bf16.mxu0 0
    %1180 = vmatmul.mubr.bf16.gmra.mxu0 %v1142
    %v1181 = vpop.f32.mrf.mxu0
    %v1182 = vadd.f32 0.0, %v1181
    %v1183 = vpop.f32.mrf.mxu0
    %v1184 = vpop.f32.mrf.mxu0
    %v1185 = vpop.f32.mrf.mxu0
    %1186 = vdwg.mxu0
    %s1187 = scalar_lea.vmem [#allocation3], 48
    %1188 = vst.msk [vmem:[%s1187] sm:$0x1f] %vm848, %v1182
    %v1189 = vpack.c.bf16 %v727, %v724
    %v1191 = vshrl.u32 %v1189, 16
    %v1193 = vrot.slane %v1191, 2
    %v1194 = vshll.u32 %v1189, 16
    %v1196 = vrot.slane %v1194, 3
    %v1197 = vor.u32 %v1193, %v1196
    %1198 = vrot.lane.b32.xlu0 %v1197, 96
    %v1199 = vpop.permute.xlu0 %1198
    %v1201 = vsel %vm734, %v1197, 0
    %v1204 = vsel %vm734, %v1199, 0
    %1206 = vmatprep.subr.bf16.mxu0 0
    %1207 = vmatpush1.bf16.xpose.msra.mxu0 0
    %1208 = vmatprep.subr.bf16.mxu0 0
    %1209 = vmatpush1.bf16.xpose.msra.mxu0 0
    %1210 = vmatprep.subr.bf16.mxu0 0
    %1211 = vmatpush1.bf16.xpose.msra.mxu0 0
    %1212 = vmatprep.subr.bf16.mxu0 0
    %1213 = vmatpush1.bf16.xpose.msra.mxu0 0
    %1214 = vmatprep.subr.bf16.mxu0 0
    %1215 = vmatpush1.bf16.xpose.msra.mxu0 0
    %1216 = vmatprep.subr.bf16.mxu0 0
    %1217 = vmatpush1.bf16.xpose.msra.mxu0 0
    %1218 = vmatprep.subr.bf16.mxu0 0
    %1219 = vmatpush1.bf16.xpose.msra.mxu0 0
    %1220 = vmatprep.subr.bf16.mxu0 0
    %1221 = vmatpush1.bf16.xpose.msra.mxu0 %v1204
    %1222 = vmatprep.subr.bf16.mxu0 0
    %1223 = vmatpush2.bf16.xpose.msra.mxu0 0
    %1224 = vmatprep.subr.bf16.mxu0 0
    %1225 = vmatpush2.bf16.xpose.msra.mxu0 0
    %1226 = vmatprep.subr.bf16.mxu0 0
    %1227 = vmatpush2.bf16.xpose.msra.mxu0 0
    %1228 = vmatprep.subr.bf16.mxu0 0
    %1229 = vmatpush2.bf16.xpose.msra.mxu0 0
    %1230 = vmatprep.subr.bf16.mxu0 0
    %1231 = vmatpush2.bf16.xpose.msra.mxu0 0
    %1232 = vmatprep.subr.bf16.mxu0 0
    %1233 = vmatpush2.bf16.xpose.msra.mxu0 0
    %1234 = vmatprep.subr.bf16.mxu0 0
    %1235 = vmatpush2.bf16.xpose.msra.mxu0 0
    %1236 = vmatprep.subr.bf16.mxu0 0
    %1237 = vmatpush2.bf16.xpose.msra.mxu0 0
    %1238 = vmatprep.mubr.bf16.mxu0 0
    %1239 = vmatmul.mubr.bf16.gmra.mxu0 %v1201
    %v1240 = vpop.f32.mrf.mxu0
    %v1241 = vadd.f32 0.0, %v1240
    %v1242 = vpop.f32.mrf.mxu0
    %v1243 = vpop.f32.mrf.mxu0
    %v1244 = vpop.f32.mrf.mxu0
    %1245 = vdwg.mxu0
    %v1246 = vmul.f32 %v1241, 0.35355338
    %v1247 = vsel %vm782, %v1246, -inf
    %1248 = vmax.xlane.f32.xlu0 %v1247
    %v1249 = vpop.xlane.xlu0 %1248
    %v1250 = vsub.f32 %v1246, %v1249
    %v1251 = vmul.f32 %v1250, 1.442695
    %v1252 = vpow.pop %v1251
    %v1253 = vsel %vm782, %v1252, 0.0
    %1254 = vadd.xlane.f32.xlu0 %v1253
    %v1255 = vpop.xlane.xlu0 %1254
    %v1256 = vrcp.pop %v1255
    %v1257 = vmul.f32 %v1252, %v1256
    %v1258 = vpack.c.bf16 %v1257, %v1257
    %1259 = vrot.lane.b32.xlu0 %v1197, 64
    %v1260 = vpop.permute.xlu0 %1259
    %v1262 = vsel %vm797, %v1258, 0
    %v1265 = vand.u32 %v1260, %v804
    %1267 = vmatprep.subr.bf16.mxu0 0
    %1268 = vmatpush1.bf16.msra.mxu0 0
    %1269 = vmatprep.subr.bf16.mxu0 0
    %1270 = vmatpush1.bf16.msra.mxu0 0
    %1271 = vmatprep.subr.bf16.mxu0 0
    %1272 = vmatpush1.bf16.msra.mxu0 0
    %1273 = vmatprep.subr.bf16.mxu0 0
    %1274 = vmatpush1.bf16.msra.mxu0 0
    %1275 = vmatprep.subr.bf16.mxu0 0
    %1276 = vmatpush1.bf16.msra.mxu0 0
    %1277 = vmatprep.subr.bf16.mxu0 0
    %1278 = vmatpush1.bf16.msra.mxu0 0
    %1279 = vmatprep.subr.bf16.mxu0 0
    %1280 = vmatpush1.bf16.msra.mxu0 0
    %1281 = vmatprep.subr.bf16.mxu0 0
    %1282 = vmatpush1.bf16.msra.mxu0 %v1265
    %1283 = vmatprep.subr.bf16.mxu0 0
    %1284 = vmatpush2.bf16.msra.mxu0 0
    %1285 = vmatprep.subr.bf16.mxu0 0
    %1286 = vmatpush2.bf16.msra.mxu0 0
    %1287 = vmatprep.subr.bf16.mxu0 0
    %1288 = vmatpush2.bf16.msra.mxu0 0
    %1289 = vmatprep.subr.bf16.mxu0 0
    %1290 = vmatpush2.bf16.msra.mxu0 0
    %1291 = vmatprep.subr.bf16.mxu0 0
    %1292 = vmatpush2.bf16.msra.mxu0 0
    %1293 = vmatprep.subr.bf16.mxu0 0
    %1294 = vmatpush2.bf16.msra.mxu0 0
    %1295 = vmatprep.subr.bf16.mxu0 0
    %1296 = vmatpush2.bf16.msra.mxu0 0
    %1297 = vmatprep.subr.bf16.mxu0 0
    %1298 = vmatpush2.bf16.msra.mxu0 0
    %1299 = vmatprep.mubr.bf16.mxu0 0
    %1300 = vmatmul.mubr.bf16.gmra.mxu0 %v1262
    %v1301 = vpop.f32.mrf.mxu0
    %v1302 = vadd.f32 0.0, %v1301
    %v1303 = vpop.f32.mrf.mxu0
    %v1304 = vpop.f32.mrf.mxu0
    %v1305 = vpop.f32.mrf.mxu0
    %1306 = vdwg.mxu0
    %1307 = vst.msk [vmem:[#allocation3 + $0x5] sm:$0x1f] %vm848, %v1302
    %1308 = vrot.lane.b32.xlu0 %v1197, 120
    %v1309 = vpop.permute.xlu0 %1308
    %1310 = vrot.lane.b32.xlu0 %v1197, 88
    %v1311 = vpop.permute.xlu0 %1310
    %v1313 = vsel %vm734, %v1309, 0
    %v1316 = vsel %vm734, %v1311, 0
    %1318 = vmatprep.subr.bf16.mxu0 0
    %1319 = vmatpush1.bf16.xpose.msra.mxu0 0
    %1320 = vmatprep.subr.bf16.mxu0 0
    %1321 = vmatpush1.bf16.xpose.msra.mxu0 0
    %1322 = vmatprep.subr.bf16.mxu0 0
    %1323 = vmatpush1.bf16.xpose.msra.mxu0 0
    %1324 = vmatprep.subr.bf16.mxu0 0
    %1325 = vmatpush1.bf16.xpose.msra.mxu0 0
    %1326 = vmatprep.subr.bf16.mxu0 0
    %1327 = vmatpush1.bf16.xpose.msra.mxu0 0
    %1328 = vmatprep.subr.bf16.mxu0 0
    %1329 = vmatpush1.bf16.xpose.msra.mxu0 0
    %1330 = vmatprep.subr.bf16.mxu0 0
    %1331 = vmatpush1.bf16.xpose.msra.mxu0 0
    %1332 = vmatprep.subr.bf16.mxu0 0
    %1333 = vmatpush1.bf16.xpose.msra.mxu0 %v1316
    %1334 = vmatprep.subr.bf16.mxu0 0
    %1335 = vmatpush2.bf16.xpose.msra.mxu0 0
    %1336 = vmatprep.subr.bf16.mxu0 0
    %1337 = vmatpush2.bf16.xpose.msra.mxu0 0
    %1338 = vmatprep.subr.bf16.mxu0 0
    %1339 = vmatpush2.bf16.xpose.msra.mxu0 0
    %1340 = vmatprep.subr.bf16.mxu0 0
    %1341 = vmatpush2.bf16.xpose.msra.mxu0 0
    %1342 = vmatprep.subr.bf16.mxu0 0
    %1343 = vmatpush2.bf16.xpose.msra.mxu0 0
    %1344 = vmatprep.subr.bf16.mxu0 0
    %1345 = vmatpush2.bf16.xpose.msra.mxu0 0
    %1346 = vmatprep.subr.bf16.mxu0 0
    %1347 = vmatpush2.bf16.xpose.msra.mxu0 0
    %1348 = vmatprep.subr.bf16.mxu0 0
    %1349 = vmatpush2.bf16.xpose.msra.mxu0 0
    %1350 = vmatprep.mubr.bf16.mxu0 0
    %1351 = vmatmul.mubr.bf16.gmra.mxu0 %v1313
    %v1352 = vpop.f32.mrf.mxu0
    %v1353 = vadd.f32 0.0, %v1352
    %v1354 = vpop.f32.mrf.mxu0
    %v1355 = vpop.f32.mrf.mxu0
    %v1356 = vpop.f32.mrf.mxu0
    %1357 = vdwg.mxu0
    %v1358 = vmul.f32 %v1353, 0.35355338
    %v1359 = vsel %vm782, %v1358, -inf
    %1360 = vmax.xlane.f32.xlu0 %v1359
    %v1361 = vpop.xlane.xlu0 %1360
    %v1362 = vsub.f32 %v1358, %v1361
    %v1363 = vmul.f32 %v1362, 1.442695
    %v1364 = vpow.pop %v1363
    %v1365 = vsel %vm782, %v1364, 0.0
    %1366 = vadd.xlane.f32.xlu0 %v1365
    %v1367 = vpop.xlane.xlu0 %1366
    %v1368 = vrcp.pop %v1367
    %v1369 = vmul.f32 %v1364, %v1368
    %v1370 = vpack.c.bf16 %v1369, %v1369
    %1371 = vrot.lane.b32.xlu0 %v1197, 56
    %v1372 = vpop.permute.xlu0 %1371
    %v1374 = vsel %vm797, %v1370, 0
    %v1377 = vand.u32 %v1372, %v804
    %1379 = vmatprep.subr.bf16.mxu0 0
    %1380 = vmatpush1.bf16.msra.mxu0 0
    %1381 = vmatprep.subr.bf16.mxu0 0
    %1382 = vmatpush1.bf16.msra.mxu0 0
    %1383 = vmatprep.subr.bf16.mxu0 0
    %1384 = vmatpush1.bf16.msra.mxu0 0
    %1385 = vmatprep.subr.bf16.mxu0 0
    %1386 = vmatpush1.bf16.msra.mxu0 0
    %1387 = vmatprep.subr.bf16.mxu0 0
    %1388 = vmatpush1.bf16.msra.mxu0 0
    %1389 = vmatprep.subr.bf16.mxu0 0
    %1390 = vmatpush1.bf16.msra.mxu0 0
    %1391 = vmatprep.subr.bf16.mxu0 0
    %1392 = vmatpush1.bf16.msra.mxu0 0
    %1393 = vmatprep.subr.bf16.mxu0 0
    %1394 = vmatpush1.bf16.msra.mxu0 %v1377
    %1395 = vmatprep.subr.bf16.mxu0 0
    %1396 = vmatpush2.bf16.msra.mxu0 0
    %1397 = vmatprep.subr.bf16.mxu0 0
    %1398 = vmatpush2.bf16.msra.mxu0 0
    %1399 = vmatprep.subr.bf16.mxu0 0
    %1400 = vmatpush2.bf16.msra.mxu0 0
    %1401 = vmatprep.subr.bf16.mxu0 0
    %1402 = vmatpush2.bf16.msra.mxu0 0
    %1403 = vmatprep.subr.bf16.mxu0 0
    %1404 = vmatpush2.bf16.msra.mxu0 0
    %1405 = vmatprep.subr.bf16.mxu0 0
    %1406 = vmatpush2.bf16.msra.mxu0 0
    %1407 = vmatprep.subr.bf16.mxu0 0
    %1408 = vmatpush2.bf16.msra.mxu0 0
    %1409 = vmatprep.subr.bf16.mxu0 0
    %1410 = vmatpush2.bf16.msra.mxu0 0
    %1411 = vmatprep.mubr.bf16.mxu0 0
    %1412 = vmatmul.mubr.bf16.gmra.mxu0 %v1374
    %v1413 = vpop.f32.mrf.mxu0
    %v1414 = vadd.f32 0.0, %v1413
    %v1415 = vpop.f32.mrf.mxu0
    %v1416 = vpop.f32.mrf.mxu0
    %v1417 = vpop.f32.mrf.mxu0
    %1418 = vdwg.mxu0
    %1419 = vst.msk [vmem:[%s961 + $0x5] sm:$0x1f] %vm848, %v1414
    %1420 = vrot.lane.b32.xlu0 %v1197, 112
    %v1421 = vpop.permute.xlu0 %1420
    %1422 = vrot.lane.b32.xlu0 %v1197, 80
    %v1423 = vpop.permute.xlu0 %1422
    %v1425 = vsel %vm734, %v1421, 0
    %v1428 = vsel %vm734, %v1423, 0
    %1430 = vmatprep.subr.bf16.mxu0 0
    %1431 = vmatpush1.bf16.xpose.msra.mxu0 0
    %1432 = vmatprep.subr.bf16.mxu0 0
    %1433 = vmatpush1.bf16.xpose.msra.mxu0 0
    %1434 = vmatprep.subr.bf16.mxu0 0
    %1435 = vmatpush1.bf16.xpose.msra.mxu0 0
    %1436 = vmatprep.subr.bf16.mxu0 0
    %1437 = vmatpush1.bf16.xpose.msra.mxu0 0
    %1438 = vmatprep.subr.bf16.mxu0 0
    %1439 = vmatpush1.bf16.xpose.msra.mxu0 0
    %1440 = vmatprep.subr.bf16.mxu0 0
    %1441 = vmatpush1.bf16.xpose.msra.mxu0 0
    %1442 = vmatprep.subr.bf16.mxu0 0
    %1443 = vmatpush1.bf16.xpose.msra.mxu0 0
    %1444 = vmatprep.subr.bf16.mxu0 0
    %1445 = vmatpush1.bf16.xpose.msra.mxu0 %v1428
    %1446 = vmatprep.subr.bf16.mxu0 0
    %1447 = vmatpush2.bf16.xpose.msra.mxu0 0
    %1448 = vmatprep.subr.bf16.mxu0 0
    %1449 = vmatpush2.bf16.xpose.msra.mxu0 0
    %1450 = vmatprep.subr.bf16.mxu0 0
    %1451 = vmatpush2.bf16.xpose.msra.mxu0 0
    %1452 = vmatprep.subr.bf16.mxu0 0
    %1453 = vmatpush2.bf16.xpose.msra.mxu0 0
    %1454 = vmatprep.subr.bf16.mxu0 0
    %1455 = vmatpush2.bf16.xpose.msra.mxu0 0
    %1456 = vmatprep.subr.bf16.mxu0 0
    %1457 = vmatpush2.bf16.xpose.msra.mxu0 0
    %1458 = vmatprep.subr.bf16.mxu0 0
    %1459 = vmatpush2.bf16.xpose.msra.mxu0 0
    %1460 = vmatprep.subr.bf16.mxu0 0
    %1461 = vmatpush2.bf16.xpose.msra.mxu0 0
    %1462 = vmatprep.mubr.bf16.mxu0 0
    %1463 = vmatmul.mubr.bf16.gmra.mxu0 %v1425
    %v1464 = vpop.f32.mrf.mxu0
    %v1465 = vadd.f32 0.0, %v1464
    %v1466 = vpop.f32.mrf.mxu0
    %v1467 = vpop.f32.mrf.mxu0
    %v1468 = vpop.f32.mrf.mxu0
    %1469 = vdwg.mxu0
    %v1470 = vmul.f32 %v1465, 0.35355338
    %v1471 = vsel %vm782, %v1470, -inf
    %1472 = vmax.xlane.f32.xlu0 %v1471
    %v1473 = vpop.xlane.xlu0 %1472
    %v1474 = vsub.f32 %v1470, %v1473
    %v1475 = vmul.f32 %v1474, 1.442695
    %v1476 = vpow.pop %v1475
    %v1477 = vsel %vm782, %v1476, 0.0
    %1478 = vadd.xlane.f32.xlu0 %v1477
    %v1479 = vpop.xlane.xlu0 %1478
    %v1480 = vrcp.pop %v1479
    %v1481 = vmul.f32 %v1476, %v1480
    %v1482 = vpack.c.bf16 %v1481, %v1481
    %1483 = vrot.lane.b32.xlu0 %v1197, 48
    %v1484 = vpop.permute.xlu0 %1483
    %v1486 = vsel %vm797, %v1482, 0
    %v1489 = vand.u32 %v1484, %v804
    %1491 = vmatprep.subr.bf16.mxu0 0
    %1492 = vmatpush1.bf16.msra.mxu0 0
    %1493 = vmatprep.subr.bf16.mxu0 0
    %1494 = vmatpush1.bf16.msra.mxu0 0
    %1495 = vmatprep.subr.bf16.mxu0 0
    %1496 = vmatpush1.bf16.msra.mxu0 0
    %1497 = vmatprep.subr.bf16.mxu0 0
    %1498 = vmatpush1.bf16.msra.mxu0 0
    %1499 = vmatprep.subr.bf16.mxu0 0
    %1500 = vmatpush1.bf16.msra.mxu0 0
    %1501 = vmatprep.subr.bf16.mxu0 0
    %1502 = vmatpush1.bf16.msra.mxu0 0
    %1503 = vmatprep.subr.bf16.mxu0 0
    %1504 = vmatpush1.bf16.msra.mxu0 0
    %1505 = vmatprep.subr.bf16.mxu0 0
    %1506 = vmatpush1.bf16.msra.mxu0 %v1489
    %1507 = vmatprep.subr.bf16.mxu0 0
    %1508 = vmatpush2.bf16.msra.mxu0 0
    %1509 = vmatprep.subr.bf16.mxu0 0
    %1510 = vmatpush2.bf16.msra.mxu0 0
    %1511 = vmatprep.subr.bf16.mxu0 0
    %1512 = vmatpush2.bf16.msra.mxu0 0
    %1513 = vmatprep.subr.bf16.mxu0 0
    %1514 = vmatpush2.bf16.msra.mxu0 0
    %1515 = vmatprep.subr.bf16.mxu0 0
    %1516 = vmatpush2.bf16.msra.mxu0 0
    %1517 = vmatprep.subr.bf16.mxu0 0
    %1518 = vmatpush2.bf16.msra.mxu0 0
    %1519 = vmatprep.subr.bf16.mxu0 0
    %1520 = vmatpush2.bf16.msra.mxu0 0
    %1521 = vmatprep.subr.bf16.mxu0 0
    %1522 = vmatpush2.bf16.msra.mxu0 0
    %1523 = vmatprep.mubr.bf16.mxu0 0
    %1524 = vmatmul.mubr.bf16.gmra.mxu0 %v1486
    %v1525 = vpop.f32.mrf.mxu0
    %v1526 = vadd.f32 0.0, %v1525
    %v1527 = vpop.f32.mrf.mxu0
    %v1528 = vpop.f32.mrf.mxu0
    %v1529 = vpop.f32.mrf.mxu0
    %1530 = vdwg.mxu0
    %1531 = vst.msk [vmem:[%s1074 + $0x5] sm:$0x1f] %vm848, %v1526
    %1532 = vrot.lane.b32.xlu0 %v1197, 104
    %v1533 = vpop.permute.xlu0 %1532
    %1534 = vrot.lane.b32.xlu0 %v1197, 72
    %v1535 = vpop.permute.xlu0 %1534
    %v1537 = vsel %vm734, %v1533, 0
    %v1540 = vsel %vm734, %v1535, 0
    %1542 = vmatprep.subr.bf16.mxu0 0
    %1543 = vmatpush1.bf16.xpose.msra.mxu0 0
    %1544 = vmatprep.subr.bf16.mxu0 0
    %1545 = vmatpush1.bf16.xpose.msra.mxu0 0
    %1546 = vmatprep.subr.bf16.mxu0 0
    %1547 = vmatpush1.bf16.xpose.msra.mxu0 0
    %1548 = vmatprep.subr.bf16.mxu0 0
    %1549 = vmatpush1.bf16.xpose.msra.mxu0 0
    %1550 = vmatprep.subr.bf16.mxu0 0
    %1551 = vmatpush1.bf16.xpose.msra.mxu0 0
    %1552 = vmatprep.subr.bf16.mxu0 0
    %1553 = vmatpush1.bf16.xpose.msra.mxu0 0
    %1554 = vmatprep.subr.bf16.mxu0 0
    %1555 = vmatpush1.bf16.xpose.msra.mxu0 0
    %1556 = vmatprep.subr.bf16.mxu0 0
    %1557 = vmatpush1.bf16.xpose.msra.mxu0 %v1540
    %1558 = vmatprep.subr.bf16.mxu0 0
    %1559 = vmatpush2.bf16.xpose.msra.mxu0 0
    %1560 = vmatprep.subr.bf16.mxu0 0
    %1561 = vmatpush2.bf16.xpose.msra.mxu0 0
    %1562 = vmatprep.subr.bf16.mxu0 0
    %1563 = vmatpush2.bf16.xpose.msra.mxu0 0
    %1564 = vmatprep.subr.bf16.mxu0 0
    %1565 = vmatpush2.bf16.xpose.msra.mxu0 0
    %1566 = vmatprep.subr.bf16.mxu0 0
    %1567 = vmatpush2.bf16.xpose.msra.mxu0 0
    %1568 = vmatprep.subr.bf16.mxu0 0
    %1569 = vmatpush2.bf16.xpose.msra.mxu0 0
    %1570 = vmatprep.subr.bf16.mxu0 0
    %1571 = vmatpush2.bf16.xpose.msra.mxu0 0
    %1572 = vmatprep.subr.bf16.mxu0 0
    %1573 = vmatpush2.bf16.xpose.msra.mxu0 0
    %1574 = vmatprep.mubr.bf16.mxu0 0
    %1575 = vmatmul.mubr.bf16.gmra.mxu0 %v1537
    %v1576 = vpop.f32.mrf.mxu0
    %v1577 = vadd.f32 0.0, %v1576
    %v1578 = vpop.f32.mrf.mxu0
    %v1579 = vpop.f32.mrf.mxu0
    %v1580 = vpop.f32.mrf.mxu0
    %1581 = vdwg.mxu0
    %v1582 = vmul.f32 %v1577, 0.35355338
    %v1583 = vsel %vm782, %v1582, -inf
    %1584 = vmax.xlane.f32.xlu0 %v1583
    %v1585 = vpop.xlane.xlu0 %1584
    %v1586 = vsub.f32 %v1582, %v1585
    %v1587 = vmul.f32 %v1586, 1.442695
    %v1588 = vpow.pop %v1587
    %v1589 = vsel %vm782, %v1588, 0.0
    %1590 = vadd.xlane.f32.xlu0 %v1589
    %v1591 = vpop.xlane.xlu0 %1590
    %v1592 = vrcp.pop %v1591
    %v1593 = vmul.f32 %v1588, %v1592
    %v1594 = vpack.c.bf16 %v1593, %v1593
    %1595 = vrot.lane.b32.xlu0 %v1197, 40
    %v1596 = vpop.permute.xlu0 %1595
    %v1598 = vsel %vm797, %v1594, 0
    %v1601 = vand.u32 %v1596, %v804
    %1603 = vmatprep.subr.bf16.mxu0 0
    %1604 = vmatpush1.bf16.msra.mxu0 0
    %1605 = vmatprep.subr.bf16.mxu0 0
    %1606 = vmatpush1.bf16.msra.mxu0 0
    %1607 = vmatprep.subr.bf16.mxu0 0
    %1608 = vmatpush1.bf16.msra.mxu0 0
    %1609 = vmatprep.subr.bf16.mxu0 0
    %1610 = vmatpush1.bf16.msra.mxu0 0
    %1611 = vmatprep.subr.bf16.mxu0 0
    %1612 = vmatpush1.bf16.msra.mxu0 0
    %1613 = vmatprep.subr.bf16.mxu0 0
    %1614 = vmatpush1.bf16.msra.mxu0 0
    %1615 = vmatprep.subr.bf16.mxu0 0
    %1616 = vmatpush1.bf16.msra.mxu0 0
    %1617 = vmatprep.subr.bf16.mxu0 0
    %1618 = vmatpush1.bf16.msra.mxu0 %v1601
    %1619 = vmatprep.subr.bf16.mxu0 0
    %1620 = vmatpush2.bf16.msra.mxu0 0
    %1621 = vmatprep.subr.bf16.mxu0 0
    %1622 = vmatpush2.bf16.msra.mxu0 0
    %1623 = vmatprep.subr.bf16.mxu0 0
    %1624 = vmatpush2.bf16.msra.mxu0 0
    %1625 = vmatprep.subr.bf16.mxu0 0
    %1626 = vmatpush2.bf16.msra.mxu0 0
    %1627 = vmatprep.subr.bf16.mxu0 0
    %1628 = vmatpush2.bf16.msra.mxu0 0
    %1629 = vmatprep.subr.bf16.mxu0 0
    %1630 = vmatpush2.bf16.msra.mxu0 0
    %1631 = vmatprep.subr.bf16.mxu0 0
    %1632 = vmatpush2.bf16.msra.mxu0 0
    %1633 = vmatprep.subr.bf16.mxu0 0
    %1634 = vmatpush2.bf16.msra.mxu0 0
    %1635 = vmatprep.mubr.bf16.mxu0 0
    %1636 = vmatmul.mubr.bf16.gmra.mxu0 %v1598
    %v1637 = vpop.f32.mrf.mxu0
    %v1638 = vadd.f32 0.0, %v1637
    %v1639 = vpop.f32.mrf.mxu0
    %v1640 = vpop.f32.mrf.mxu0
    %v1641 = vpop.f32.mrf.mxu0
    %1642 = vdwg.mxu0
    %1643 = vst.msk [vmem:[%s1187 + $0x5] sm:$0x1f] %vm848, %v1638
    %v1644 = vld [vmem:[%s10] sm:$0x1]
    %v1645 = vld [vmem:[#allocation3] sm:$0xff]
    %v1646 = vld [vmem:[#allocation3 + $0x8] sm:$0x3]
    %v1647 = vld [vmem:[%s9] sm:$0xf]
    %v1648 = vpack.c.bf16 %v1646, %v1645
    %v1650 = vsel %vm734, %v1648, 0
    %vm1652 = vcmask 1043456
    %v1654 = vsel %vm1652, %v1647, 0
    %1656 = vmatprep.subr.bf16.mxu0 0
    %1657 = vmatpush1.bf16.msra.mxu0 0
    %1658 = vmatprep.subr.bf16.mxu0 0
    %1659 = vmatpush1.bf16.msra.mxu0 0
    %1660 = vmatprep.subr.bf16.mxu0 0
    %1661 = vmatpush1.bf16.msra.mxu0 0
    %1662 = vmatprep.subr.bf16.mxu0 0
    %1663 = vmatpush1.bf16.msra.mxu0 0
    %1664 = vmatprep.subr.bf16.mxu0 0
    %1665 = vmatpush1.bf16.msra.mxu0 0
    %1666 = vmatprep.subr.bf16.mxu0 0
    %1667 = vmatpush1.bf16.msra.mxu0 0
    %1668 = vmatprep.subr.bf16.mxu0 0
    %1669 = vmatpush1.bf16.msra.mxu0 0
    %1670 = vmatprep.subr.bf16.mxu0 0
    %1671 = vmatpush1.bf16.msra.mxu0 %v1654
    %1672 = vmatprep.subr.bf16.mxu0 0
    %1673 = vmatpush2.bf16.msra.mxu0 0
    %1674 = vmatprep.subr.bf16.mxu0 0
    %1675 = vmatpush2.bf16.msra.mxu0 0
    %1676 = vmatprep.subr.bf16.mxu0 0
    %1677 = vmatpush2.bf16.msra.mxu0 0
    %1678 = vmatprep.subr.bf16.mxu0 0
    %1679 = vmatpush2.bf16.msra.mxu0 0
    %1680 = vmatprep.subr.bf16.mxu0 0
    %1681 = vmatpush2.bf16.msra.mxu0 0
    %1682 = vmatprep.subr.bf16.mxu0 0
    %1683 = vmatpush2.bf16.msra.mxu0 0
    %1684 = vmatprep.subr.bf16.mxu0 0
    %1685 = vmatpush2.bf16.msra.mxu0 0
    %1686 = vmatprep.subr.bf16.mxu0 0
    %1687 = vmatpush2.bf16.msra.mxu0 0
    %1688 = vmatprep.mubr.bf16.mxu0 0
    %1689 = vmatmul.mubr.bf16.gmra.mxu0 %v1650
    %v1690 = vpop.f32.mrf.mxu0
    %v1691 = vadd.f32 0.0, %v1690
    %v1692 = vpop.f32.mrf.mxu0
    %v1693 = vpop.f32.mrf.mxu0
    %v1694 = vadd.f32 0.0, %v1693
    %v1695 = vpop.f32.mrf.mxu0
    %1696 = vdwg.mxu0
    %v1698 = vlaneseq
    %v1699 = vshrl.u32 %v1698, 7
    %v1700 = vsub.s32 0, %v1699
    %v1701 = vrot.slane %v1644, %v1700
    %v1703 = vadd.f32 %v1701, %v1691
    %v1704 = vadd.f32 %v1701, %v1694
    %v1705 = vld [vmem:[%s961] sm:$0xff]
    %v1706 = vld [vmem:[%s961 + $0x8] sm:$0x3]
    %v1707 = vld [vmem:[%s9 + $0x4] sm:$0xf]
    %v1708 = vpack.c.bf16 %v1706, %v1705
    %v1710 = vsel %vm734, %v1708, 0
    %v1713 = vsel %vm1652, %v1707, 0
    %1715 = vmatprep.subr.bf16.mxu0 0
    %1716 = vmatpush1.bf16.msra.mxu0 0
    %1717 = vmatprep.subr.bf16.mxu0 0
    %1718 = vmatpush1.bf16.msra.mxu0 0
    %1719 = vmatprep.subr.bf16.mxu0 0
    %1720 = vmatpush1.bf16.msra.mxu0 0
    %1721 = vmatprep.subr.bf16.mxu0 0
    %1722 = vmatpush1.bf16.msra.mxu0 0
    %1723 = vmatprep.subr.bf16.mxu0 0
    %1724 = vmatpush1.bf16.msra.mxu0 0
    %1725 = vmatprep.subr.bf16.mxu0 0
    %1726 = vmatpush1.bf16.msra.mxu0 0
    %1727 = vmatprep.subr.bf16.mxu0 0
    %1728 = vmatpush1.bf16.msra.mxu0 0
    %1729 = vmatprep.subr.bf16.mxu0 0
    %1730 = vmatpush1.bf16.msra.mxu0 %v1713
    %1731 = vmatprep.subr.bf16.mxu0 0
    %1732 = vmatpush2.bf16.msra.mxu0 0
    %1733 = vmatprep.subr.bf16.mxu0 0
    %1734 = vmatpush2.bf16.msra.mxu0 0
    %1735 = vmatprep.subr.bf16.mxu0 0
    %1736 = vmatpush2.bf16.msra.mxu0 0
    %1737 = vmatprep.subr.bf16.mxu0 0
    %1738 = vmatpush2.bf16.msra.mxu0 0
    %1739 = vmatprep.subr.bf16.mxu0 0
    %1740 = vmatpush2.bf16.msra.mxu0 0
    %1741 = vmatprep.subr.bf16.mxu0 0
    %1742 = vmatpush2.bf16.msra.mxu0 0
    %1743 = vmatprep.subr.bf16.mxu0 0
    %1744 = vmatpush2.bf16.msra.mxu0 0
    %1745 = vmatprep.subr.bf16.mxu0 0
    %1746 = vmatpush2.bf16.msra.mxu0 0
    %1747 = vmatprep.mubr.bf16.mxu0 0
    %1748 = vmatmul.mubr.bf16.gmra.mxu0 %v1710
    %v1749 = vpop.f32.mrf.mxu0
    %v1750 = vadd.f32 0.0, %v1749
    %v1751 = vpop.f32.mrf.mxu0
    %v1752 = vpop.f32.mrf.mxu0
    %v1753 = vadd.f32 0.0, %v1752
    %v1754 = vpop.f32.mrf.mxu0
    %1755 = vdwg.mxu0
    %v1756 = vadd.f32 %v1703, %v1750
    %v1757 = vadd.f32 %v1704, %v1753
    %v1758 = vld [vmem:[%s1074] sm:$0xff]
    %v1759 = vld [vmem:[%s1074 + $0x8] sm:$0x3]
    %v1760 = vld [vmem:[%s9 + $0x8] sm:$0xf]
    %v1761 = vpack.c.bf16 %v1759, %v1758
    %v1763 = vsel %vm734, %v1761, 0
    %v1766 = vsel %vm1652, %v1760, 0
    %1768 = vmatprep.subr.bf16.mxu0 0
    %1769 = vmatpush1.bf16.msra.mxu0 0
    %1770 = vmatprep.subr.bf16.mxu0 0
    %1771 = vmatpush1.bf16.msra.mxu0 0
    %1772 = vmatprep.subr.bf16.mxu0 0
    %1773 = vmatpush1.bf16.msra.mxu0 0
    %1774 = vmatprep.subr.bf16.mxu0 0
    %1775 = vmatpush1.bf16.msra.mxu0 0
    %1776 = vmatprep.subr.bf16.mxu0 0
    %1777 = vmatpush1.bf16.msra.mxu0 0
    %1778 = vmatprep.subr.bf16.mxu0 0
    %1779 = vmatpush1.bf16.msra.mxu0 0
    %1780 = vmatprep.subr.bf16.mxu0 0
    %1781 = vmatpush1.bf16.msra.mxu0 0
    %1782 = vmatprep.subr.bf16.mxu0 0
    %1783 = vmatpush1.bf16.msra.mxu0 %v1766
    %1784 = vmatprep.subr.bf16.mxu0 0
    %1785 = vmatpush2.bf16.msra.mxu0 0
    %1786 = vmatprep.subr.bf16.mxu0 0
    %1787 = vmatpush2.bf16.msra.mxu0 0
    %1788 = vmatprep.subr.bf16.mxu0 0
    %1789 = vmatpush2.bf16.msra.mxu0 0
    %1790 = vmatprep.subr.bf16.mxu0 0
    %1791 = vmatpush2.bf16.msra.mxu0 0
    %1792 = vmatprep.subr.bf16.mxu0 0
    %1793 = vmatpush2.bf16.msra.mxu0 0
    %1794 = vmatprep.subr.bf16.mxu0 0
    %1795 = vmatpush2.bf16.msra.mxu0 0
    %1796 = vmatprep.subr.bf16.mxu0 0
    %1797 = vmatpush2.bf16.msra.mxu0 0
    %1798 = vmatprep.subr.bf16.mxu0 0
    %1799 = vmatpush2.bf16.msra.mxu0 0
    %1800 = vmatprep.mubr.bf16.mxu0 0
    %1801 = vmatmul.mubr.bf16.gmra.mxu0 %v1763
    %v1802 = vpop.f32.mrf.mxu0
    %v1803 = vadd.f32 0.0, %v1802
    %v1804 = vpop.f32.mrf.mxu0
    %v1805 = vpop.f32.mrf.mxu0
    %v1806 = vadd.f32 0.0, %v1805
    %v1807 = vpop.f32.mrf.mxu0
    %1808 = vdwg.mxu0
    %v1809 = vadd.f32 %v1756, %v1803
    %v1810 = vadd.f32 %v1757, %v1806
    %v1811 = vld [vmem:[%s1187] sm:$0xff]
    %v1812 = vld [vmem:[%s1187 + $0x8] sm:$0x3]
    %v1813 = vld [vmem:[%s9 + $0xc] sm:$0xf]
    %v1814 = vpack.c.bf16 %v1812, %v1811
    %v1816 = vsel %vm734, %v1814, 0
    %v1819 = vsel %vm1652, %v1813, 0
    %1821 = vmatprep.subr.bf16.mxu0 0
    %1822 = vmatpush1.bf16.msra.mxu0 0
    %1823 = vmatprep.subr.bf16.mxu0 0
    %1824 = vmatpush1.bf16.msra.mxu0 0
    %1825 = vmatprep.subr.bf16.mxu0 0
    %1826 = vmatpush1.bf16.msra.mxu0 0
    %1827 = vmatprep.subr.bf16.mxu0 0
    %1828 = vmatpush1.bf16.msra.mxu0 0
    %1829 = vmatprep.subr.bf16.mxu0 0
    %1830 = vmatpush1.bf16.msra.mxu0 0
    %1831 = vmatprep.subr.bf16.mxu0 0
    %1832 = vmatpush1.bf16.msra.mxu0 0
    %1833 = vmatprep.subr.bf16.mxu0 0
    %1834 = vmatpush1.bf16.msra.mxu0 0
    %1835 = vmatprep.subr.bf16.mxu0 0
    %1836 = vmatpush1.bf16.msra.mxu0 %v1819
    %1837 = vmatprep.subr.bf16.mxu0 0
    %1838 = vmatpush2.bf16.msra.mxu0 0
    %1839 = vmatprep.subr.bf16.mxu0 0
    %1840 = vmatpush2.bf16.msra.mxu0 0
    %1841 = vmatprep.subr.bf16.mxu0 0
    %1842 = vmatpush2.bf16.msra.mxu0 0
    %1843 = vmatprep.subr.bf16.mxu0 0
    %1844 = vmatpush2.bf16.msra.mxu0 0
    %1845 = vmatprep.subr.bf16.mxu0 0
    %1846 = vmatpush2.bf16.msra.mxu0 0
    %1847 = vmatprep.subr.bf16.mxu0 0
    %1848 = vmatpush2.bf16.msra.mxu0 0
    %1849 = vmatprep.subr.bf16.mxu0 0
    %1850 = vmatpush2.bf16.msra.mxu0 0
    %1851 = vmatprep.subr.bf16.mxu0 0
    %1852 = vmatpush2.bf16.msra.mxu0 0
    %1853 = vmatprep.mubr.bf16.mxu0 0
    %1854 = vmatmul.mubr.bf16.gmra.mxu0 %v1816
    %v1855 = vpop.f32.mrf.mxu0
    %v1856 = vadd.f32 0.0, %v1855
    %v1857 = vpop.f32.mrf.mxu0
    %v1858 = vpop.f32.mrf.mxu0
    %v1859 = vadd.f32 0.0, %v1858
    %v1860 = vpop.f32.mrf.mxu0
    %1861 = vdwg.mxu0
    %v1862 = vadd.f32 %v1809, %v1856
    %v1863 = vadd.f32 %v1810, %v1859
    %v1864 = vadd.f32 %v613, %v1862
    %v1865 = vadd.f32 %v614, %v1863
    %v1866 = vld [vmem:[%s11] sm:$0x1]
    %v1867 = vld [vmem:[%s12] sm:$0x1]
    %v1868 = vsel %vm617, %v1864, 0.0
    %1869 = vadd.xlane.f32.xlu0 %v1868
    %v1870 = vpop.xlane.xlu0 %1869
    %v1871 = vsel %vm621, %v1865, 0.0
    %1872 = vadd.xlane.f32.xlu0 %v1871
    %v1873 = vpop.xlane.xlu0 %1872
    %v1874 = vmul.f32 %v1870, %v625
    %v1875 = vmul.f32 %v1873, %v625
    %v1876 = vsub.f32 %v1864, %v1874
    %v1877 = vsub.f32 %v1865, %v1875
    %v1878 = vmul.f32 %v1876, %v1876
    %v1879 = vmul.f32 %v1877, %v1877
    %v1880 = vsel %vm617, %v1878, 0.0
    %1881 = vadd.xlane.f32.xlu0 %v1880
    %v1882 = vpop.xlane.xlu0 %1881
    %v1883 = vsel %vm621, %v1879, 0.0
    %1884 = vadd.xlane.f32.xlu0 %v1883
    %v1885 = vpop.xlane.xlu0 %1884
    %v1886 = vmul.f32 %v1882, %v625
    %v1887 = vmul.f32 %v1885, %v625
    %v1888 = vadd.f32 %v1886, 1e-06
    %v1889 = vadd.f32 %v1887, 1e-06
    %v1890 = vrsqrt.pop %v1888
    %v1891 = vrsqrt.pop %v1889
    %v1892 = vmul.f32 %v1876, %v1890
    %v1893 = vmul.f32 %v1877, %v1891
    %v1895 = vlaneseq
    %v1896 = vshrl.u32 %v1895, 7
    %v1897 = vsub.s32 0, %v1896
    %v1898 = vrot.slane %v1866, %v1897
    %v1900 = vmul.f32 %v1892, %v1898
    %v1901 = vmul.f32 %v1893, %v1898
    %v1903 = vlaneseq
    %v1904 = vshrl.u32 %v1903, 7
    %v1905 = vsub.s32 0, %v1904
    %v1906 = vrot.slane %v1867, %v1905
    %v1908 = vadd.f32 %v1900, %v1906
    %v1909 = vadd.f32 %v1901, %v1906
    %v1910 = vld [vmem:[%s13] sm:$0xf]
    %v1911 = vld [vmem:[%s13 + $0x4] sm:$0xf]
    %v1912 = vld [vmem:[%s13 + $0x8] sm:$0xf]
    %v1913 = vld [vmem:[%s13 + $0xc] sm:$0xf]
    %v1914 = vpack.c.bf16 %v1909, %v1908
    %v1915 = vld [vmem:[%s14] sm:$0x1]
    %v1917 = vlaneseq
    %v1918 = vshrl.u32 %v1917, 7
    %v1919 = vsub.s32 0, %v1918
    %v1920 = vrot.slane %v1915, %v1919
    %v1926 = vunpack.c.l.b16 %v1910
    %v1927 = vunpack.c.l.b16 %v1911
    %v1928 = vunpack.c.l.b16 %v1912
    %v1929 = vunpack.c.l.b16 %v1913
    %v1930 = vpack.c.b16 %v1927, %v1926
    %v1931 = vpack.c.b16 %v1929, %v1928
    %v1935 = vsel %vm617, %v1914, 0
    %1937 = vmatprep.subr.bf16.mxu0 0
    %1938 = vmatpush1.bf16.msra.mxu0 0
    %1939 = vmatprep.subr.bf16.mxu0 0
    %1940 = vmatpush1.bf16.msra.mxu0 0
    %1941 = vmatprep.subr.bf16.mxu0 0
    %1942 = vmatpush1.bf16.msra.mxu0 0
    %1943 = vmatprep.subr.bf16.mxu0 0
    %1944 = vmatpush1.bf16.msra.mxu0 0
    %1945 = vmatprep.subr.bf16.mxu0 0
    %1946 = vmatpush1.bf16.msra.mxu0 0
    %1947 = vmatprep.subr.bf16.mxu0 0
    %1948 = vmatpush1.bf16.msra.mxu0 0
    %1949 = vmatprep.subr.bf16.mxu0 0
    %1950 = vmatpush1.bf16.msra.mxu0 %v1931
    %1951 = vmatprep.subr.bf16.mxu0 0
    %1952 = vmatpush1.bf16.msra.mxu0 %v1930
    %1953 = vmatprep.subr.bf16.mxu0 0
    %1954 = vmatpush2.bf16.msra.mxu0 0
    %1955 = vmatprep.subr.bf16.mxu0 0
    %1956 = vmatpush2.bf16.msra.mxu0 0
    %1957 = vmatprep.subr.bf16.mxu0 0
    %1958 = vmatpush2.bf16.msra.mxu0 0
    %1959 = vmatprep.subr.bf16.mxu0 0
    %1960 = vmatpush2.bf16.msra.mxu0 0
    %1961 = vmatprep.subr.bf16.mxu0 0
    %1962 = vmatpush2.bf16.msra.mxu0 0
    %1963 = vmatprep.subr.bf16.mxu0 0
    %1964 = vmatpush2.bf16.msra.mxu0 0
    %1965 = vmatprep.subr.bf16.mxu0 0
    %1966 = vmatpush2.bf16.msra.mxu0 0
    %1967 = vmatprep.subr.bf16.mxu0 0
    %1968 = vmatpush2.bf16.msra.mxu0 0
    %1969 = vmatprep.mubr.bf16.mxu0 0
    %1970 = vmatmul.mubr.bf16.gmra.mxu0 %v1935
    %v1971 = vpop.f32.mrf.mxu0
    %v1972 = vadd.f32 %v1920, %v1971
    %v1973 = vpop.f32.mrf.mxu0
    %v1974 = vpop.f32.mrf.mxu0
    %v1975 = vadd.f32 %v1920, %v1974
    %v1976 = vpop.f32.mrf.mxu0
    %1977 = vdwg.mxu0
    %v1978 = vmul.f32 %v1972, 0.70710677
    %v1979 = vmul.f32 %v1975, 0.70710677
    %v1980 = vand.u32 2147483647, %v1978
    %v1981 = vand.u32 2147483647, %v1979
    %v1982 = vmul.f32 %v1980, 0.3275911
    %v1983 = vmul.f32 %v1981, 0.3275911
    %v1984 = vadd.f32 %v1982, 1.0
    %v1985 = vadd.f32 %v1983, 1.0
    %v1986 = vrcp.pop %v1984
    %v1987 = vmul.f32 1.0, %v1986
    %v1988 = vrcp.pop %v1985
    %v1989 = vmul.f32 1.0, %v1988
    %v1990 = vmul.f32 %v1987, 1.0614054
    %v1991 = vmul.f32 %v1989, 1.0614054
    %v1992 = vsub.f32 %v1990, 1.4531521
    %v1993 = vsub.f32 %v1991, 1.4531521
    %v1994 = vmul.f32 %v1992, %v1987
    %v1995 = vmul.f32 %v1993, %v1989
    %v1996 = vadd.f32 %v1994, 1.4214138
    %v1997 = vadd.f32 %v1995, 1.4214138
    %v1998 = vmul.f32 %v1996, %v1987
    %v1999 = vmul.f32 %v1997, %v1989
    %v2000 = vsub.f32 %v1998, 0.28449672
    %v2001 = vsub.f32 %v1999, 0.28449672
    %v2002 = vmul.f32 %v2000, %v1987
    %v2003 = vmul.f32 %v2001, %v1989
    %v2004 = vadd.f32 %v2002, 0.2548296
    %v2005 = vadd.f32 %v2003, 0.2548296
    %v2006 = vmul.f32 %v2004, %v1987
    %v2007 = vmul.f32 %v2005, %v1989
    %v2008 = vsub.f32 0.0, %v1980
    %v2009 = vsub.f32 0.0, %v1981
    %v2010 = vmul.f32 %v2008, %v1980
    %v2011 = vmul.f32 %v2009, %v1981
    %v2012 = vmul.f32 %v2010, 1.442695
    %v2013 = vpow.pop %v2012
    %v2014 = vmul.f32 %v2011, 1.442695
    %v2015 = vpow.pop %v2014
    %v2016 = vmul.f32 %v2006, %v2013
    %v2017 = vmul.f32 %v2007, %v2015
    %v2018 = vsub.f32 1.0, %v2016
    %v2019 = vsub.f32 1.0, %v2017
    %vm2020 = vcmp.ge.f32.partialorder %v1978, 0.0
    %vm2021 = vcmp.ge.f32.partialorder %v1979, 0.0
    %v2022 = vsub.f32 0.0, %v2018
    %v2023 = vsub.f32 0.0, %v2019
    %v2024 = vsel %vm2020, %v2018, %v2022
    %v2025 = vsel %vm2021, %v2019, %v2023
    %v2026 = vmul.f32 %v1972, 0.5
    %v2027 = vmul.f32 %v1975, 0.5
    %v2028 = vadd.f32 %v2024, 1.0
    %v2029 = vadd.f32 %v2025, 1.0
    %v2030 = vmul.f32 %v2026, %v2028
    %v2031 = vmul.f32 %v2027, %v2029
    %v2032 = vld [vmem:[%s15] sm:$0xf]
    %v2033 = vld [vmem:[%s15 + $0x4] sm:$0xf]
    %v2034 = vld [vmem:[%s15 + $0x8] sm:$0xf]
    %v2035 = vld [vmem:[%s15 + $0xc] sm:$0xf]
    %v2036 = vld [vmem:[%s15 + $0x10] sm:$0xf]
    %v2037 = vld [vmem:[%s15 + $0x14] sm:$0xf]
    %v2038 = vld [vmem:[%s15 + $0x18] sm:$0xf]
    %v2039 = vld [vmem:[%s15 + $0x1c] sm:$0xf]
    %v2040 = vld [vmem:[%s15 + $0x20] sm:$0xf]
    %v2041 = vld [vmem:[%s15 + $0x24] sm:$0xf]
    %v2042 = vld [vmem:[%s15 + $0x28] sm:$0xf]
    %v2043 = vld [vmem:[%s15 + $0x2c] sm:$0xf]
    %v2044 = vld [vmem:[%s15 + $0x30] sm:$0xf]
    %v2045 = vld [vmem:[%s15 + $0x34] sm:$0xf]
    %v2046 = vld [vmem:[%s15 + $0x38] sm:$0xf]
    %v2047 = vld [vmem:[%s15 + $0x3c] sm:$0xf]
    %v2048 = vpack.c.bf16 %v2031, %v2030
    %v2065 = vunpack.c.l.b16 %v2032
    %v2066 = vunpack.c.l.b16 %v2033
    %v2067 = vunpack.c.l.b16 %v2034
    %v2068 = vunpack.c.l.b16 %v2035
    %v2069 = vunpack.c.l.b16 %v2036
    %v2070 = vunpack.c.l.b16 %v2037
    %v2071 = vunpack.c.l.b16 %v2038
    %v2072 = vunpack.c.l.b16 %v2039
    %v2073 = vunpack.c.l.b16 %v2040
    %v2074 = vunpack.c.l.b16 %v2041
    %v2075 = vunpack.c.l.b16 %v2042
    %v2076 = vunpack.c.l.b16 %v2043
    %v2077 = vunpack.c.l.b16 %v2044
    %v2078 = vunpack.c.l.b16 %v2045
    %v2079 = vunpack.c.l.b16 %v2046
    %v2080 = vunpack.c.l.b16 %v2047
    %v2081 = vpack.c.b16 %v2066, %v2065
    %v2082 = vpack.c.b16 %v2068, %v2067
    %v2083 = vpack.c.b16 %v2070, %v2069
    %v2084 = vpack.c.b16 %v2072, %v2071
    %v2085 = vpack.c.b16 %v2074, %v2073
    %v2086 = vpack.c.b16 %v2076, %v2075
    %v2087 = vpack.c.b16 %v2078, %v2077
    %v2088 = vpack.c.b16 %v2080, %v2079
    %2097 = vmatprep.subr.bf16.mxu0 0
    %2098 = vmatpush1.bf16.msra.mxu0 %v2088
    %2099 = vmatprep.subr.bf16.mxu0 0
    %2100 = vmatpush1.bf16.msra.mxu0 %v2087
    %2101 = vmatprep.subr.bf16.mxu0 0
    %2102 = vmatpush1.bf16.msra.mxu0 %v2086
    %2103 = vmatprep.subr.bf16.mxu0 0
    %2104 = vmatpush1.bf16.msra.mxu0 %v2085
    %2105 = vmatprep.subr.bf16.mxu0 0
    %2106 = vmatpush1.bf16.msra.mxu0 %v2084
    %2107 = vmatprep.subr.bf16.mxu0 0
    %2108 = vmatpush1.bf16.msra.mxu0 %v2083
    %2109 = vmatprep.subr.bf16.mxu0 0
    %2110 = vmatpush1.bf16.msra.mxu0 %v2082
    %2111 = vmatprep.subr.bf16.mxu0 0
    %2112 = vmatpush1.bf16.msra.mxu0 %v2081
    %2113 = vmatprep.subr.bf16.mxu0 0
    %2114 = vmatpush2.bf16.msra.mxu0 0
    %2115 = vmatprep.subr.bf16.mxu0 0
    %2116 = vmatpush2.bf16.msra.mxu0 0
    %2117 = vmatprep.subr.bf16.mxu0 0
    %2118 = vmatpush2.bf16.msra.mxu0 0
    %2119 = vmatprep.subr.bf16.mxu0 0
    %2120 = vmatpush2.bf16.msra.mxu0 0
    %2121 = vmatprep.subr.bf16.mxu0 0
    %2122 = vmatpush2.bf16.msra.mxu0 0
    %2123 = vmatprep.subr.bf16.mxu0 0
    %2124 = vmatpush2.bf16.msra.mxu0 0
    %2125 = vmatprep.subr.bf16.mxu0 0
    %2126 = vmatpush2.bf16.msra.mxu0 0
    %2127 = vmatprep.subr.bf16.mxu0 0
    %2128 = vmatpush2.bf16.msra.mxu0 0
    %2129 = vmatprep.mubr.bf16.mxu0 0
    %2130 = vmatmul.mubr.bf16.gmra.mxu0 %v2048
    %v2131 = vpop.f32.mrf.mxu0
    %v2132 = vadd.f32 0.0, %v2131
    %v2133 = vpop.f32.mrf.mxu0
    %v2134 = vpop.f32.mrf.mxu0
    %v2135 = vadd.f32 0.0, %v2134
    %v2136 = vpop.f32.mrf.mxu0
    %2137 = vdwg.mxu0
    %v2138 = vadd.f32 %v1864, %v2132
    %v2139 = vadd.f32 %v1865, %v2135
    %v2140 = vld [vmem:[%s16] sm:$0x1]
    %v2142 = vlaneseq
    %v2143 = vshrl.u32 %v2142, 7
    %v2144 = vsub.s32 0, %v2143
    %v2145 = vrot.slane %v2140, %v2144
    %v2147 = vadd.f32 %v2138, %v2145
    %v2148 = vadd.f32 %v2139, %v2145
    %s2149 = scalar_lea.vmem %s5, 1
    %v2150 = vld [vmem:[%s2149] sm:$0x1]
    %s2151 = scalar_lea.vmem %s6, 1
    %v2152 = vld [vmem:[%s2151] sm:$0x1]
    %v2153 = vsel %vm617, %v2147, 0.0
    %2154 = vadd.xlane.f32.xlu0 %v2153
    %v2155 = vpop.xlane.xlu0 %2154
    %v2156 = vsel %vm621, %v2148, 0.0
    %2157 = vadd.xlane.f32.xlu0 %v2156
    %v2158 = vpop.xlane.xlu0 %2157
    %v2159 = vmul.f32 %v2155, %v625
    %v2160 = vmul.f32 %v2158, %v625
    %v2161 = vsub.f32 %v2147, %v2159
    %v2162 = vsub.f32 %v2148, %v2160
    %v2163 = vmul.f32 %v2161, %v2161
    %v2164 = vmul.f32 %v2162, %v2162
    %v2165 = vsel %vm617, %v2163, 0.0
    %2166 = vadd.xlane.f32.xlu0 %v2165
    %v2167 = vpop.xlane.xlu0 %2166
    %v2168 = vsel %vm621, %v2164, 0.0
    %2169 = vadd.xlane.f32.xlu0 %v2168
    %v2170 = vpop.xlane.xlu0 %2169
    %v2171 = vmul.f32 %v2167, %v625
    %v2172 = vmul.f32 %v2170, %v625
    %v2173 = vadd.f32 %v2171, 1e-06
    %v2174 = vadd.f32 %v2172, 1e-06
    %v2175 = vrsqrt.pop %v2173
    %v2176 = vrsqrt.pop %v2174
    %v2177 = vmul.f32 %v2161, %v2175
    %v2178 = vmul.f32 %v2162, %v2176
    %v2180 = vlaneseq
    %v2181 = vshrl.u32 %v2180, 7
    %v2182 = vsub.s32 0, %v2181
    %v2183 = vrot.slane %v2150, %v2182
    %v2185 = vmul.f32 %v2177, %v2183
    %v2186 = vmul.f32 %v2178, %v2183
    %v2188 = vlaneseq
    %v2189 = vshrl.u32 %v2188, 7
    %v2190 = vsub.s32 0, %v2189
    %v2191 = vrot.slane %v2152, %v2190
    %v2193 = vadd.f32 %v2185, %v2191
    %v2194 = vadd.f32 %v2186, %v2191
    %s2195 = scalar_lea.vmem %s7, 16
    %v2196 = vld [vmem:[%s2195] sm:$0xf]
    %v2197 = vld [vmem:[%s2195 + $0x4] sm:$0xf]
    %v2198 = vld [vmem:[%s2195 + $0x8] sm:$0xf]
    %v2199 = vld [vmem:[%s2195 + $0xc] sm:$0xf]
    %v2200 = vpack.c.bf16 %v2194, %v2193
    %s2201 = scalar_lea.vmem %s8, 1
    %v2202 = vld [vmem:[%s2201] sm:$0x1]
    %v2204 = vlaneseq
    %v2205 = vshrl.u32 %v2204, 7
    %v2206 = vsub.s32 0, %v2205
    %v2207 = vrot.slane %v2202, %v2206
    %v2213 = vunpack.c.l.b16 %v2196
    %v2214 = vunpack.c.l.b16 %v2197
    %v2215 = vunpack.c.l.b16 %v2198
    %v2216 = vunpack.c.l.b16 %v2199
    %v2217 = vpack.c.b16 %v2214, %v2213
    %v2218 = vpack.c.b16 %v2216, %v2215
    %v2222 = vsel %vm617, %v2200, 0
    %2224 = vmatprep.subr.bf16.mxu0 0
    %2225 = vmatpush1.bf16.msra.mxu0 0
    %2226 = vmatprep.subr.bf16.mxu0 0
    %2227 = vmatpush1.bf16.msra.mxu0 0
    %2228 = vmatprep.subr.bf16.mxu0 0
    %2229 = vmatpush1.bf16.msra.mxu0 0
    %2230 = vmatprep.subr.bf16.mxu0 0
    %2231 = vmatpush1.bf16.msra.mxu0 0
    %2232 = vmatprep.subr.bf16.mxu0 0
    %2233 = vmatpush1.bf16.msra.mxu0 0
    %2234 = vmatprep.subr.bf16.mxu0 0
    %2235 = vmatpush1.bf16.msra.mxu0 0
    %2236 = vmatprep.subr.bf16.mxu0 0
    %2237 = vmatpush1.bf16.msra.mxu0 %v2218
    %2238 = vmatprep.subr.bf16.mxu0 0
    %2239 = vmatpush1.bf16.msra.mxu0 %v2217
    %2240 = vmatprep.subr.bf16.mxu0 0
    %2241 = vmatpush2.bf16.msra.mxu0 0
    %2242 = vmatprep.subr.bf16.mxu0 0
    %2243 = vmatpush2.bf16.msra.mxu0 0
    %2244 = vmatprep.subr.bf16.mxu0 0
    %2245 = vmatpush2.bf16.msra.mxu0 0
    %2246 = vmatprep.subr.bf16.mxu0 0
    %2247 = vmatpush2.bf16.msra.mxu0 0
    %2248 = vmatprep.subr.bf16.mxu0 0
    %2249 = vmatpush2.bf16.msra.mxu0 0
    %2250 = vmatprep.subr.bf16.mxu0 0
    %2251 = vmatpush2.bf16.msra.mxu0 0
    %2252 = vmatprep.subr.bf16.mxu0 0
    %2253 = vmatpush2.bf16.msra.mxu0 0
    %2254 = vmatprep.subr.bf16.mxu0 0
    %2255 = vmatpush2.bf16.msra.mxu0 0
    %2256 = vmatprep.mubr.bf16.mxu0 0
    %2257 = vmatmul.mubr.bf16.gmra.mxu0 %v2222
    %v2258 = vpop.f32.mrf.mxu0
    %v2259 = vadd.f32 %v2207, %v2258
    %v2260 = vpop.f32.mrf.mxu0
    %v2261 = vpop.f32.mrf.mxu0
    %v2262 = vadd.f32 %v2207, %v2261
    %v2263 = vpop.f32.mrf.mxu0
    %2264 = vdwg.mxu0
    %v2265 = vpack.c.bf16 %v2259, %v2259
    %2267 = vrot.lane.b32.xlu0 %v2265, 96
    %v2268 = vpop.permute.xlu0 %2267
    %v2270 = vsel %vm734, %v2265, 0
    %v2273 = vsel %vm734, %v2268, 0
    %2275 = vmatprep.subr.bf16.mxu0 0
    %2276 = vmatpush1.bf16.xpose.msra.mxu0 0
    %2277 = vmatprep.subr.bf16.mxu0 0
    %2278 = vmatpush1.bf16.xpose.msra.mxu0 0
    %2279 = vmatprep.subr.bf16.mxu0 0
    %2280 = vmatpush1.bf16.xpose.msra.mxu0 0
    %2281 = vmatprep.subr.bf16.mxu0 0
    %2282 = vmatpush1.bf16.xpose.msra.mxu0 0
    %2283 = vmatprep.subr.bf16.mxu0 0
    %2284 = vmatpush1.bf16.xpose.msra.mxu0 0
    %2285 = vmatprep.subr.bf16.mxu0 0
    %2286 = vmatpush1.bf16.xpose.msra.mxu0 0
    %2287 = vmatprep.subr.bf16.mxu0 0
    %2288 = vmatpush1.bf16.xpose.msra.mxu0 0
    %2289 = vmatprep.subr.bf16.mxu0 0
    %2290 = vmatpush1.bf16.xpose.msra.mxu0 %v2273
    %2291 = vmatprep.subr.bf16.mxu0 0
    %2292 = vmatpush2.bf16.xpose.msra.mxu0 0
    %2293 = vmatprep.subr.bf16.mxu0 0
    %2294 = vmatpush2.bf16.xpose.msra.mxu0 0
    %2295 = vmatprep.subr.bf16.mxu0 0
    %2296 = vmatpush2.bf16.xpose.msra.mxu0 0
    %2297 = vmatprep.subr.bf16.mxu0 0
    %2298 = vmatpush2.bf16.xpose.msra.mxu0 0
    %2299 = vmatprep.subr.bf16.mxu0 0
    %2300 = vmatpush2.bf16.xpose.msra.mxu0 0
    %2301 = vmatprep.subr.bf16.mxu0 0
    %2302 = vmatpush2.bf16.xpose.msra.mxu0 0
    %2303 = vmatprep.subr.bf16.mxu0 0
    %2304 = vmatpush2.bf16.xpose.msra.mxu0 0
    %2305 = vmatprep.subr.bf16.mxu0 0
    %2306 = vmatpush2.bf16.xpose.msra.mxu0 0
    %2307 = vmatprep.mubr.bf16.mxu0 0
    %2308 = vmatmul.mubr.bf16.gmra.mxu0 %v2270
    %v2309 = vpop.f32.mrf.mxu0
    %v2310 = vadd.f32 0.0, %v2309
    %v2311 = vpop.f32.mrf.mxu0
    %v2312 = vpop.f32.mrf.mxu0
    %v2313 = vpop.f32.mrf.mxu0
    %2314 = vdwg.mxu0
    %v2315 = vmul.f32 %v2310, 0.35355338
    %v2316 = vsel %vm782, %v2315, -inf
    %2317 = vmax.xlane.f32.xlu0 %v2316
    %v2318 = vpop.xlane.xlu0 %2317
    %v2319 = vsub.f32 %v2315, %v2318
    %v2320 = vmul.f32 %v2319, 1.442695
    %v2321 = vpow.pop %v2320
    %v2322 = vsel %vm782, %v2321, 0.0
    %2323 = vadd.xlane.f32.xlu0 %v2322
    %v2324 = vpop.xlane.xlu0 %2323
    %v2325 = vrcp.pop %v2324
    %v2326 = vmul.f32 %v2321, %v2325
    %v2327 = vpack.c.bf16 %v2326, %v2326
    %2328 = vrot.lane.b32.xlu0 %v2265, 64
    %v2329 = vpop.permute.xlu0 %2328
    %v2331 = vsel %vm797, %v2327, 0
    %v2334 = vand.u32 %v2329, %v804
    %2336 = vmatprep.subr.bf16.mxu0 0
    %2337 = vmatpush1.bf16.msra.mxu0 0
    %2338 = vmatprep.subr.bf16.mxu0 0
    %2339 = vmatpush1.bf16.msra.mxu0 0
    %2340 = vmatprep.subr.bf16.mxu0 0
    %2341 = vmatpush1.bf16.msra.mxu0 0
    %2342 = vmatprep.subr.bf16.mxu0 0
    %2343 = vmatpush1.bf16.msra.mxu0 0
    %2344 = vmatprep.subr.bf16.mxu0 0
    %2345 = vmatpush1.bf16.msra.mxu0 0
    %2346 = vmatprep.subr.bf16.mxu0 0
    %2347 = vmatpush1.bf16.msra.mxu0 0
    %2348 = vmatprep.subr.bf16.mxu0 0
    %2349 = vmatpush1.bf16.msra.mxu0 0
    %2350 = vmatprep.subr.bf16.mxu0 0
    %2351 = vmatpush1.bf16.msra.mxu0 %v2334
    %2352 = vmatprep.subr.bf16.mxu0 0
    %2353 = vmatpush2.bf16.msra.mxu0 0
    %2354 = vmatprep.subr.bf16.mxu0 0
    %2355 = vmatpush2.bf16.msra.mxu0 0
    %2356 = vmatprep.subr.bf16.mxu0 0
    %2357 = vmatpush2.bf16.msra.mxu0 0
    %2358 = vmatprep.subr.bf16.mxu0 0
    %2359 = vmatpush2.bf16.msra.mxu0 0
    %2360 = vmatprep.subr.bf16.mxu0 0
    %2361 = vmatpush2.bf16.msra.mxu0 0
    %2362 = vmatprep.subr.bf16.mxu0 0
    %2363 = vmatpush2.bf16.msra.mxu0 0
    %2364 = vmatprep.subr.bf16.mxu0 0
    %2365 = vmatpush2.bf16.msra.mxu0 0
    %2366 = vmatprep.subr.bf16.mxu0 0
    %2367 = vmatpush2.bf16.msra.mxu0 0
    %2368 = vmatprep.mubr.bf16.mxu0 0
    %2369 = vmatmul.mubr.bf16.gmra.mxu0 %v2331
    %v2370 = vpop.f32.mrf.mxu0
    %v2371 = vadd.f32 0.0, %v2370
    %v2372 = vpop.f32.mrf.mxu0
    %v2373 = vpop.f32.mrf.mxu0
    %v2374 = vpop.f32.mrf.mxu0
    %2375 = vdwg.mxu0
    %2376 = vst.msk [vmem:[#allocation3] sm:$0x1f] %vm848, %v2371
    %2377 = vrot.lane.b32.xlu0 %v2265, 120
    %v2378 = vpop.permute.xlu0 %2377
    %2379 = vrot.lane.b32.xlu0 %v2265, 88
    %v2380 = vpop.permute.xlu0 %2379
    %v2382 = vsel %vm734, %v2378, 0
    %v2385 = vsel %vm734, %v2380, 0
    %2387 = vmatprep.subr.bf16.mxu0 0
    %2388 = vmatpush1.bf16.xpose.msra.mxu0 0
    %2389 = vmatprep.subr.bf16.mxu0 0
    %2390 = vmatpush1.bf16.xpose.msra.mxu0 0
    %2391 = vmatprep.subr.bf16.mxu0 0
    %2392 = vmatpush1.bf16.xpose.msra.mxu0 0
    %2393 = vmatprep.subr.bf16.mxu0 0
    %2394 = vmatpush1.bf16.xpose.msra.mxu0 0
    %2395 = vmatprep.subr.bf16.mxu0 0
    %2396 = vmatpush1.bf16.xpose.msra.mxu0 0
    %2397 = vmatprep.subr.bf16.mxu0 0
    %2398 = vmatpush1.bf16.xpose.msra.mxu0 0
    %2399 = vmatprep.subr.bf16.mxu0 0
    %2400 = vmatpush1.bf16.xpose.msra.mxu0 0
    %2401 = vmatprep.subr.bf16.mxu0 0
    %2402 = vmatpush1.bf16.xpose.msra.mxu0 %v2385
    %2403 = vmatprep.subr.bf16.mxu0 0
    %2404 = vmatpush2.bf16.xpose.msra.mxu0 0
    %2405 = vmatprep.subr.bf16.mxu0 0
    %2406 = vmatpush2.bf16.xpose.msra.mxu0 0
    %2407 = vmatprep.subr.bf16.mxu0 0
    %2408 = vmatpush2.bf16.xpose.msra.mxu0 0
    %2409 = vmatprep.subr.bf16.mxu0 0
    %2410 = vmatpush2.bf16.xpose.msra.mxu0 0
    %2411 = vmatprep.subr.bf16.mxu0 0
    %2412 = vmatpush2.bf16.xpose.msra.mxu0 0
    %2413 = vmatprep.subr.bf16.mxu0 0
    %2414 = vmatpush2.bf16.xpose.msra.mxu0 0
    %2415 = vmatprep.subr.bf16.mxu0 0
    %2416 = vmatpush2.bf16.xpose.msra.mxu0 0
    %2417 = vmatprep.subr.bf16.mxu0 0
    %2418 = vmatpush2.bf16.xpose.msra.mxu0 0
    %2419 = vmatprep.mubr.bf16.mxu0 0
    %2420 = vmatmul.mubr.bf16.gmra.mxu0 %v2382
    %v2421 = vpop.f32.mrf.mxu0
    %v2422 = vadd.f32 0.0, %v2421
    %v2423 = vpop.f32.mrf.mxu0
    %v2424 = vpop.f32.mrf.mxu0
    %v2425 = vpop.f32.mrf.mxu0
    %2426 = vdwg.mxu0
    %v2427 = vmul.f32 %v2422, 0.35355338
    %v2428 = vsel %vm782, %v2427, -inf
    %2429 = vmax.xlane.f32.xlu0 %v2428
    %v2430 = vpop.xlane.xlu0 %2429
    %v2431 = vsub.f32 %v2427, %v2430
    %v2432 = vmul.f32 %v2431, 1.442695
    %v2433 = vpow.pop %v2432
    %v2434 = vsel %vm782, %v2433, 0.0
    %2435 = vadd.xlane.f32.xlu0 %v2434
    %v2436 = vpop.xlane.xlu0 %2435
    %v2437 = vrcp.pop %v2436
    %v2438 = vmul.f32 %v2433, %v2437
    %v2439 = vpack.c.bf16 %v2438, %v2438
    %2440 = vrot.lane.b32.xlu0 %v2265, 56
    %v2441 = vpop.permute.xlu0 %2440
    %v2443 = vsel %vm797, %v2439, 0
    %v2446 = vand.u32 %v2441, %v804
    %2448 = vmatprep.subr.bf16.mxu0 0
    %2449 = vmatpush1.bf16.msra.mxu0 0
    %2450 = vmatprep.subr.bf16.mxu0 0
    %2451 = vmatpush1.bf16.msra.mxu0 0
    %2452 = vmatprep.subr.bf16.mxu0 0
    %2453 = vmatpush1.bf16.msra.mxu0 0
    %2454 = vmatprep.subr.bf16.mxu0 0
    %2455 = vmatpush1.bf16.msra.mxu0 0
    %2456 = vmatprep.subr.bf16.mxu0 0
    %2457 = vmatpush1.bf16.msra.mxu0 0
    %2458 = vmatprep.subr.bf16.mxu0 0
    %2459 = vmatpush1.bf16.msra.mxu0 0
    %2460 = vmatprep.subr.bf16.mxu0 0
    %2461 = vmatpush1.bf16.msra.mxu0 0
    %2462 = vmatprep.subr.bf16.mxu0 0
    %2463 = vmatpush1.bf16.msra.mxu0 %v2446
    %2464 = vmatprep.subr.bf16.mxu0 0
    %2465 = vmatpush2.bf16.msra.mxu0 0
    %2466 = vmatprep.subr.bf16.mxu0 0
    %2467 = vmatpush2.bf16.msra.mxu0 0
    %2468 = vmatprep.subr.bf16.mxu0 0
    %2469 = vmatpush2.bf16.msra.mxu0 0
    %2470 = vmatprep.subr.bf16.mxu0 0
    %2471 = vmatpush2.bf16.msra.mxu0 0
    %2472 = vmatprep.subr.bf16.mxu0 0
    %2473 = vmatpush2.bf16.msra.mxu0 0
    %2474 = vmatprep.subr.bf16.mxu0 0
    %2475 = vmatpush2.bf16.msra.mxu0 0
    %2476 = vmatprep.subr.bf16.mxu0 0
    %2477 = vmatpush2.bf16.msra.mxu0 0
    %2478 = vmatprep.subr.bf16.mxu0 0
    %2479 = vmatpush2.bf16.msra.mxu0 0
    %2480 = vmatprep.mubr.bf16.mxu0 0
    %2481 = vmatmul.mubr.bf16.gmra.mxu0 %v2443
    %v2482 = vpop.f32.mrf.mxu0
    %v2483 = vadd.f32 0.0, %v2482
    %v2484 = vpop.f32.mrf.mxu0
    %v2485 = vpop.f32.mrf.mxu0
    %v2486 = vpop.f32.mrf.mxu0
    %2487 = vdwg.mxu0
    %2488 = vst.msk [vmem:[%s961] sm:$0x1f] %vm848, %v2483
    %2489 = vrot.lane.b32.xlu0 %v2265, 112
    %v2490 = vpop.permute.xlu0 %2489
    %2491 = vrot.lane.b32.xlu0 %v2265, 80
    %v2492 = vpop.permute.xlu0 %2491
    %v2494 = vsel %vm734, %v2490, 0
    %v2497 = vsel %vm734, %v2492, 0
    %2499 = vmatprep.subr.bf16.mxu0 0
    %2500 = vmatpush1.bf16.xpose.msra.mxu0 0
    %2501 = vmatprep.subr.bf16.mxu0 0
    %2502 = vmatpush1.bf16.xpose.msra.mxu0 0
    %2503 = vmatprep.subr.bf16.mxu0 0
    %2504 = vmatpush1.bf16.xpose.msra.mxu0 0
    %2505 = vmatprep.subr.bf16.mxu0 0
    %2506 = vmatpush1.bf16.xpose.msra.mxu0 0
    %2507 = vmatprep.subr.bf16.mxu0 0
    %2508 = vmatpush1.bf16.xpose.msra.mxu0 0
    %2509 = vmatprep.subr.bf16.mxu0 0
    %2510 = vmatpush1.bf16.xpose.msra.mxu0 0
    %2511 = vmatprep.subr.bf16.mxu0 0
    %2512 = vmatpush1.bf16.xpose.msra.mxu0 0
    %2513 = vmatprep.subr.bf16.mxu0 0
    %2514 = vmatpush1.bf16.xpose.msra.mxu0 %v2497
    %2515 = vmatprep.subr.bf16.mxu0 0
    %2516 = vmatpush2.bf16.xpose.msra.mxu0 0
    %2517 = vmatprep.subr.bf16.mxu0 0
    %2518 = vmatpush2.bf16.xpose.msra.mxu0 0
    %2519 = vmatprep.subr.bf16.mxu0 0
    %2520 = vmatpush2.bf16.xpose.msra.mxu0 0
    %2521 = vmatprep.subr.bf16.mxu0 0
    %2522 = vmatpush2.bf16.xpose.msra.mxu0 0
    %2523 = vmatprep.subr.bf16.mxu0 0
    %2524 = vmatpush2.bf16.xpose.msra.mxu0 0
    %2525 = vmatprep.subr.bf16.mxu0 0
    %2526 = vmatpush2.bf16.xpose.msra.mxu0 0
    %2527 = vmatprep.subr.bf16.mxu0 0
    %2528 = vmatpush2.bf16.xpose.msra.mxu0 0
    %2529 = vmatprep.subr.bf16.mxu0 0
    %2530 = vmatpush2.bf16.xpose.msra.mxu0 0
    %2531 = vmatprep.mubr.bf16.mxu0 0
    %2532 = vmatmul.mubr.bf16.gmra.mxu0 %v2494
    %v2533 = vpop.f32.mrf.mxu0
    %v2534 = vadd.f32 0.0, %v2533
    %v2535 = vpop.f32.mrf.mxu0
    %v2536 = vpop.f32.mrf.mxu0
    %v2537 = vpop.f32.mrf.mxu0
    %2538 = vdwg.mxu0
    %v2539 = vmul.f32 %v2534, 0.35355338
    %v2540 = vsel %vm782, %v2539, -inf
    %2541 = vmax.xlane.f32.xlu0 %v2540
    %v2542 = vpop.xlane.xlu0 %2541
    %v2543 = vsub.f32 %v2539, %v2542
    %v2544 = vmul.f32 %v2543, 1.442695
    %v2545 = vpow.pop %v2544
    %v2546 = vsel %vm782, %v2545, 0.0
    %2547 = vadd.xlane.f32.xlu0 %v2546
    %v2548 = vpop.xlane.xlu0 %2547
    %v2549 = vrcp.pop %v2548
    %v2550 = vmul.f32 %v2545, %v2549
    %v2551 = vpack.c.bf16 %v2550, %v2550
    %2552 = vrot.lane.b32.xlu0 %v2265, 48
    %v2553 = vpop.permute.xlu0 %2552
    %v2555 = vsel %vm797, %v2551, 0
    %v2558 = vand.u32 %v2553, %v804
    %2560 = vmatprep.subr.bf16.mxu0 0
    %2561 = vmatpush1.bf16.msra.mxu0 0
    %2562 = vmatprep.subr.bf16.mxu0 0
    %2563 = vmatpush1.bf16.msra.mxu0 0
    %2564 = vmatprep.subr.bf16.mxu0 0
    %2565 = vmatpush1.bf16.msra.mxu0 0
    %2566 = vmatprep.subr.bf16.mxu0 0
    %2567 = vmatpush1.bf16.msra.mxu0 0
    %2568 = vmatprep.subr.bf16.mxu0 0
    %2569 = vmatpush1.bf16.msra.mxu0 0
    %2570 = vmatprep.subr.bf16.mxu0 0
    %2571 = vmatpush1.bf16.msra.mxu0 0
    %2572 = vmatprep.subr.bf16.mxu0 0
    %2573 = vmatpush1.bf16.msra.mxu0 0
    %2574 = vmatprep.subr.bf16.mxu0 0
    %2575 = vmatpush1.bf16.msra.mxu0 %v2558
    %2576 = vmatprep.subr.bf16.mxu0 0
    %2577 = vmatpush2.bf16.msra.mxu0 0
    %2578 = vmatprep.subr.bf16.mxu0 0
    %2579 = vmatpush2.bf16.msra.mxu0 0
    %2580 = vmatprep.subr.bf16.mxu0 0
    %2581 = vmatpush2.bf16.msra.mxu0 0
    %2582 = vmatprep.subr.bf16.mxu0 0
    %2583 = vmatpush2.bf16.msra.mxu0 0
    %2584 = vmatprep.subr.bf16.mxu0 0
    %2585 = vmatpush2.bf16.msra.mxu0 0
    %2586 = vmatprep.subr.bf16.mxu0 0
    %2587 = vmatpush2.bf16.msra.mxu0 0
    %2588 = vmatprep.subr.bf16.mxu0 0
    %2589 = vmatpush2.bf16.msra.mxu0 0
    %2590 = vmatprep.subr.bf16.mxu0 0
    %2591 = vmatpush2.bf16.msra.mxu0 0
    %2592 = vmatprep.mubr.bf16.mxu0 0
    %2593 = vmatmul.mubr.bf16.gmra.mxu0 %v2555
    %v2594 = vpop.f32.mrf.mxu0
    %v2595 = vadd.f32 0.0, %v2594
    %v2596 = vpop.f32.mrf.mxu0
    %v2597 = vpop.f32.mrf.mxu0
    %v2598 = vpop.f32.mrf.mxu0
    %2599 = vdwg.mxu0
    %2600 = vst.msk [vmem:[%s1074] sm:$0x1f] %vm848, %v2595
    %2601 = vrot.lane.b32.xlu0 %v2265, 104
    %v2602 = vpop.permute.xlu0 %2601
    %2603 = vrot.lane.b32.xlu0 %v2265, 72
    %v2604 = vpop.permute.xlu0 %2603
    %v2606 = vsel %vm734, %v2602, 0
    %v2609 = vsel %vm734, %v2604, 0
    %2611 = vmatprep.subr.bf16.mxu0 0
    %2612 = vmatpush1.bf16.xpose.msra.mxu0 0
    %2613 = vmatprep.subr.bf16.mxu0 0
    %2614 = vmatpush1.bf16.xpose.msra.mxu0 0
    %2615 = vmatprep.subr.bf16.mxu0 0
    %2616 = vmatpush1.bf16.xpose.msra.mxu0 0
    %2617 = vmatprep.subr.bf16.mxu0 0
    %2618 = vmatpush1.bf16.xpose.msra.mxu0 0
    %2619 = vmatprep.subr.bf16.mxu0 0
    %2620 = vmatpush1.bf16.xpose.msra.mxu0 0
    %2621 = vmatprep.subr.bf16.mxu0 0
    %2622 = vmatpush1.bf16.xpose.msra.mxu0 0
    %2623 = vmatprep.subr.bf16.mxu0 0
    %2624 = vmatpush1.bf16.xpose.msra.mxu0 0
    %2625 = vmatprep.subr.bf16.mxu0 0
    %2626 = vmatpush1.bf16.xpose.msra.mxu0 %v2609
    %2627 = vmatprep.subr.bf16.mxu0 0
    %2628 = vmatpush2.bf16.xpose.msra.mxu0 0
    %2629 = vmatprep.subr.bf16.mxu0 0
    %2630 = vmatpush2.bf16.xpose.msra.mxu0 0
    %2631 = vmatprep.subr.bf16.mxu0 0
    %2632 = vmatpush2.bf16.xpose.msra.mxu0 0
    %2633 = vmatprep.subr.bf16.mxu0 0
    %2634 = vmatpush2.bf16.xpose.msra.mxu0 0
    %2635 = vmatprep.subr.bf16.mxu0 0
    %2636 = vmatpush2.bf16.xpose.msra.mxu0 0
    %2637 = vmatprep.subr.bf16.mxu0 0
    %2638 = vmatpush2.bf16.xpose.msra.mxu0 0
    %2639 = vmatprep.subr.bf16.mxu0 0
    %2640 = vmatpush2.bf16.xpose.msra.mxu0 0
    %2641 = vmatprep.subr.bf16.mxu0 0
    %2642 = vmatpush2.bf16.xpose.msra.mxu0 0
    %2643 = vmatprep.mubr.bf16.mxu0 0
    %2644 = vmatmul.mubr.bf16.gmra.mxu0 %v2606
    %v2645 = vpop.f32.mrf.mxu0
    %v2646 = vadd.f32 0.0, %v2645
    %v2647 = vpop.f32.mrf.mxu0
    %v2648 = vpop.f32.mrf.mxu0
    %v2649 = vpop.f32.mrf.mxu0
    %2650 = vdwg.mxu0
    %v2651 = vmul.f32 %v2646, 0.35355338
    %v2652 = vsel %vm782, %v2651, -inf
    %2653 = vmax.xlane.f32.xlu0 %v2652
    %v2654 = vpop.xlane.xlu0 %2653
    %v2655 = vsub.f32 %v2651, %v2654
    %v2656 = vmul.f32 %v2655, 1.442695
    %v2657 = vpow.pop %v2656
    %v2658 = vsel %vm782, %v2657, 0.0
    %2659 = vadd.xlane.f32.xlu0 %v2658
    %v2660 = vpop.xlane.xlu0 %2659
    %v2661 = vrcp.pop %v2660
    %v2662 = vmul.f32 %v2657, %v2661
    %v2663 = vpack.c.bf16 %v2662, %v2662
    %2664 = vrot.lane.b32.xlu0 %v2265, 40
    %v2665 = vpop.permute.xlu0 %2664
    %v2667 = vsel %vm797, %v2663, 0
    %v2670 = vand.u32 %v2665, %v804
    %2672 = vmatprep.subr.bf16.mxu0 0
    %2673 = vmatpush1.bf16.msra.mxu0 0
    %2674 = vmatprep.subr.bf16.mxu0 0
    %2675 = vmatpush1.bf16.msra.mxu0 0
    %2676 = vmatprep.subr.bf16.mxu0 0
    %2677 = vmatpush1.bf16.msra.mxu0 0
    %2678 = vmatprep.subr.bf16.mxu0 0
    %2679 = vmatpush1.bf16.msra.mxu0 0
    %2680 = vmatprep.subr.bf16.mxu0 0
    %2681 = vmatpush1.bf16.msra.mxu0 0
    %2682 = vmatprep.subr.bf16.mxu0 0
    %2683 = vmatpush1.bf16.msra.mxu0 0
    %2684 = vmatprep.subr.bf16.mxu0 0
    %2685 = vmatpush1.bf16.msra.mxu0 0
    %2686 = vmatprep.subr.bf16.mxu0 0
    %2687 = vmatpush1.bf16.msra.mxu0 %v2670
    %2688 = vmatprep.subr.bf16.mxu0 0
    %2689 = vmatpush2.bf16.msra.mxu0 0
    %2690 = vmatprep.subr.bf16.mxu0 0
    %2691 = vmatpush2.bf16.msra.mxu0 0
    %2692 = vmatprep.subr.bf16.mxu0 0
    %2693 = vmatpush2.bf16.msra.mxu0 0
    %2694 = vmatprep.subr.bf16.mxu0 0
    %2695 = vmatpush2.bf16.msra.mxu0 0
    %2696 = vmatprep.subr.bf16.mxu0 0
    %2697 = vmatpush2.bf16.msra.mxu0 0
    %2698 = vmatprep.subr.bf16.mxu0 0
    %2699 = vmatpush2.bf16.msra.mxu0 0
    %2700 = vmatprep.subr.bf16.mxu0 0
    %2701 = vmatpush2.bf16.msra.mxu0 0
    %2702 = vmatprep.subr.bf16.mxu0 0
    %2703 = vmatpush2.bf16.msra.mxu0 0
    %2704 = vmatprep.mubr.bf16.mxu0 0
    %2705 = vmatmul.mubr.bf16.gmra.mxu0 %v2667
    %v2706 = vpop.f32.mrf.mxu0
    %v2707 = vadd.f32 0.0, %v2706
    %v2708 = vpop.f32.mrf.mxu0
    %v2709 = vpop.f32.mrf.mxu0
    %v2710 = vpop.f32.mrf.mxu0
    %2711 = vdwg.mxu0
    %2712 = vst.msk [vmem:[%s1187] sm:$0x1f] %vm848, %v2707
    %v2713 = vpack.c.bf16 %v2262, %v2259
    %v2715 = vshrl.u32 %v2713, 16
    %v2717 = vrot.slane %v2715, 2
    %v2718 = vshll.u32 %v2713, 16
    %v2720 = vrot.slane %v2718, 3
    %v2721 = vor.u32 %v2717, %v2720
    %2722 = vrot.lane.b32.xlu0 %v2721, 96
    %v2723 = vpop.permute.xlu0 %2722
    %v2725 = vsel %vm734, %v2721, 0
    %v2728 = vsel %vm734, %v2723, 0
    %2730 = vmatprep.subr.bf16.mxu0 0
    %2731 = vmatpush1.bf16.xpose.msra.mxu0 0
    %2732 = vmatprep.subr.bf16.mxu0 0
    %2733 = vmatpush1.bf16.xpose.msra.mxu0 0
    %2734 = vmatprep.subr.bf16.mxu0 0
    %2735 = vmatpush1.bf16.xpose.msra.mxu0 0
    %2736 = vmatprep.subr.bf16.mxu0 0
    %2737 = vmatpush1.bf16.xpose.msra.mxu0 0
    %2738 = vmatprep.subr.bf16.mxu0 0
    %2739 = vmatpush1.bf16.xpose.msra.mxu0 0
    %2740 = vmatprep.subr.bf16.mxu0 0
    %2741 = vmatpush1.bf16.xpose.msra.mxu0 0
    %2742 = vmatprep.subr.bf16.mxu0 0
    %2743 = vmatpush1.bf16.xpose.msra.mxu0 0
    %2744 = vmatprep.subr.bf16.mxu0 0
    %2745 = vmatpush1.bf16.xpose.msra.mxu0 %v2728
    %2746 = vmatprep.subr.bf16.mxu0 0
    %2747 = vmatpush2.bf16.xpose.msra.mxu0 0
    %2748 = vmatprep.subr.bf16.mxu0 0
    %2749 = vmatpush2.bf16.xpose.msra.mxu0 0
    %2750 = vmatprep.subr.bf16.mxu0 0
    %2751 = vmatpush2.bf16.xpose.msra.mxu0 0
    %2752 = vmatprep.subr.bf16.mxu0 0
    %2753 = vmatpush2.bf16.xpose.msra.mxu0 0
    %2754 = vmatprep.subr.bf16.mxu0 0
    %2755 = vmatpush2.bf16.xpose.msra.mxu0 0
    %2756 = vmatprep.subr.bf16.mxu0 0
    %2757 = vmatpush2.bf16.xpose.msra.mxu0 0
    %2758 = vmatprep.subr.bf16.mxu0 0
    %2759 = vmatpush2.bf16.xpose.msra.mxu0 0
    %2760 = vmatprep.subr.bf16.mxu0 0
    %2761 = vmatpush2.bf16.xpose.msra.mxu0 0
    %2762 = vmatprep.mubr.bf16.mxu0 0
    %2763 = vmatmul.mubr.bf16.gmra.mxu0 %v2725
    %v2764 = vpop.f32.mrf.mxu0
    %v2765 = vadd.f32 0.0, %v2764
    %v2766 = vpop.f32.mrf.mxu0
    %v2767 = vpop.f32.mrf.mxu0
    %v2768 = vpop.f32.mrf.mxu0
    %2769 = vdwg.mxu0
    %v2770 = vmul.f32 %v2765, 0.35355338
    %v2771 = vsel %vm782, %v2770, -inf
    %2772 = vmax.xlane.f32.xlu0 %v2771
    %v2773 = vpop.xlane.xlu0 %2772
    %v2774 = vsub.f32 %v2770, %v2773
    %v2775 = vmul.f32 %v2774, 1.442695
    %v2776 = vpow.pop %v2775
    %v2777 = vsel %vm782, %v2776, 0.0
    %2778 = vadd.xlane.f32.xlu0 %v2777
    %v2779 = vpop.xlane.xlu0 %2778
    %v2780 = vrcp.pop %v2779
    %v2781 = vmul.f32 %v2776, %v2780
    %v2782 = vpack.c.bf16 %v2781, %v2781
    %2783 = vrot.lane.b32.xlu0 %v2721, 64
    %v2784 = vpop.permute.xlu0 %2783
    %v2786 = vsel %vm797, %v2782, 0
    %v2789 = vand.u32 %v2784, %v804
    %2791 = vmatprep.subr.bf16.mxu0 0
    %2792 = vmatpush1.bf16.msra.mxu0 0
    %2793 = vmatprep.subr.bf16.mxu0 0
    %2794 = vmatpush1.bf16.msra.mxu0 0
    %2795 = vmatprep.subr.bf16.mxu0 0
    %2796 = vmatpush1.bf16.msra.mxu0 0
    %2797 = vmatprep.subr.bf16.mxu0 0
    %2798 = vmatpush1.bf16.msra.mxu0 0
    %2799 = vmatprep.subr.bf16.mxu0 0
    %2800 = vmatpush1.bf16.msra.mxu0 0
    %2801 = vmatprep.subr.bf16.mxu0 0
    %2802 = vmatpush1.bf16.msra.mxu0 0
    %2803 = vmatprep.subr.bf16.mxu0 0
    %2804 = vmatpush1.bf16.msra.mxu0 0
    %2805 = vmatprep.subr.bf16.mxu0 0
    %2806 = vmatpush1.bf16.msra.mxu0 %v2789
    %2807 = vmatprep.subr.bf16.mxu0 0
    %2808 = vmatpush2.bf16.msra.mxu0 0
    %2809 = vmatprep.subr.bf16.mxu0 0
    %2810 = vmatpush2.bf16.msra.mxu0 0
    %2811 = vmatprep.subr.bf16.mxu0 0
    %2812 = vmatpush2.bf16.msra.mxu0 0
    %2813 = vmatprep.subr.bf16.mxu0 0
    %2814 = vmatpush2.bf16.msra.mxu0 0
    %2815 = vmatprep.subr.bf16.mxu0 0
    %2816 = vmatpush2.bf16.msra.mxu0 0
    %2817 = vmatprep.subr.bf16.mxu0 0
    %2818 = vmatpush2.bf16.msra.mxu0 0
    %2819 = vmatprep.subr.bf16.mxu0 0
    %2820 = vmatpush2.bf16.msra.mxu0 0
    %2821 = vmatprep.subr.bf16.mxu0 0
    %2822 = vmatpush2.bf16.msra.mxu0 0
    %2823 = vmatprep.mubr.bf16.mxu0 0
    %2824 = vmatmul.mubr.bf16.gmra.mxu0 %v2786
    %v2825 = vpop.f32.mrf.mxu0
    %v2826 = vadd.f32 0.0, %v2825
    %v2827 = vpop.f32.mrf.mxu0
    %v2828 = vpop.f32.mrf.mxu0
    %v2829 = vpop.f32.mrf.mxu0
    %2830 = vdwg.mxu0
    %2831 = vst.msk [vmem:[#allocation3 + $0x5] sm:$0x1f] %vm848, %v2826
    %2832 = vrot.lane.b32.xlu0 %v2721, 120
    %v2833 = vpop.permute.xlu0 %2832
    %2834 = vrot.lane.b32.xlu0 %v2721, 88
    %v2835 = vpop.permute.xlu0 %2834
    %v2837 = vsel %vm734, %v2833, 0
    %v2840 = vsel %vm734, %v2835, 0
    %2842 = vmatprep.subr.bf16.mxu0 0
    %2843 = vmatpush1.bf16.xpose.msra.mxu0 0
    %2844 = vmatprep.subr.bf16.mxu0 0
    %2845 = vmatpush1.bf16.xpose.msra.mxu0 0
    %2846 = vmatprep.subr.bf16.mxu0 0
    %2847 = vmatpush1.bf16.xpose.msra.mxu0 0
    %2848 = vmatprep.subr.bf16.mxu0 0
    %2849 = vmatpush1.bf16.xpose.msra.mxu0 0
    %2850 = vmatprep.subr.bf16.mxu0 0
    %2851 = vmatpush1.bf16.xpose.msra.mxu0 0
    %2852 = vmatprep.subr.bf16.mxu0 0
    %2853 = vmatpush1.bf16.xpose.msra.mxu0 0
    %2854 = vmatprep.subr.bf16.mxu0 0
    %2855 = vmatpush1.bf16.xpose.msra.mxu0 0
    %2856 = vmatprep.subr.bf16.mxu0 0
    %2857 = vmatpush1.bf16.xpose.msra.mxu0 %v2840
    %2858 = vmatprep.subr.bf16.mxu0 0
    %2859 = vmatpush2.bf16.xpose.msra.mxu0 0
    %2860 = vmatprep.subr.bf16.mxu0 0
    %2861 = vmatpush2.bf16.xpose.msra.mxu0 0
    %2862 = vmatprep.subr.bf16.mxu0 0
    %2863 = vmatpush2.bf16.xpose.msra.mxu0 0
    %2864 = vmatprep.subr.bf16.mxu0 0
    %2865 = vmatpush2.bf16.xpose.msra.mxu0 0
    %2866 = vmatprep.subr.bf16.mxu0 0
    %2867 = vmatpush2.bf16.xpose.msra.mxu0 0
    %2868 = vmatprep.subr.bf16.mxu0 0
    %2869 = vmatpush2.bf16.xpose.msra.mxu0 0
    %2870 = vmatprep.subr.bf16.mxu0 0
    %2871 = vmatpush2.bf16.xpose.msra.mxu0 0
    %2872 = vmatprep.subr.bf16.mxu0 0
    %2873 = vmatpush2.bf16.xpose.msra.mxu0 0
    %2874 = vmatprep.mubr.bf16.mxu0 0
    %2875 = vmatmul.mubr.bf16.gmra.mxu0 %v2837
    %v2876 = vpop.f32.mrf.mxu0
    %v2877 = vadd.f32 0.0, %v2876
    %v2878 = vpop.f32.mrf.mxu0
    %v2879 = vpop.f32.mrf.mxu0
    %v2880 = vpop.f32.mrf.mxu0
    %2881 = vdwg.mxu0
    %v2882 = vmul.f32 %v2877, 0.35355338
    %v2883 = vsel %vm782, %v2882, -inf
    %2884 = vmax.xlane.f32.xlu0 %v2883
    %v2885 = vpop.xlane.xlu0 %2884
    %v2886 = vsub.f32 %v2882, %v2885
    %v2887 = vmul.f32 %v2886, 1.442695
    %v2888 = vpow.pop %v2887
    %v2889 = vsel %vm782, %v2888, 0.0
    %2890 = vadd.xlane.f32.xlu0 %v2889
    %v2891 = vpop.xlane.xlu0 %2890
    %v2892 = vrcp.pop %v2891
    %v2893 = vmul.f32 %v2888, %v2892
    %v2894 = vpack.c.bf16 %v2893, %v2893
    %2895 = vrot.lane.b32.xlu0 %v2721, 56
    %v2896 = vpop.permute.xlu0 %2895
    %v2898 = vsel %vm797, %v2894, 0
    %v2901 = vand.u32 %v2896, %v804
    %2903 = vmatprep.subr.bf16.mxu0 0
    %2904 = vmatpush1.bf16.msra.mxu0 0
    %2905 = vmatprep.subr.bf16.mxu0 0
    %2906 = vmatpush1.bf16.msra.mxu0 0
    %2907 = vmatprep.subr.bf16.mxu0 0
    %2908 = vmatpush1.bf16.msra.mxu0 0
    %2909 = vmatprep.subr.bf16.mxu0 0
    %2910 = vmatpush1.bf16.msra.mxu0 0
    %2911 = vmatprep.subr.bf16.mxu0 0
    %2912 = vmatpush1.bf16.msra.mxu0 0
    %2913 = vmatprep.subr.bf16.mxu0 0
    %2914 = vmatpush1.bf16.msra.mxu0 0
    %2915 = vmatprep.subr.bf16.mxu0 0
    %2916 = vmatpush1.bf16.msra.mxu0 0
    %2917 = vmatprep.subr.bf16.mxu0 0
    %2918 = vmatpush1.bf16.msra.mxu0 %v2901
    %2919 = vmatprep.subr.bf16.mxu0 0
    %2920 = vmatpush2.bf16.msra.mxu0 0
    %2921 = vmatprep.subr.bf16.mxu0 0
    %2922 = vmatpush2.bf16.msra.mxu0 0
    %2923 = vmatprep.subr.bf16.mxu0 0
    %2924 = vmatpush2.bf16.msra.mxu0 0
    %2925 = vmatprep.subr.bf16.mxu0 0
    %2926 = vmatpush2.bf16.msra.mxu0 0
    %2927 = vmatprep.subr.bf16.mxu0 0
    %2928 = vmatpush2.bf16.msra.mxu0 0
    %2929 = vmatprep.subr.bf16.mxu0 0
    %2930 = vmatpush2.bf16.msra.mxu0 0
    %2931 = vmatprep.subr.bf16.mxu0 0
    %2932 = vmatpush2.bf16.msra.mxu0 0
    %2933 = vmatprep.subr.bf16.mxu0 0
    %2934 = vmatpush2.bf16.msra.mxu0 0
    %2935 = vmatprep.mubr.bf16.mxu0 0
    %2936 = vmatmul.mubr.bf16.gmra.mxu0 %v2898
    %v2937 = vpop.f32.mrf.mxu0
    %v2938 = vadd.f32 0.0, %v2937
    %v2939 = vpop.f32.mrf.mxu0
    %v2940 = vpop.f32.mrf.mxu0
    %v2941 = vpop.f32.mrf.mxu0
    %2942 = vdwg.mxu0
    %2943 = vst.msk [vmem:[%s961 + $0x5] sm:$0x1f] %vm848, %v2938
    %2944 = vrot.lane.b32.xlu0 %v2721, 112
    %v2945 = vpop.permute.xlu0 %2944
    %2946 = vrot.lane.b32.xlu0 %v2721, 80
    %v2947 = vpop.permute.xlu0 %2946
    %v2949 = vsel %vm734, %v2945, 0
    %v2952 = vsel %vm734, %v2947, 0
    %2954 = vmatprep.subr.bf16.mxu0 0
    %2955 = vmatpush1.bf16.xpose.msra.mxu0 0
    %2956 = vmatprep.subr.bf16.mxu0 0
    %2957 = vmatpush1.bf16.xpose.msra.mxu0 0
    %2958 = vmatprep.subr.bf16.mxu0 0
    %2959 = vmatpush1.bf16.xpose.msra.mxu0 0
    %2960 = vmatprep.subr.bf16.mxu0 0
    %2961 = vmatpush1.bf16.xpose.msra.mxu0 0
    %2962 = vmatprep.subr.bf16.mxu0 0
    %2963 = vmatpush1.bf16.xpose.msra.mxu0 0
    %2964 = vmatprep.subr.bf16.mxu0 0
    %2965 = vmatpush1.bf16.xpose.msra.mxu0 0
    %2966 = vmatprep.subr.bf16.mxu0 0
    %2967 = vmatpush1.bf16.xpose.msra.mxu0 0
    %2968 = vmatprep.subr.bf16.mxu0 0
    %2969 = vmatpush1.bf16.xpose.msra.mxu0 %v2952
    %2970 = vmatprep.subr.bf16.mxu0 0
    %2971 = vmatpush2.bf16.xpose.msra.mxu0 0
    %2972 = vmatprep.subr.bf16.mxu0 0
    %2973 = vmatpush2.bf16.xpose.msra.mxu0 0
    %2974 = vmatprep.subr.bf16.mxu0 0
    %2975 = vmatpush2.bf16.xpose.msra.mxu0 0
    %2976 = vmatprep.subr.bf16.mxu0 0
    %2977 = vmatpush2.bf16.xpose.msra.mxu0 0
    %2978 = vmatprep.subr.bf16.mxu0 0
    %2979 = vmatpush2.bf16.xpose.msra.mxu0 0
    %2980 = vmatprep.subr.bf16.mxu0 0
    %2981 = vmatpush2.bf16.xpose.msra.mxu0 0
    %2982 = vmatprep.subr.bf16.mxu0 0
    %2983 = vmatpush2.bf16.xpose.msra.mxu0 0
    %2984 = vmatprep.subr.bf16.mxu0 0
    %2985 = vmatpush2.bf16.xpose.msra.mxu0 0
    %2986 = vmatprep.mubr.bf16.mxu0 0
    %2987 = vmatmul.mubr.bf16.gmra.mxu0 %v2949
    %v2988 = vpop.f32.mrf.mxu0
    %v2989 = vadd.f32 0.0, %v2988
    %v2990 = vpop.f32.mrf.mxu0
    %v2991 = vpop.f32.mrf.mxu0
    %v2992 = vpop.f32.mrf.mxu0
    %2993 = vdwg.mxu0
    %v2994 = vmul.f32 %v2989, 0.35355338
    %v2995 = vsel %vm782, %v2994, -inf
    %2996 = vmax.xlane.f32.xlu0 %v2995
    %v2997 = vpop.xlane.xlu0 %2996
    %v2998 = vsub.f32 %v2994, %v2997
    %v2999 = vmul.f32 %v2998, 1.442695
    %v3000 = vpow.pop %v2999
    %v3001 = vsel %vm782, %v3000, 0.0
    %3002 = vadd.xlane.f32.xlu0 %v3001
    %v3003 = vpop.xlane.xlu0 %3002
    %v3004 = vrcp.pop %v3003
    %v3005 = vmul.f32 %v3000, %v3004
    %v3006 = vpack.c.bf16 %v3005, %v3005
    %3007 = vrot.lane.b32.xlu0 %v2721, 48
    %v3008 = vpop.permute.xlu0 %3007
    %v3010 = vsel %vm797, %v3006, 0
    %v3013 = vand.u32 %v3008, %v804
    %3015 = vmatprep.subr.bf16.mxu0 0
    %3016 = vmatpush1.bf16.msra.mxu0 0
    %3017 = vmatprep.subr.bf16.mxu0 0
    %3018 = vmatpush1.bf16.msra.mxu0 0
    %3019 = vmatprep.subr.bf16.mxu0 0
    %3020 = vmatpush1.bf16.msra.mxu0 0
    %3021 = vmatprep.subr.bf16.mxu0 0
    %3022 = vmatpush1.bf16.msra.mxu0 0
    %3023 = vmatprep.subr.bf16.mxu0 0
    %3024 = vmatpush1.bf16.msra.mxu0 0
    %3025 = vmatprep.subr.bf16.mxu0 0
    %3026 = vmatpush1.bf16.msra.mxu0 0
    %3027 = vmatprep.subr.bf16.mxu0 0
    %3028 = vmatpush1.bf16.msra.mxu0 0
    %3029 = vmatprep.subr.bf16.mxu0 0
    %3030 = vmatpush1.bf16.msra.mxu0 %v3013
    %3031 = vmatprep.subr.bf16.mxu0 0
    %3032 = vmatpush2.bf16.msra.mxu0 0
    %3033 = vmatprep.subr.bf16.mxu0 0
    %3034 = vmatpush2.bf16.msra.mxu0 0
    %3035 = vmatprep.subr.bf16.mxu0 0
    %3036 = vmatpush2.bf16.msra.mxu0 0
    %3037 = vmatprep.subr.bf16.mxu0 0
    %3038 = vmatpush2.bf16.msra.mxu0 0
    %3039 = vmatprep.subr.bf16.mxu0 0
    %3040 = vmatpush2.bf16.msra.mxu0 0
    %3041 = vmatprep.subr.bf16.mxu0 0
    %3042 = vmatpush2.bf16.msra.mxu0 0
    %3043 = vmatprep.subr.bf16.mxu0 0
    %3044 = vmatpush2.bf16.msra.mxu0 0
    %3045 = vmatprep.subr.bf16.mxu0 0
    %3046 = vmatpush2.bf16.msra.mxu0 0
    %3047 = vmatprep.mubr.bf16.mxu0 0
    %3048 = vmatmul.mubr.bf16.gmra.mxu0 %v3010
    %v3049 = vpop.f32.mrf.mxu0
    %v3050 = vadd.f32 0.0, %v3049
    %v3051 = vpop.f32.mrf.mxu0
    %v3052 = vpop.f32.mrf.mxu0
    %v3053 = vpop.f32.mrf.mxu0
    %3054 = vdwg.mxu0
    %3055 = vst.msk [vmem:[%s1074 + $0x5] sm:$0x1f] %vm848, %v3050
    %3056 = vrot.lane.b32.xlu0 %v2721, 104
    %v3057 = vpop.permute.xlu0 %3056
    %3058 = vrot.lane.b32.xlu0 %v2721, 72
    %v3059 = vpop.permute.xlu0 %3058
    %v3061 = vsel %vm734, %v3057, 0
    %v3064 = vsel %vm734, %v3059, 0
    %3066 = vmatprep.subr.bf16.mxu0 0
    %3067 = vmatpush1.bf16.xpose.msra.mxu0 0
    %3068 = vmatprep.subr.bf16.mxu0 0
    %3069 = vmatpush1.bf16.xpose.msra.mxu0 0
    %3070 = vmatprep.subr.bf16.mxu0 0
    %3071 = vmatpush1.bf16.xpose.msra.mxu0 0
    %3072 = vmatprep.subr.bf16.mxu0 0
    %3073 = vmatpush1.bf16.xpose.msra.mxu0 0
    %3074 = vmatprep.subr.bf16.mxu0 0
    %3075 = vmatpush1.bf16.xpose.msra.mxu0 0
    %3076 = vmatprep.subr.bf16.mxu0 0
    %3077 = vmatpush1.bf16.xpose.msra.mxu0 0
    %3078 = vmatprep.subr.bf16.mxu0 0
    %3079 = vmatpush1.bf16.xpose.msra.mxu0 0
    %3080 = vmatprep.subr.bf16.mxu0 0
    %3081 = vmatpush1.bf16.xpose.msra.mxu0 %v3064
    %3082 = vmatprep.subr.bf16.mxu0 0
    %3083 = vmatpush2.bf16.xpose.msra.mxu0 0
    %3084 = vmatprep.subr.bf16.mxu0 0
    %3085 = vmatpush2.bf16.xpose.msra.mxu0 0
    %3086 = vmatprep.subr.bf16.mxu0 0
    %3087 = vmatpush2.bf16.xpose.msra.mxu0 0
    %3088 = vmatprep.subr.bf16.mxu0 0
    %3089 = vmatpush2.bf16.xpose.msra.mxu0 0
    %3090 = vmatprep.subr.bf16.mxu0 0
    %3091 = vmatpush2.bf16.xpose.msra.mxu0 0
    %3092 = vmatprep.subr.bf16.mxu0 0
    %3093 = vmatpush2.bf16.xpose.msra.mxu0 0
    %3094 = vmatprep.subr.bf16.mxu0 0
    %3095 = vmatpush2.bf16.xpose.msra.mxu0 0
    %3096 = vmatprep.subr.bf16.mxu0 0
    %3097 = vmatpush2.bf16.xpose.msra.mxu0 0
    %3098 = vmatprep.mubr.bf16.mxu0 0
    %3099 = vmatmul.mubr.bf16.gmra.mxu0 %v3061
    %v3100 = vpop.f32.mrf.mxu0
    %v3101 = vadd.f32 0.0, %v3100
    %v3102 = vpop.f32.mrf.mxu0
    %v3103 = vpop.f32.mrf.mxu0
    %v3104 = vpop.f32.mrf.mxu0
    %3105 = vdwg.mxu0
    %v3106 = vmul.f32 %v3101, 0.35355338
    %v3107 = vsel %vm782, %v3106, -inf
    %3108 = vmax.xlane.f32.xlu0 %v3107
    %v3109 = vpop.xlane.xlu0 %3108
    %v3110 = vsub.f32 %v3106, %v3109
    %v3111 = vmul.f32 %v3110, 1.442695
    %v3112 = vpow.pop %v3111
    %v3113 = vsel %vm782, %v3112, 0.0
    %3114 = vadd.xlane.f32.xlu0 %v3113
    %v3115 = vpop.xlane.xlu0 %3114
    %v3116 = vrcp.pop %v3115
    %v3117 = vmul.f32 %v3112, %v3116
    %v3118 = vpack.c.bf16 %v3117, %v3117
    %3119 = vrot.lane.b32.xlu0 %v2721, 40
    %v3120 = vpop.permute.xlu0 %3119
    %v3122 = vsel %vm797, %v3118, 0
    %v3125 = vand.u32 %v3120, %v804
    %3127 = vmatprep.subr.bf16.mxu0 0
    %3128 = vmatpush1.bf16.msra.mxu0 0
    %3129 = vmatprep.subr.bf16.mxu0 0
    %3130 = vmatpush1.bf16.msra.mxu0 0
    %3131 = vmatprep.subr.bf16.mxu0 0
    %3132 = vmatpush1.bf16.msra.mxu0 0
    %3133 = vmatprep.subr.bf16.mxu0 0
    %3134 = vmatpush1.bf16.msra.mxu0 0
    %3135 = vmatprep.subr.bf16.mxu0 0
    %3136 = vmatpush1.bf16.msra.mxu0 0
    %3137 = vmatprep.subr.bf16.mxu0 0
    %3138 = vmatpush1.bf16.msra.mxu0 0
    %3139 = vmatprep.subr.bf16.mxu0 0
    %3140 = vmatpush1.bf16.msra.mxu0 0
    %3141 = vmatprep.subr.bf16.mxu0 0
    %3142 = vmatpush1.bf16.msra.mxu0 %v3125
    %3143 = vmatprep.subr.bf16.mxu0 0
    %3144 = vmatpush2.bf16.msra.mxu0 0
    %3145 = vmatprep.subr.bf16.mxu0 0
    %3146 = vmatpush2.bf16.msra.mxu0 0
    %3147 = vmatprep.subr.bf16.mxu0 0
    %3148 = vmatpush2.bf16.msra.mxu0 0
    %3149 = vmatprep.subr.bf16.mxu0 0
    %3150 = vmatpush2.bf16.msra.mxu0 0
    %3151 = vmatprep.subr.bf16.mxu0 0
    %3152 = vmatpush2.bf16.msra.mxu0 0
    %3153 = vmatprep.subr.bf16.mxu0 0
    %3154 = vmatpush2.bf16.msra.mxu0 0
    %3155 = vmatprep.subr.bf16.mxu0 0
    %3156 = vmatpush2.bf16.msra.mxu0 0
    %3157 = vmatprep.subr.bf16.mxu0 0
    %3158 = vmatpush2.bf16.msra.mxu0 0
    %3159 = vmatprep.mubr.bf16.mxu0 0
    %3160 = vmatmul.mubr.bf16.gmra.mxu0 %v3122
    %v3161 = vpop.f32.mrf.mxu0
    %v3162 = vadd.f32 0.0, %v3161
    %v3163 = vpop.f32.mrf.mxu0
    %v3164 = vpop.f32.mrf.mxu0
    %v3165 = vpop.f32.mrf.mxu0
    %3166 = vdwg.mxu0
    %3167 = vst.msk [vmem:[%s1187 + $0x5] sm:$0x1f] %vm848, %v3162
    %s3168 = scalar_lea.vmem %s10, 1
    %v3169 = vld [vmem:[%s3168] sm:$0x1]
    %v3170 = vld [vmem:[#allocation3] sm:$0xff]
    %v3171 = vld [vmem:[#allocation3 + $0x8] sm:$0x3]
    %s3172 = scalar_lea.vmem %s9, 16
    %v3173 = vld [vmem:[%s3172] sm:$0xf]
    %v3174 = vpack.c.bf16 %v3171, %v3170
    %v3176 = vsel %vm734, %v3174, 0
    %v3179 = vsel %vm1652, %v3173, 0
    %3181 = vmatprep.subr.bf16.mxu0 0
    %3182 = vmatpush1.bf16.msra.mxu0 0
    %3183 = vmatprep.subr.bf16.mxu0 0
    %3184 = vmatpush1.bf16.msra.mxu0 0
    %3185 = vmatprep.subr.bf16.mxu0 0
    %3186 = vmatpush1.bf16.msra.mxu0 0
    %3187 = vmatprep.subr.bf16.mxu0 0
    %3188 = vmatpush1.bf16.msra.mxu0 0
    %3189 = vmatprep.subr.bf16.mxu0 0
    %3190 = vmatpush1.bf16.msra.mxu0 0
    %3191 = vmatprep.subr.bf16.mxu0 0
    %3192 = vmatpush1.bf16.msra.mxu0 0
    %3193 = vmatprep.subr.bf16.mxu0 0
    %3194 = vmatpush1.bf16.msra.mxu0 0
    %3195 = vmatprep.subr.bf16.mxu0 0
    %3196 = vmatpush1.bf16.msra.mxu0 %v3179
    %3197 = vmatprep.subr.bf16.mxu0 0
    %3198 = vmatpush2.bf16.msra.mxu0 0
    %3199 = vmatprep.subr.bf16.mxu0 0
    %3200 = vmatpush2.bf16.msra.mxu0 0
    %3201 = vmatprep.subr.bf16.mxu0 0
    %3202 = vmatpush2.bf16.msra.mxu0 0
    %3203 = vmatprep.subr.bf16.mxu0 0
    %3204 = vmatpush2.bf16.msra.mxu0 0
    %3205 = vmatprep.subr.bf16.mxu0 0
    %3206 = vmatpush2.bf16.msra.mxu0 0
    %3207 = vmatprep.subr.bf16.mxu0 0
    %3208 = vmatpush2.bf16.msra.mxu0 0
    %3209 = vmatprep.subr.bf16.mxu0 0
    %3210 = vmatpush2.bf16.msra.mxu0 0
    %3211 = vmatprep.subr.bf16.mxu0 0
    %3212 = vmatpush2.bf16.msra.mxu0 0
    %3213 = vmatprep.mubr.bf16.mxu0 0
    %3214 = vmatmul.mubr.bf16.gmra.mxu0 %v3176
    %v3215 = vpop.f32.mrf.mxu0
    %v3216 = vadd.f32 0.0, %v3215
    %v3217 = vpop.f32.mrf.mxu0
    %v3218 = vpop.f32.mrf.mxu0
    %v3219 = vadd.f32 0.0, %v3218
    %v3220 = vpop.f32.mrf.mxu0
    %3221 = vdwg.mxu0
    %v3223 = vlaneseq
    %v3224 = vshrl.u32 %v3223, 7
    %v3225 = vsub.s32 0, %v3224
    %v3226 = vrot.slane %v3169, %v3225
    %v3228 = vadd.f32 %v3226, %v3216
    %v3229 = vadd.f32 %v3226, %v3219
    %v3230 = vld [vmem:[%s961] sm:$0xff]
    %v3231 = vld [vmem:[%s961 + $0x8] sm:$0x3]
    %v3232 = vld [vmem:[%s3172 + $0x4] sm:$0xf]
    %v3233 = vpack.c.bf16 %v3231, %v3230
    %v3235 = vsel %vm734, %v3233, 0
    %v3238 = vsel %vm1652, %v3232, 0
    %3240 = vmatprep.subr.bf16.mxu0 0
    %3241 = vmatpush1.bf16.msra.mxu0 0
    %3242 = vmatprep.subr.bf16.mxu0 0
    %3243 = vmatpush1.bf16.msra.mxu0 0
    %3244 = vmatprep.subr.bf16.mxu0 0
    %3245 = vmatpush1.bf16.msra.mxu0 0
    %3246 = vmatprep.subr.bf16.mxu0 0
    %3247 = vmatpush1.bf16.msra.mxu0 0
    %3248 = vmatprep.subr.bf16.mxu0 0
    %3249 = vmatpush1.bf16.msra.mxu0 0
    %3250 = vmatprep.subr.bf16.mxu0 0
    %3251 = vmatpush1.bf16.msra.mxu0 0
    %3252 = vmatprep.subr.bf16.mxu0 0
    %3253 = vmatpush1.bf16.msra.mxu0 0
    %3254 = vmatprep.subr.bf16.mxu0 0
    %3255 = vmatpush1.bf16.msra.mxu0 %v3238
    %3256 = vmatprep.subr.bf16.mxu0 0
    %3257 = vmatpush2.bf16.msra.mxu0 0
    %3258 = vmatprep.subr.bf16.mxu0 0
    %3259 = vmatpush2.bf16.msra.mxu0 0
    %3260 = vmatprep.subr.bf16.mxu0 0
    %3261 = vmatpush2.bf16.msra.mxu0 0
    %3262 = vmatprep.subr.bf16.mxu0 0
    %3263 = vmatpush2.bf16.msra.mxu0 0
    %3264 = vmatprep.subr.bf16.mxu0 0
    %3265 = vmatpush2.bf16.msra.mxu0 0
    %3266 = vmatprep.subr.bf16.mxu0 0
    %3267 = vmatpush2.bf16.msra.mxu0 0
    %3268 = vmatprep.subr.bf16.mxu0 0
    %3269 = vmatpush2.bf16.msra.mxu0 0
    %3270 = vmatprep.subr.bf16.mxu0 0
    %3271 = vmatpush2.bf16.msra.mxu0 0
    %3272 = vmatprep.mubr.bf16.mxu0 0
    %3273 = vmatmul.mubr.bf16.gmra.mxu0 %v3235
    %v3274 = vpop.f32.mrf.mxu0
    %v3275 = vadd.f32 0.0, %v3274
    %v3276 = vpop.f32.mrf.mxu0
    %v3277 = vpop.f32.mrf.mxu0
    %v3278 = vadd.f32 0.0, %v3277
    %v3279 = vpop.f32.mrf.mxu0
    %3280 = vdwg.mxu0
    %v3281 = vadd.f32 %v3228, %v3275
    %v3282 = vadd.f32 %v3229, %v3278
    %v3283 = vld [vmem:[%s1074] sm:$0xff]
    %v3284 = vld [vmem:[%s1074 + $0x8] sm:$0x3]
    %v3285 = vld [vmem:[%s3172 + $0x8] sm:$0xf]
    %v3286 = vpack.c.bf16 %v3284, %v3283
    %v3288 = vsel %vm734, %v3286, 0
    %v3291 = vsel %vm1652, %v3285, 0
    %3293 = vmatprep.subr.bf16.mxu0 0
    %3294 = vmatpush1.bf16.msra.mxu0 0
    %3295 = vmatprep.subr.bf16.mxu0 0
    %3296 = vmatpush1.bf16.msra.mxu0 0
    %3297 = vmatprep.subr.bf16.mxu0 0
    %3298 = vmatpush1.bf16.msra.mxu0 0
    %3299 = vmatprep.subr.bf16.mxu0 0
    %3300 = vmatpush1.bf16.msra.mxu0 0
    %3301 = vmatprep.subr.bf16.mxu0 0
    %3302 = vmatpush1.bf16.msra.mxu0 0
    %3303 = vmatprep.subr.bf16.mxu0 0
    %3304 = vmatpush1.bf16.msra.mxu0 0
    %3305 = vmatprep.subr.bf16.mxu0 0
    %3306 = vmatpush1.bf16.msra.mxu0 0
    %3307 = vmatprep.subr.bf16.mxu0 0
    %3308 = vmatpush1.bf16.msra.mxu0 %v3291
    %3309 = vmatprep.subr.bf16.mxu0 0
    %3310 = vmatpush2.bf16.msra.mxu0 0
    %3311 = vmatprep.subr.bf16.mxu0 0
    %3312 = vmatpush2.bf16.msra.mxu0 0
    %3313 = vmatprep.subr.bf16.mxu0 0
    %3314 = vmatpush2.bf16.msra.mxu0 0
    %3315 = vmatprep.subr.bf16.mxu0 0
    %3316 = vmatpush2.bf16.msra.mxu0 0
    %3317 = vmatprep.subr.bf16.mxu0 0
    %3318 = vmatpush2.bf16.msra.mxu0 0
    %3319 = vmatprep.subr.bf16.mxu0 0
    %3320 = vmatpush2.bf16.msra.mxu0 0
    %3321 = vmatprep.subr.bf16.mxu0 0
    %3322 = vmatpush2.bf16.msra.mxu0 0
    %3323 = vmatprep.subr.bf16.mxu0 0
    %3324 = vmatpush2.bf16.msra.mxu0 0
    %3325 = vmatprep.mubr.bf16.mxu0 0
    %3326 = vmatmul.mubr.bf16.gmra.mxu0 %v3288
    %v3327 = vpop.f32.mrf.mxu0
    %v3328 = vadd.f32 0.0, %v3327
    %v3329 = vpop.f32.mrf.mxu0
    %v3330 = vpop.f32.mrf.mxu0
    %v3331 = vadd.f32 0.0, %v3330
    %v3332 = vpop.f32.mrf.mxu0
    %3333 = vdwg.mxu0
    %v3334 = vadd.f32 %v3281, %v3328
    %v3335 = vadd.f32 %v3282, %v3331
    %v3336 = vld [vmem:[%s1187] sm:$0xff]
    %v3337 = vld [vmem:[%s1187 + $0x8] sm:$0x3]
    %v3338 = vld [vmem:[%s3172 + $0xc] sm:$0xf]
    %v3339 = vpack.c.bf16 %v3337, %v3336
    %v3341 = vsel %vm734, %v3339, 0
    %v3344 = vsel %vm1652, %v3338, 0
    %3346 = vmatprep.subr.bf16.mxu0 0
    %3347 = vmatpush1.bf16.msra.mxu0 0
    %3348 = vmatprep.subr.bf16.mxu0 0
    %3349 = vmatpush1.bf16.msra.mxu0 0
    %3350 = vmatprep.subr.bf16.mxu0 0
    %3351 = vmatpush1.bf16.msra.mxu0 0
    %3352 = vmatprep.subr.bf16.mxu0 0
    %3353 = vmatpush1.bf16.msra.mxu0 0
    %3354 = vmatprep.subr.bf16.mxu0 0
    %3355 = vmatpush1.bf16.msra.mxu0 0
    %3356 = vmatprep.subr.bf16.mxu0 0
    %3357 = vmatpush1.bf16.msra.mxu0 0
    %3358 = vmatprep.subr.bf16.mxu0 0
    %3359 = vmatpush1.bf16.msra.mxu0 0
    %3360 = vmatprep.subr.bf16.mxu0 0
    %3361 = vmatpush1.bf16.msra.mxu0 %v3344
    %3362 = vmatprep.subr.bf16.mxu0 0
    %3363 = vmatpush2.bf16.msra.mxu0 0
    %3364 = vmatprep.subr.bf16.mxu0 0
    %3365 = vmatpush2.bf16.msra.mxu0 0
    %3366 = vmatprep.subr.bf16.mxu0 0
    %3367 = vmatpush2.bf16.msra.mxu0 0
    %3368 = vmatprep.subr.bf16.mxu0 0
    %3369 = vmatpush2.bf16.msra.mxu0 0
    %3370 = vmatprep.subr.bf16.mxu0 0
    %3371 = vmatpush2.bf16.msra.mxu0 0
    %3372 = vmatprep.subr.bf16.mxu0 0
    %3373 = vmatpush2.bf16.msra.mxu0 0
    %3374 = vmatprep.subr.bf16.mxu0 0
    %3375 = vmatpush2.bf16.msra.mxu0 0
    %3376 = vmatprep.subr.bf16.mxu0 0
    %3377 = vmatpush2.bf16.msra.mxu0 0
    %3378 = vmatprep.mubr.bf16.mxu0 0
    %3379 = vmatmul.mubr.bf16.gmra.mxu0 %v3341
    %v3380 = vpop.f32.mrf.mxu0
    %v3381 = vadd.f32 0.0, %v3380
    %v3382 = vpop.f32.mrf.mxu0
    %v3383 = vpop.f32.mrf.mxu0
    %v3384 = vadd.f32 0.0, %v3383
    %v3385 = vpop.f32.mrf.mxu0
    %3386 = vdwg.mxu0
    %v3387 = vadd.f32 %v3334, %v3381
    %v3388 = vadd.f32 %v3335, %v3384
    %v3389 = vadd.f32 %v2147, %v3387
    %v3390 = vadd.f32 %v2148, %v3388
    %s3391 = scalar_lea.vmem %s11, 1
    %v3392 = vld [vmem:[%s3391] sm:$0x1]
    %s3393 = scalar_lea.vmem %s12, 1
    %v3394 = vld [vmem:[%s3393] sm:$0x1]
    %v3395 = vsel %vm617, %v3389, 0.0
    %3396 = vadd.xlane.f32.xlu0 %v3395
    %v3397 = vpop.xlane.xlu0 %3396
    %v3398 = vsel %vm621, %v3390, 0.0
    %3399 = vadd.xlane.f32.xlu0 %v3398
    %v3400 = vpop.xlane.xlu0 %3399
    %v3401 = vmul.f32 %v3397, %v625
    %v3402 = vmul.f32 %v3400, %v625
    %v3403 = vsub.f32 %v3389, %v3401
    %v3404 = vsub.f32 %v3390, %v3402
    %v3405 = vmul.f32 %v3403, %v3403
    %v3406 = vmul.f32 %v3404, %v3404
    %v3407 = vsel %vm617, %v3405, 0.0
    %3408 = vadd.xlane.f32.xlu0 %v3407
    %v3409 = vpop.xlane.xlu0 %3408
    %v3410 = vsel %vm621, %v3406, 0.0
    %3411 = vadd.xlane.f32.xlu0 %v3410
    %v3412 = vpop.xlane.xlu0 %3411
    %v3413 = vmul.f32 %v3409, %v625
    %v3414 = vmul.f32 %v3412, %v625
    %v3415 = vadd.f32 %v3413, 1e-06
    %v3416 = vadd.f32 %v3414, 1e-06
    %v3417 = vrsqrt.pop %v3415
    %v3418 = vrsqrt.pop %v3416
    %v3419 = vmul.f32 %v3403, %v3417
    %v3420 = vmul.f32 %v3404, %v3418
    %v3422 = vlaneseq
    %v3423 = vshrl.u32 %v3422, 7
    %v3424 = vsub.s32 0, %v3423
    %v3425 = vrot.slane %v3392, %v3424
    %v3427 = vmul.f32 %v3419, %v3425
    %v3428 = vmul.f32 %v3420, %v3425
    %v3430 = vlaneseq
    %v3431 = vshrl.u32 %v3430, 7
    %v3432 = vsub.s32 0, %v3431
    %v3433 = vrot.slane %v3394, %v3432
    %v3435 = vadd.f32 %v3427, %v3433
    %v3436 = vadd.f32 %v3428, %v3433
    %s3437 = scalar_lea.vmem %s13, 16
    %v3438 = vld [vmem:[%s3437] sm:$0xf]
    %v3439 = vld [vmem:[%s3437 + $0x4] sm:$0xf]
    %v3440 = vld [vmem:[%s3437 + $0x8] sm:$0xf]
    %v3441 = vld [vmem:[%s3437 + $0xc] sm:$0xf]
    %v3442 = vpack.c.bf16 %v3436, %v3435
    %s3443 = scalar_lea.vmem %s14, 1
    %v3444 = vld [vmem:[%s3443] sm:$0x1]
    %v3446 = vlaneseq
    %v3447 = vshrl.u32 %v3446, 7
    %v3448 = vsub.s32 0, %v3447
    %v3449 = vrot.slane %v3444, %v3448
    %v3455 = vunpack.c.l.b16 %v3438
    %v3456 = vunpack.c.l.b16 %v3439
    %v3457 = vunpack.c.l.b16 %v3440
    %v3458 = vunpack.c.l.b16 %v3441
    %v3459 = vpack.c.b16 %v3456, %v3455
    %v3460 = vpack.c.b16 %v3458, %v3457
    %v3464 = vsel %vm617, %v3442, 0
    %3466 = vmatprep.subr.bf16.mxu0 0
    %3467 = vmatpush1.bf16.msra.mxu0 0
    %3468 = vmatprep.subr.bf16.mxu0 0
    %3469 = vmatpush1.bf16.msra.mxu0 0
    %3470 = vmatprep.subr.bf16.mxu0 0
    %3471 = vmatpush1.bf16.msra.mxu0 0
    %3472 = vmatprep.subr.bf16.mxu0 0
    %3473 = vmatpush1.bf16.msra.mxu0 0
    %3474 = vmatprep.subr.bf16.mxu0 0
    %3475 = vmatpush1.bf16.msra.mxu0 0
    %3476 = vmatprep.subr.bf16.mxu0 0
    %3477 = vmatpush1.bf16.msra.mxu0 0
    %3478 = vmatprep.subr.bf16.mxu0 0
    %3479 = vmatpush1.bf16.msra.mxu0 %v3460
    %3480 = vmatprep.subr.bf16.mxu0 0
    %3481 = vmatpush1.bf16.msra.mxu0 %v3459
    %3482 = vmatprep.subr.bf16.mxu0 0
    %3483 = vmatpush2.bf16.msra.mxu0 0
    %3484 = vmatprep.subr.bf16.mxu0 0
    %3485 = vmatpush2.bf16.msra.mxu0 0
    %3486 = vmatprep.subr.bf16.mxu0 0
    %3487 = vmatpush2.bf16.msra.mxu0 0
    %3488 = vmatprep.subr.bf16.mxu0 0
    %3489 = vmatpush2.bf16.msra.mxu0 0
    %3490 = vmatprep.subr.bf16.mxu0 0
    %3491 = vmatpush2.bf16.msra.mxu0 0
    %3492 = vmatprep.subr.bf16.mxu0 0
    %3493 = vmatpush2.bf16.msra.mxu0 0
    %3494 = vmatprep.subr.bf16.mxu0 0
    %3495 = vmatpush2.bf16.msra.mxu0 0
    %3496 = vmatprep.subr.bf16.mxu0 0
    %3497 = vmatpush2.bf16.msra.mxu0 0
    %3498 = vmatprep.mubr.bf16.mxu0 0
    %3499 = vmatmul.mubr.bf16.gmra.mxu0 %v3464
    %v3500 = vpop.f32.mrf.mxu0
    %v3501 = vadd.f32 %v3449, %v3500
    %v3502 = vpop.f32.mrf.mxu0
    %v3503 = vpop.f32.mrf.mxu0
    %v3504 = vadd.f32 %v3449, %v3503
    %v3505 = vpop.f32.mrf.mxu0
    %3506 = vdwg.mxu0
    %v3507 = vmul.f32 %v3501, 0.70710677
    %v3508 = vmul.f32 %v3504, 0.70710677
    %v3509 = vand.u32 2147483647, %v3507
    %v3510 = vand.u32 2147483647, %v3508
    %v3511 = vmul.f32 %v3509, 0.3275911
    %v3512 = vmul.f32 %v3510, 0.3275911
    %v3513 = vadd.f32 %v3511, 1.0
    %v3514 = vadd.f32 %v3512, 1.0
    %v3515 = vrcp.pop %v3513
    %v3516 = vmul.f32 1.0, %v3515
    %v3517 = vrcp.pop %v3514
    %v3518 = vmul.f32 1.0, %v3517
    %v3519 = vmul.f32 %v3516, 1.0614054
    %v3520 = vmul.f32 %v3518, 1.0614054
    %v3521 = vsub.f32 %v3519, 1.4531521
    %v3522 = vsub.f32 %v3520, 1.4531521
    %v3523 = vmul.f32 %v3521, %v3516
    %v3524 = vmul.f32 %v3522, %v3518
    %v3525 = vadd.f32 %v3523, 1.4214138
    %v3526 = vadd.f32 %v3524, 1.4214138
    %v3527 = vmul.f32 %v3525, %v3516
    %v3528 = vmul.f32 %v3526, %v3518
    %v3529 = vsub.f32 %v3527, 0.28449672
    %v3530 = vsub.f32 %v3528, 0.28449672
    %v3531 = vmul.f32 %v3529, %v3516
    %v3532 = vmul.f32 %v3530, %v3518
    %v3533 = vadd.f32 %v3531, 0.2548296
    %v3534 = vadd.f32 %v3532, 0.2548296
    %v3535 = vmul.f32 %v3533, %v3516
    %v3536 = vmul.f32 %v3534, %v3518
    %v3537 = vsub.f32 0.0, %v3509
    %v3538 = vsub.f32 0.0, %v3510
    %v3539 = vmul.f32 %v3537, %v3509
    %v3540 = vmul.f32 %v3538, %v3510
    %v3541 = vmul.f32 %v3539, 1.442695
    %v3542 = vpow.pop %v3541
    %v3543 = vmul.f32 %v3540, 1.442695
    %v3544 = vpow.pop %v3543
    %v3545 = vmul.f32 %v3535, %v3542
    %v3546 = vmul.f32 %v3536, %v3544
    %v3547 = vsub.f32 1.0, %v3545
    %v3548 = vsub.f32 1.0, %v3546
    %vm3549 = vcmp.ge.f32.partialorder %v3507, 0.0
    %vm3550 = vcmp.ge.f32.partialorder %v3508, 0.0
    %v3551 = vsub.f32 0.0, %v3547
    %v3552 = vsub.f32 0.0, %v3548
    %v3553 = vsel %vm3549, %v3547, %v3551
    %v3554 = vsel %vm3550, %v3548, %v3552
    %v3555 = vmul.f32 %v3501, 0.5
    %v3556 = vmul.f32 %v3504, 0.5
    %v3557 = vadd.f32 %v3553, 1.0
    %v3558 = vadd.f32 %v3554, 1.0
    %v3559 = vmul.f32 %v3555, %v3557
    %v3560 = vmul.f32 %v3556, %v3558
    %s3561 = scalar_lea.vmem %s15, 64
    %v3562 = vld [vmem:[%s3561] sm:$0xf]
    %v3563 = vld [vmem:[%s3561 + $0x4] sm:$0xf]
    %v3564 = vld [vmem:[%s3561 + $0x8] sm:$0xf]
    %v3565 = vld [vmem:[%s3561 + $0xc] sm:$0xf]
    %v3566 = vld [vmem:[%s3561 + $0x10] sm:$0xf]
    %v3567 = vld [vmem:[%s3561 + $0x14] sm:$0xf]
    %v3568 = vld [vmem:[%s3561 + $0x18] sm:$0xf]
    %v3569 = vld [vmem:[%s3561 + $0x1c] sm:$0xf]
    %v3570 = vld [vmem:[%s3561 + $0x20] sm:$0xf]
    %v3571 = vld [vmem:[%s3561 + $0x24] sm:$0xf]
    %v3572 = vld [vmem:[%s3561 + $0x28] sm:$0xf]
    %v3573 = vld [vmem:[%s3561 + $0x2c] sm:$0xf]
    %v3574 = vld [vmem:[%s3561 + $0x30] sm:$0xf]
    %v3575 = vld [vmem:[%s3561 + $0x34] sm:$0xf]
    %v3576 = vld [vmem:[%s3561 + $0x38] sm:$0xf]
    %v3577 = vld [vmem:[%s3561 + $0x3c] sm:$0xf]
    %v3578 = vpack.c.bf16 %v3560, %v3559
    %v3595 = vunpack.c.l.b16 %v3562
    %v3596 = vunpack.c.l.b16 %v3563
    %v3597 = vunpack.c.l.b16 %v3564
    %v3598 = vunpack.c.l.b16 %v3565
    %v3599 = vunpack.c.l.b16 %v3566
    %v3600 = vunpack.c.l.b16 %v3567
    %v3601 = vunpack.c.l.b16 %v3568
    %v3602 = vunpack.c.l.b16 %v3569
    %v3603 = vunpack.c.l.b16 %v3570
    %v3604 = vunpack.c.l.b16 %v3571
    %v3605 = vunpack.c.l.b16 %v3572
    %v3606 = vunpack.c.l.b16 %v3573
    %v3607 = vunpack.c.l.b16 %v3574
    %v3608 = vunpack.c.l.b16 %v3575
    %v3609 = vunpack.c.l.b16 %v3576
    %v3610 = vunpack.c.l.b16 %v3577
    %v3611 = vpack.c.b16 %v3596, %v3595
    %v3612 = vpack.c.b16 %v3598, %v3597
    %v3613 = vpack.c.b16 %v3600, %v3599
    %v3614 = vpack.c.b16 %v3602, %v3601
    %v3615 = vpack.c.b16 %v3604, %v3603
    %v3616 = vpack.c.b16 %v3606, %v3605
    %v3617 = vpack.c.b16 %v3608, %v3607
    %v3618 = vpack.c.b16 %v3610, %v3609
    %3627 = vmatprep.subr.bf16.mxu0 0
    %3628 = vmatpush1.bf16.msra.mxu0 %v3618
    %3629 = vmatprep.subr.bf16.mxu0 0
    %3630 = vmatpush1.bf16.msra.mxu0 %v3617
    %3631 = vmatprep.subr.bf16.mxu0 0
    %3632 = vmatpush1.bf16.msra.mxu0 %v3616
    %3633 = vmatprep.subr.bf16.mxu0 0
    %3634 = vmatpush1.bf16.msra.mxu0 %v3615
    %3635 = vmatprep.subr.bf16.mxu0 0
    %3636 = vmatpush1.bf16.msra.mxu0 %v3614
    %3637 = vmatprep.subr.bf16.mxu0 0
    %3638 = vmatpush1.bf16.msra.mxu0 %v3613
    %3639 = vmatprep.subr.bf16.mxu0 0
    %3640 = vmatpush1.bf16.msra.mxu0 %v3612
    %3641 = vmatprep.subr.bf16.mxu0 0
    %3642 = vmatpush1.bf16.msra.mxu0 %v3611
    %3643 = vmatprep.subr.bf16.mxu0 0
    %3644 = vmatpush2.bf16.msra.mxu0 0
    %3645 = vmatprep.subr.bf16.mxu0 0
    %3646 = vmatpush2.bf16.msra.mxu0 0
    %3647 = vmatprep.subr.bf16.mxu0 0
    %3648 = vmatpush2.bf16.msra.mxu0 0
    %3649 = vmatprep.subr.bf16.mxu0 0
    %3650 = vmatpush2.bf16.msra.mxu0 0
    %3651 = vmatprep.subr.bf16.mxu0 0
    %3652 = vmatpush2.bf16.msra.mxu0 0
    %3653 = vmatprep.subr.bf16.mxu0 0
    %3654 = vmatpush2.bf16.msra.mxu0 0
    %3655 = vmatprep.subr.bf16.mxu0 0
    %3656 = vmatpush2.bf16.msra.mxu0 0
    %3657 = vmatprep.subr.bf16.mxu0 0
    %3658 = vmatpush2.bf16.msra.mxu0 0
    %3659 = vmatprep.mubr.bf16.mxu0 0
    %3660 = vmatmul.mubr.bf16.gmra.mxu0 %v3578
    %v3661 = vpop.f32.mrf.mxu0
    %v3662 = vadd.f32 0.0, %v3661
    %v3663 = vpop.f32.mrf.mxu0
    %v3664 = vpop.f32.mrf.mxu0
    %v3665 = vpop.f32.mrf.mxu0
    %3666 = vdwg.mxu0
    %v3667 = vadd.f32 %v3389, %v3662
    %s3668 = scalar_lea.vmem %s16, 1
    %v3669 = vld [vmem:[%s3668] sm:$0x1]
    %v3671 = vlaneseq
    %v3672 = vshrl.u32 %v3671, 7
    %v3673 = vsub.s32 0, %v3672
    %v3674 = vrot.slane %v3669, %v3673
    %v3676 = vadd.f32 %v3667, %v3674
    %v3677 = vld [vmem:[%s17] sm:$0x1]
    %v3678 = vld [vmem:[%s18] sm:$0x1]
    %v3679 = vsel %vm617, %v3676, 0.0
    %3680 = vadd.xlane.f32.xlu0 %v3679
    %v3681 = vpop.xlane.xlu0 %3680
    %v3682 = vmul.f32 %v3681, %v625
    %v3683 = vsub.f32 %v3676, %v3682
    %v3684 = vmul.f32 %v3683, %v3683
    %v3685 = vsel %vm617, %v3684, 0.0
    %3686 = vadd.xlane.f32.xlu0 %v3685
    %v3687 = vpop.xlane.xlu0 %3686
    %v3688 = vmul.f32 %v3687, %v625
    %v3689 = vadd.f32 %v3688, 1e-06
    %v3690 = vrsqrt.pop %v3689
    %v3691 = vmul.f32 %v3683, %v3690
    %v3693 = vlaneseq
    %v3694 = vshrl.u32 %v3693, 7
    %v3695 = vsub.s32 0, %v3694
    %v3696 = vrot.slane %v3677, %v3695
    %v3698 = vmul.f32 %v3691, %v3696
    %v3700 = vlaneseq
    %v3701 = vshrl.u32 %v3700, 7
    %v3702 = vsub.s32 0, %v3701
    %v3703 = vrot.slane %v3678, %v3702
    %v3705 = vadd.f32 %v3698, %v3703
    %v3706 = vld [vmem:[%s19] sm:$0xf]
    %v3707 = vld [vmem:[%s19 + $0x4] sm:$0xf]
    %v3708 = vld [vmem:[%s19 + $0x8] sm:$0xf]
    %v3709 = vld [vmem:[%s19 + $0xc] sm:$0xf]
    %v3710 = vpack.c.bf16 %v3705, %v3705
    %v3711 = vld [vmem:[%s20] sm:$0x1]
    %v3716 = vunpack.c.l.b16 %v3706
    %v3717 = vunpack.c.l.b16 %v3707
    %v3718 = vunpack.c.l.b16 %v3708
    %v3719 = vunpack.c.l.b16 %v3709
    %v3720 = vpack.c.b16 %v3717, %v3716
    %v3721 = vpack.c.b16 %v3719, %v3718
    %v3725 = vsel %vm617, %v3710, 0
    %3727 = vmatprep.subr.bf16.mxu0 0
    %3728 = vmatpush1.bf16.msra.mxu0 0
    %3729 = vmatprep.subr.bf16.mxu0 0
    %3730 = vmatpush1.bf16.msra.mxu0 0
    %3731 = vmatprep.subr.bf16.mxu0 0
    %3732 = vmatpush1.bf16.msra.mxu0 0
    %3733 = vmatprep.subr.bf16.mxu0 0
    %3734 = vmatpush1.bf16.msra.mxu0 0
    %3735 = vmatprep.subr.bf16.mxu0 0
    %3736 = vmatpush1.bf16.msra.mxu0 0
    %3737 = vmatprep.subr.bf16.mxu0 0
    %3738 = vmatpush1.bf16.msra.mxu0 0
    %3739 = vmatprep.subr.bf16.mxu0 0
    %3740 = vmatpush1.bf16.msra.mxu0 %v3721
    %3741 = vmatprep.subr.bf16.mxu0 0
    %3742 = vmatpush1.bf16.msra.mxu0 %v3720
    %3743 = vmatprep.subr.bf16.mxu0 0
    %3744 = vmatpush2.bf16.msra.mxu0 0
    %3745 = vmatprep.subr.bf16.mxu0 0
    %3746 = vmatpush2.bf16.msra.mxu0 0
    %3747 = vmatprep.subr.bf16.mxu0 0
    %3748 = vmatpush2.bf16.msra.mxu0 0
    %3749 = vmatprep.subr.bf16.mxu0 0
    %3750 = vmatpush2.bf16.msra.mxu0 0
    %3751 = vmatprep.subr.bf16.mxu0 0
    %3752 = vmatpush2.bf16.msra.mxu0 0
    %3753 = vmatprep.subr.bf16.mxu0 0
    %3754 = vmatpush2.bf16.msra.mxu0 0
    %3755 = vmatprep.subr.bf16.mxu0 0
    %3756 = vmatpush2.bf16.msra.mxu0 0
    %3757 = vmatprep.subr.bf16.mxu0 0
    %3758 = vmatpush2.bf16.msra.mxu0 0
    %3759 = vmatprep.mubr.bf16.mxu0 0
    %3760 = vmatmul.mubr.bf16.gmra.mxu0 %v3725
    %v3761 = vpop.f32.mrf.mxu0
    %v3762 = vadd.f32 %v3711, %v3761
    %v3763 = vpop.f32.mrf.mxu0
    %v3764 = vpop.f32.mrf.mxu0
    %v3765 = vpop.f32.mrf.mxu0
    %3766 = vdwg.mxu0
    %3767 = vst [vmem:[#allocation4] sm:$0x1] %v3762
    %v3768 = vld [vmem:[%s19] sm:$0xf]
    %v3769 = vld [vmem:[%s19 + $0x4] sm:$0xf]
    %v3770 = vld [vmem:[%s19 + $0x8] sm:$0xf]
    %v3771 = vld [vmem:[%s19 + $0xc] sm:$0xf]
    %v3772 = vld [vmem:[%s20] sm:$0x1]
    %v3773 = vshrl.u32 %v3710, 16
    %v3775 = vrot.slane %v3773, 2
    %v3780 = vunpack.c.l.b16 %v3768
    %v3781 = vunpack.c.l.b16 %v3769
    %v3782 = vunpack.c.l.b16 %v3770
    %v3783 = vunpack.c.l.b16 %v3771
    %v3784 = vpack.c.b16 %v3781, %v3780
    %v3785 = vpack.c.b16 %v3783, %v3782
    %v3789 = vsel %vm617, %v3775, 0
    %3791 = vmatprep.subr.bf16.mxu0 0
    %3792 = vmatpush1.bf16.msra.mxu0 0
    %3793 = vmatprep.subr.bf16.mxu0 0
    %3794 = vmatpush1.bf16.msra.mxu0 0
    %3795 = vmatprep.subr.bf16.mxu0 0
    %3796 = vmatpush1.bf16.msra.mxu0 0
    %3797 = vmatprep.subr.bf16.mxu0 0
    %3798 = vmatpush1.bf16.msra.mxu0 0
    %3799 = vmatprep.subr.bf16.mxu0 0
    %3800 = vmatpush1.bf16.msra.mxu0 0
    %3801 = vmatprep.subr.bf16.mxu0 0
    %3802 = vmatpush1.bf16.msra.mxu0 0
    %3803 = vmatprep.subr.bf16.mxu0 0
    %3804 = vmatpush1.bf16.msra.mxu0 %v3785
    %3805 = vmatprep.subr.bf16.mxu0 0
    %3806 = vmatpush1.bf16.msra.mxu0 %v3784
    %3807 = vmatprep.subr.bf16.mxu0 0
    %3808 = vmatpush2.bf16.msra.mxu0 0
    %3809 = vmatprep.subr.bf16.mxu0 0
    %3810 = vmatpush2.bf16.msra.mxu0 0
    %3811 = vmatprep.subr.bf16.mxu0 0
    %3812 = vmatpush2.bf16.msra.mxu0 0
    %3813 = vmatprep.subr.bf16.mxu0 0
    %3814 = vmatpush2.bf16.msra.mxu0 0
    %3815 = vmatprep.subr.bf16.mxu0 0
    %3816 = vmatpush2.bf16.msra.mxu0 0
    %3817 = vmatprep.subr.bf16.mxu0 0
    %3818 = vmatpush2.bf16.msra.mxu0 0
    %3819 = vmatprep.subr.bf16.mxu0 0
    %3820 = vmatpush2.bf16.msra.mxu0 0
    %3821 = vmatprep.subr.bf16.mxu0 0
    %3822 = vmatpush2.bf16.msra.mxu0 0
    %3823 = vmatprep.mubr.bf16.mxu0 0
    %3824 = vmatmul.mubr.bf16.gmra.mxu0 %v3789
    %v3825 = vpop.f32.mrf.mxu0
    %v3826 = vadd.f32 %v3772, %v3825
    %v3827 = vpop.f32.mrf.mxu0
    %v3828 = vpop.f32.mrf.mxu0
    %v3829 = vpop.f32.mrf.mxu0
    %3830 = vdwg.mxu0
    %3831 = vst [vmem:[#allocation4 + $0x1] sm:$0x1] %v3826
    // Predicated region
    $region86: #{vit_forward.1} parent=1 // pred_check
      _
    $region87: #{vit_forward.1} parent=1 // pred_check_branch
      %3833 = sbr.rel (0) target = $region89
    $region88: #{vit_forward.1} parent=1 // pred_region
      %s3835 = ssub.s32 32, 32
      %3836 = vsyncadd [#allocation5], %s3835
      %s3838 = sshll.u32 [#allocation4], 4
      %s3839 = int_to_ptr.vmem [resolvable:$true] %s3838
      %3841 = dma.vmem_to_hbm [thread:$0]  %s3839, 32, %s21, [#allocation5]
    $region89: #{vit_forward.1} parent=1 // pred_fallthru
      _
    // Predicated region
    $region90: #{vit_forward.1} parent=1 // pred_check
      _
    $region91: #{vit_forward.1} parent=1 // pred_check_branch
      %3843 = sbr.rel (0) target = $region93
    $region92: #{vit_forward.1} parent=1 // pred_region
      %3844 = dma.done [#allocation5], 32
    $region93: #{vit_forward.1} parent=1 // pred_fallthru
      _
    %3845 = vsyncpa [#allocation5], 1

</llo_original>
